<compile_context>
chip_gen: v7x
topology: tpu7x:2x2x1
jax: 0.10.0
libtpu: 0.0.40
codegen_flags: <defaults>
</compile_context>

<pallas_src>
import functools

import jax
import jax.numpy as jnp
from jax.experimental import pallas as pl
from jax.experimental.pallas import tpu as pltpu

D_IN = 64            # d_input_dim (small synthetic size; 784 in the MNIST setup)
H1, H2, H3 = 1024, 512, 256
LANE = 128           # lane width; fc4 weight is padded 1 -> LANE columns
MAX_TILE_B = 512     # large-batch tile cap (good on v6e, safe on v7x VMEM)
BATCH = 8            # small test batch


def _leaky_relu(x, slope=0.2):
    return jnp.where(x > 0, x, slope * x)


def _round_up(n, m):
    return ((n + m - 1) // m) * m


def discriminator_kernel(x_ref,
                         w1_ref, b1_ref,
                         w2_ref, b2_ref,
                         w3_ref, b3_ref,
                         w4_ref, b4_ref,
                         o_ref):
    # Fully fused 4-layer MLP over one batch tile.  bf16 inputs to every MXU
    # pass, f32 accumulation, f32 bias/activation math, bf16 re-cast between
    # layers (keeps MXU inputs narrow; fused epilogue is v5e store-slot
    # friendly).
    x = x_ref[...]                                            # bf16 [tile_b, D_pad]

    h = jnp.dot(x, w1_ref[...], preferred_element_type=jnp.float32) + b1_ref[...]
    h = _leaky_relu(h).astype(jnp.bfloat16)
    # dropout (eval mode): identity

    h = jnp.dot(h, w2_ref[...], preferred_element_type=jnp.float32) + b2_ref[...]
    h = _leaky_relu(h).astype(jnp.bfloat16)
    # dropout (eval mode): identity

    h = jnp.dot(h, w3_ref[...], preferred_element_type=jnp.float32) + b3_ref[...]
    h = _leaky_relu(h).astype(jnp.bfloat16)
    # dropout (eval mode): identity

    # fc4: [tile_b, 256] @ [256, 128] -> [tile_b, 128]; only column 0 is real.
    logits = jnp.dot(h, w4_ref[...], preferred_element_type=jnp.float32) + b4_ref[...]

    # Pack the logit column lane-dense: XLU transpose, keep row 0, sigmoid on
    # the packed [1, tile_b] row only (128x less EUP + output bytes).
    logits_row = logits.T[0:1, :]                             # [1, tile_b]
    o_ref[...] = jax.nn.sigmoid(logits_row).reshape(o_ref.shape)


def prepare_params(params):
    """One-time weight prep (hoisted out of the per-call forward path):
    pad fc1's K dim and fc4's N dim to 128 lanes, cast weights to bf16."""
    w1, b1, w2, b2, w3, b3, w4, b4 = params
    d_in = w1.shape[0]
    d_pad = _round_up(d_in, LANE)

    w1_p = jnp.pad(w1, ((0, d_pad - d_in), (0, 0))).astype(jnp.bfloat16)
    w2_p = w2.astype(jnp.bfloat16)
    w3_p = w3.astype(jnp.bfloat16)
    w4_p = jnp.pad(w4, ((0, 0), (0, LANE - w4.shape[1]))).astype(jnp.bfloat16)
    b4_p = jnp.pad(b4, ((0, 0), (0, LANE - b4.shape[1])))     # bias stays f32
    return (w1_p, b1, w2_p, b2, w3_p, b3, w4_p, b4_p)


@jax.jit
def discriminator_forward(x, prepared):
    """x: [B, D_IN] float32, prepared = prepare_params(params)
    -> [B, 1] float32 (eval-mode dropout = identity)."""
    w1_p, b1, w2_p, b2, w3_p, b3, w4_p, b4_p = prepared
    B, D = x.shape
    d_pad = w1_p.shape[0]

    # Adaptive batch tiling: no more hard 256-row pad for tiny batches.
    tile_b = min(MAX_TILE_B, _round_up(B, 128))
    b_pad = _round_up(B, tile_b)
    num_tiles = b_pad // tile_b

    x_p = jnp.pad(x, ((0, b_pad - B), (0, d_pad - D))).astype(jnp.bfloat16)

    # Weight/bias specs: full array, constant block index -> VMEM-resident.
    def full_spec(arr):
        return pl.BlockSpec(arr.shape, lambda *_: (0,) * arr.ndim)

    flops = 2 * b_pad * (d_pad * H1 + H1 * H2 + H2 * H3 + H3 * LANE)
    bytes_accessed = (
        x_p.size * 2
        + (w1_p.size + w2_p.size + w3_p.size + w4_p.size) * 2
        + (b1.size + b2.size + b3.size + b4_p.size) * 4
        + b_pad * 4                                           # packed logits out
    )
    cost = pl.CostEstimate(flops=flops,
                           transcendentals=b_pad,             # sigmoid on packed row
                           bytes_accessed=bytes_accessed)

    out = pl.pallas_call(
        discriminator_kernel,
        # 3D output so the block's trailing dims are (1, tile_b): lane-dense,
        # second-to-last equals the full array dim.
        out_shape=jax.ShapeDtypeStruct((num_tiles, 1, tile_b), jnp.float32),
        grid_spec=pltpu.PrefetchScalarGridSpec(
            num_scalar_prefetch=0,
            grid=(num_tiles,),
            in_specs=[
                pl.BlockSpec((tile_b, d_pad), lambda i: (i, 0)),   # x tile
                full_spec(w1_p), full_spec(b1),
                full_spec(w2_p), full_spec(b2),
                full_spec(w3_p), full_spec(b3),
                full_spec(w4_p), full_spec(b4_p),
            ],
            out_specs=pl.BlockSpec((1, 1, tile_b), lambda i: (i, 0, 0)),
        ),
        compiler_params=pltpu.CompilerParams(
            # Only shard across TensorCores when there are >= 2 tiles; a
            # single small tile should stay on one core (weight-DMA bound).
            dimension_semantics=(
                ("parallel",) if num_tiles > 1 else ("arbitrary",)),
        ),
        cost_estimate=cost,
    )(x_p, w1_p, b1, w2_p, b2, w3_p, b3, w4_p, b4_p)

    # out[i, 0, c] = sigmoid(logit of batch row i*tile_b + c)
    return out.reshape(-1)[:B].reshape(B, 1)


def init_params(key):
    """Deterministic parameter init (mimics nn.Linear shapes; [in, out] layout)."""
    ks = jax.random.split(key, 8)

    def lin(kw, kb, fan_in, fan_out):
        bound = 1.0 / jnp.sqrt(fan_in)
        w = jax.random.uniform(kw, (fan_in, fan_out), jnp.float32, -bound, bound)
        b = jax.random.uniform(kb, (1, fan_out), jnp.float32, -bound, bound)
        return w, b

    w1, b1 = lin(ks[0], ks[1], D_IN, H1)
    w2, b2 = lin(ks[2], ks[3], H1, H2)
    w3, b3 = lin(ks[4], ks[5], H2, H3)
    w4, b4 = lin(ks[6], ks[7], H3, 1)
    return (w1, b1, w2, b2, w3, b3, w4, b4)


def reference_forward(x, params):
    """Pure-JAX f32 reference matching the PyTorch module (eval mode)."""
    w1, b1, w2, b2, w3, b3, w4, b4 = params
    h = _leaky_relu(x @ w1 + b1)
    h = _leaky_relu(h @ w2 + b2)
    h = _leaky_relu(h @ w3 + b3)
    return jax.nn.sigmoid(h @ w4 + b4)


if __name__ == "__main__":
    key = jax.random.PRNGKey(0)
    kx, kp = jax.random.split(key)
    x = jax.random.normal(kx, (BATCH, D_IN), jnp.float32)
    params = init_params(kp)

    # One-time weight prep (outside the per-step forward path).
    prepared = prepare_params(params)
    prepared = jax.block_until_ready(prepared)

    out = discriminator_forward(x, prepared)
    out = jax.block_until_ready(out)

    ref = reference_forward(x, params)
    assert out.shape == (BATCH, 1)
    # bf16 weights vs f32 reference -> relaxed tolerance
    assert jnp.allclose(out, ref, atol=2e-2, rtol=2e-2), "mismatch vs JAX reference"

    print("KERNEL_OK")
</pallas_src>

<mosaic_0001>
module attributes {stable_mosaic.version = 11 : i64} {
  func.func @discriminator_kernel(%arg0: i32, %arg1: memref<128x128xbf16, #tpu.memory_space<vmem>>, %arg2: memref<128x1024xbf16, #tpu.memory_space<vmem>>, %arg3: memref<1x1024xf32, #tpu.memory_space<vmem>>, %arg4: memref<1024x512xbf16, #tpu.memory_space<vmem>>, %arg5: memref<1x512xf32, #tpu.memory_space<vmem>>, %arg6: memref<512x256xbf16, #tpu.memory_space<vmem>>, %arg7: memref<1x256xf32, #tpu.memory_space<vmem>>, %arg8: memref<256x128xbf16, #tpu.memory_space<vmem>>, %arg9: memref<1x128xf32, #tpu.memory_space<vmem>>, %arg10: memref<1x1x128xf32, #tpu.memory_space<vmem>>) attributes {dimension_semantics = [#tpu.dimension_semantics<arbitrary>], iteration_bounds = array<i64: 1>, scalar_prefetch = 0 : i64, scratch_operands = 0 : i64, tpu.core_type = #tpu.core_type<tc>, window_params = [{transform_indices = @transform_0, window_bounds = array<i64: 128, 128>}, {pipeline_mode = #tpu.pipeline_mode<synchronous>, transform_indices = @transform_1, window_bounds = array<i64: 128, 1024>}, {pipeline_mode = #tpu.pipeline_mode<synchronous>, transform_indices = @transform_2, window_bounds = array<i64: 1, 1024>}, {pipeline_mode = #tpu.pipeline_mode<synchronous>, transform_indices = @transform_3, window_bounds = array<i64: 1024, 512>}, {pipeline_mode = #tpu.pipeline_mode<synchronous>, transform_indices = @transform_4, window_bounds = array<i64: 1, 512>}, {pipeline_mode = #tpu.pipeline_mode<synchronous>, transform_indices = @transform_5, window_bounds = array<i64: 512, 256>}, {pipeline_mode = #tpu.pipeline_mode<synchronous>, transform_indices = @transform_6, window_bounds = array<i64: 1, 256>}, {pipeline_mode = #tpu.pipeline_mode<synchronous>, transform_indices = @transform_7, window_bounds = array<i64: 256, 128>}, {pipeline_mode = #tpu.pipeline_mode<synchronous>, transform_indices = @transform_8, window_bounds = array<i64: 1, 128>}, {transform_indices = @transform_9, window_bounds = array<i64: 1, 1, 128>}]} {
    %c0 = arith.constant 0 : index
    %c0_0 = arith.constant 0 : index
    %0 = vector.load %arg1[%c0, %c0_0] : memref<128x128xbf16, #tpu.memory_space<vmem>>, vector<128x128xbf16>
    %c0_1 = arith.constant 0 : index
    %c0_2 = arith.constant 0 : index
    %1 = vector.load %arg2[%c0_1, %c0_2] : memref<128x1024xbf16, #tpu.memory_space<vmem>>, vector<128x1024xbf16>
    %cst = arith.constant dense<0.000000e+00> : vector<128x1024xf32>
    %2 = tpu.matmul %0, %1, %cst {dimension_numbers = #tpu.dot_dimension_numbers<[1], [0], [0], [1], [0, 0, 1, 1], [], []>} : vector<128x128xbf16>, vector<128x1024xbf16>, vector<128x1024xf32> -> vector<128x1024xf32>
    %c0_3 = arith.constant 0 : index
    %c0_4 = arith.constant 0 : index
    %3 = vector.load %arg3[%c0_3, %c0_4] : memref<1x1024xf32, #tpu.memory_space<vmem>>, vector<1x1024xf32>
    %4 = vector.broadcast %3 : vector<1x1024xf32> to vector<128x1024xf32>
    %5 = arith.addf %2, %4 : vector<128x1024xf32>
    %cst_5 = arith.constant 0.000000e+00 : f32
    %6 = vector.broadcast %cst_5 : f32 to vector<128x1024xf32>
    %7 = arith.cmpf ogt, %5, %6 : vector<128x1024xf32>
    %cst_6 = arith.constant 2.000000e-01 : f32
    %8 = vector.broadcast %cst_6 : f32 to vector<128x1024xf32>
    %9 = arith.mulf %8, %5 : vector<128x1024xf32>
    %10 = arith.select %7, %5, %9 : vector<128x1024xi1>, vector<128x1024xf32>
    %11 = arith.truncf %10 : vector<128x1024xf32> to vector<128x1024xbf16>
    %c0_7 = arith.constant 0 : index
    %c0_8 = arith.constant 0 : index
    %12 = vector.load %arg4[%c0_7, %c0_8] : memref<1024x512xbf16, #tpu.memory_space<vmem>>, vector<1024x512xbf16>
    %cst_9 = arith.constant dense<0.000000e+00> : vector<128x512xf32>
    %13 = tpu.matmul %11, %12, %cst_9 {dimension_numbers = #tpu.dot_dimension_numbers<[1], [0], [0], [1], [0, 0, 1, 1], [], []>} : vector<128x1024xbf16>, vector<1024x512xbf16>, vector<128x512xf32> -> vector<128x512xf32>
    %c0_10 = arith.constant 0 : index
    %c0_11 = arith.constant 0 : index
    %14 = vector.load %arg5[%c0_10, %c0_11] : memref<1x512xf32, #tpu.memory_space<vmem>>, vector<1x512xf32>
    %15 = vector.broadcast %14 : vector<1x512xf32> to vector<128x512xf32>
    %16 = arith.addf %13, %15 : vector<128x512xf32>
    %cst_12 = arith.constant 0.000000e+00 : f32
    %17 = vector.broadcast %cst_12 : f32 to vector<128x512xf32>
    %18 = arith.cmpf ogt, %16, %17 : vector<128x512xf32>
    %cst_13 = arith.constant 2.000000e-01 : f32
    %19 = vector.broadcast %cst_13 : f32 to vector<128x512xf32>
    %20 = arith.mulf %19, %16 : vector<128x512xf32>
    %21 = arith.select %18, %16, %20 : vector<128x512xi1>, vector<128x512xf32>
    %22 = arith.truncf %21 : vector<128x512xf32> to vector<128x512xbf16>
    %c0_14 = arith.constant 0 : index
    %c0_15 = arith.constant 0 : index
    %23 = vector.load %arg6[%c0_14, %c0_15] : memref<512x256xbf16, #tpu.memory_space<vmem>>, vector<512x256xbf16>
    %cst_16 = arith.constant dense<0.000000e+00> : vector<128x256xf32>
    %24 = tpu.matmul %22, %23, %cst_16 {dimension_numbers = #tpu.dot_dimension_numbers<[1], [0], [0], [1], [0, 0, 1, 1], [], []>} : vector<128x512xbf16>, vector<512x256xbf16>, vector<128x256xf32> -> vector<128x256xf32>
    %c0_17 = arith.constant 0 : index
    %c0_18 = arith.constant 0 : index
    %25 = vector.load %arg7[%c0_17, %c0_18] : memref<1x256xf32, #tpu.memory_space<vmem>>, vector<1x256xf32>
    %26 = vector.broadcast %25 : vector<1x256xf32> to vector<128x256xf32>
    %27 = arith.addf %24, %26 : vector<128x256xf32>
    %cst_19 = arith.constant 0.000000e+00 : f32
    %28 = vector.broadcast %cst_19 : f32 to vector<128x256xf32>
    %29 = arith.cmpf ogt, %27, %28 : vector<128x256xf32>
    %cst_20 = arith.constant 2.000000e-01 : f32
    %30 = vector.broadcast %cst_20 : f32 to vector<128x256xf32>
    %31 = arith.mulf %30, %27 : vector<128x256xf32>
    %32 = arith.select %29, %27, %31 : vector<128x256xi1>, vector<128x256xf32>
    %33 = arith.truncf %32 : vector<128x256xf32> to vector<128x256xbf16>
    %c0_21 = arith.constant 0 : index
    %c0_22 = arith.constant 0 : index
    %34 = vector.load %arg8[%c0_21, %c0_22] : memref<256x128xbf16, #tpu.memory_space<vmem>>, vector<256x128xbf16>
    %cst_23 = arith.constant dense<0.000000e+00> : vector<128x128xf32>
    %35 = tpu.matmul %33, %34, %cst_23 {dimension_numbers = #tpu.dot_dimension_numbers<[1], [0], [0], [1], [0, 0, 1, 1], [], []>} : vector<128x256xbf16>, vector<256x128xbf16>, vector<128x128xf32> -> vector<128x128xf32>
    %c0_24 = arith.constant 0 : index
    %c0_25 = arith.constant 0 : index
    %36 = vector.load %arg9[%c0_24, %c0_25] : memref<1x128xf32, #tpu.memory_space<vmem>>, vector<1x128xf32>
    %37 = vector.broadcast %36 : vector<1x128xf32> to vector<128x128xf32>
    %38 = arith.addf %35, %37 : vector<128x128xf32>
    %39 = tpu.transpose %38, [1, 0] : vector<128x128xf32> -> vector<128x128xf32>
    %40 = vector.extract_strided_slice %39 {offsets = [0, 0], sizes = [1, 128], strides = [1, 1]} : vector<128x128xf32> to vector<1x128xf32>
    %41 = arith.negf %40 : vector<1x128xf32>
    %42 = math.exp %41 : vector<1x128xf32>
    %cst_26 = arith.constant 1.000000e+00 : f32
    %43 = vector.broadcast %cst_26 : f32 to vector<1x128xf32>
    %44 = arith.addf %43, %42 : vector<1x128xf32>
    %45 = arith.divf %43, %44 : vector<1x128xf32>
    %46 = vector.shape_cast %45 : vector<1x128xf32> to vector<1x1x128xf32>
    %c0_27 = arith.constant 0 : index
    %c0_28 = arith.constant 0 : index
    %c0_29 = arith.constant 0 : index
    %47 = vector.load %arg10[%c0_27, %c0_28, %c0_29] : memref<1x1x128xf32, #tpu.memory_space<vmem>>, vector<1x1x128xf32>
    tpu.vector_store %arg10[%c0_27, %c0_28, %c0_29], %46 {strides = array<i32>} : memref<1x1x128xf32, #tpu.memory_space<vmem>>, vector<1x1x128xf32>,
    return
  }
  func.func @transform_0(%arg0: i32) -> (i32, i32) {
    %c0_i32 = arith.constant 0 : i32
    %c0_i32_0 = arith.constant 0 : i32
    return %arg0, %c0_i32 : i32, i32
  }
  func.func @transform_1(%arg0: i32) -> (i32, i32) {
    %c0_i32 = arith.constant 0 : i32
    %c0_i32_0 = arith.constant 0 : i32
    %c0_i32_1 = arith.constant 0 : i32
    return %c0_i32, %c0_i32_0 : i32, i32
  }
  func.func @transform_2(%arg0: i32) -> (i32, i32) {
    %c0_i32 = arith.constant 0 : i32
    %c0_i32_0 = arith.constant 0 : i32
    %c0_i32_1 = arith.constant 0 : i32
    return %c0_i32, %c0_i32_0 : i32, i32
  }
  func.func @transform_3(%arg0: i32) -> (i32, i32) {
    %c0_i32 = arith.constant 0 : i32
    %c0_i32_0 = arith.constant 0 : i32
    %c0_i32_1 = arith.constant 0 : i32
    return %c0_i32, %c0_i32_0 : i32, i32
  }
  func.func @transform_4(%arg0: i32) -> (i32, i32) {
    %c0_i32 = arith.constant 0 : i32
    %c0_i32_0 = arith.constant 0 : i32
    %c0_i32_1 = arith.constant 0 : i32
    return %c0_i32, %c0_i32_0 : i32, i32
  }
  func.func @transform_5(%arg0: i32) -> (i32, i32) {
    %c0_i32 = arith.constant 0 : i32
    %c0_i32_0 = arith.constant 0 : i32
    %c0_i32_1 = arith.constant 0 : i32
    return %c0_i32, %c0_i32_0 : i32, i32
  }
  func.func @transform_6(%arg0: i32) -> (i32, i32) {
    %c0_i32 = arith.constant 0 : i32
    %c0_i32_0 = arith.constant 0 : i32
    %c0_i32_1 = arith.constant 0 : i32
    return %c0_i32, %c0_i32_0 : i32, i32
  }
  func.func @transform_7(%arg0: i32) -> (i32, i32) {
    %c0_i32 = arith.constant 0 : i32
    %c0_i32_0 = arith.constant 0 : i32
    %c0_i32_1 = arith.constant 0 : i32
    return %c0_i32, %c0_i32_0 : i32, i32
  }
  func.func @transform_8(%arg0: i32) -> (i32, i32) {
    %c0_i32 = arith.constant 0 : i32
    %c0_i32_0 = arith.constant 0 : i32
    %c0_i32_1 = arith.constant 0 : i32
    return %c0_i32, %c0_i32_0 : i32, i32
  }
  func.func @transform_9(%arg0: i32) -> (i32, i32, i32) {
    %c0_i32 = arith.constant 0 : i32
    %c0_i32_0 = arith.constant 0 : i32
    %c0_i32_1 = arith.constant 0 : i32
    return %arg0, %c0_i32, %c0_i32_0 : i32, i32, i32
  }
}

</mosaic_0001>

<llo_original>
// kernel: discriminator_forward.1
$region0: #{discriminator_forward.1}
  #allocation0 [shape = 'u32[]', space=smem, size = 0x4, offset = 0x4, fixed_abs, tag = 'smem constant byte address 0x4 - core index']
  #allocation1 [shape = 'u32[144,128]{1,0:T(1,128)}', space=vmem, size = 0x12000, scoped, tag = 'internal scratch']
  %s0 = inlined_call_operand.vmem [shape: bf16[128,128], index: 0, kind: input, shape index: {}]
  %s1 = inlined_call_operand.hbm [shape: bf16[128,1024], index: 1, kind: input, shape index: {}]
  %s2 = inlined_call_operand.vmem [shape: f32[1,1024], index: 2, kind: input, shape index: {}]
  %s3 = inlined_call_operand.hbm [shape: bf16[1024,512], index: 3, kind: input, shape index: {}]
  %s4 = inlined_call_operand.vmem [shape: f32[1,512], index: 4, kind: input, shape index: {}]
  %s5 = inlined_call_operand.hbm [shape: bf16[512,256], index: 5, kind: input, shape index: {}]
  %s6 = inlined_call_operand.vmem [shape: f32[1,256], index: 6, kind: input, shape index: {}]
  %s7 = inlined_call_operand.hbm [shape: bf16[256,128], index: 7, kind: input, shape index: {}]
  %s8 = inlined_call_operand.vmem [shape: f32[1,128], index: 8, kind: input, shape index: {}]
  %s9 = inlined_call_operand.vmem [shape: f32[1,1,128], index: 9, kind: output, shape index: {}]
  %s10 = sld [smem:[#allocation0]]
  $region62: #{discriminator_forward.1} parent=0
    _
  %s12 = ssub.s32 1, %s10
  %s13 = scalar_select 0, %s12, %s10
  $region1: #{discriminator_forward.1} parent=0
    #allocation2 [shape = 'u8[262144]{0}', space=vmem, size = 0x40000, scoped, tag = 'input window, operand 1, single buffered']
    #allocation3 [shape = 's32[1]{0}', space=sflag, size = 0x4, scoped, tag = 'scoped memory for discriminator_forward.1']
    #allocation4 [shape = 'u8[1048576]{0}', space=vmem, size = 0x100000, scoped, tag = 'input window, operand 3, single buffered']
    #allocation5 [shape = 's32[1]{0}', space=sflag, size = 0x4, scoped, tag = 'scoped memory for discriminator_forward.1']
    #allocation6 [shape = 'u8[262144]{0}', space=vmem, size = 0x40000, scoped, tag = 'input window, operand 5, single buffered']
    #allocation7 [shape = 'u8[65536]{0}', space=vmem, size = 0x10000, scoped, tag = 'input window, operand 7, single buffered']
    #allocation8 [shape = 's32[1]{0}', space=sflag, size = 0x4, scoped, tag = 'scoped memory for discriminator_forward.1']
    %14 = vsyncpa [#allocation3], 0
    %15 = vsyncpa [#allocation5], 0
    %16 = vsyncpa [#allocation8], 0
    // Predicated region
    $region2: #{discriminator_forward.1} parent=1 // pred_check
      _
    $region3: #{discriminator_forward.1} parent=1 // pred_check_branch
      %18 = sbr.rel (0) target = $region5
    $region4: #{discriminator_forward.1} parent=1 // pred_region
      _
    $region5: #{discriminator_forward.1} parent=1 // pred_fallthru
      _
    // Predicated region
    $region6: #{discriminator_forward.1} parent=1 // pred_check
      _
    $region7: #{discriminator_forward.1} parent=1 // pred_check_branch
      %20 = sbr.rel (0) target = $region9
    $region8: #{discriminator_forward.1} parent=1 // pred_region
      %s22 = ssub.s32 8192, 8192
      %23 = vsyncadd [#allocation3], %s22
      %s24 = sshll.u32 [#allocation2], 4
      %s25 = int_to_ptr.vmem [resolvable:$true] %s24
      %30 = dma.hbm_to_vmem [thread:$0]  %s1, 8192, %s25, [#allocation3], 512, 512, 32
    $region9: #{discriminator_forward.1} parent=1 // pred_fallthru
      _
    // Predicated region
    $region10: #{discriminator_forward.1} parent=1 // pred_check
      _
    $region11: #{discriminator_forward.1} parent=1 // pred_check_branch
      %32 = sbr.rel (0) target = $region13
    $region12: #{discriminator_forward.1} parent=1 // pred_region
      _
    $region13: #{discriminator_forward.1} parent=1 // pred_fallthru
      _
    // Predicated region
    $region14: #{discriminator_forward.1} parent=1 // pred_check
      _
    $region15: #{discriminator_forward.1} parent=1 // pred_check_branch
      %34 = sbr.rel (0) target = $region17
    $region16: #{discriminator_forward.1} parent=1 // pred_region
      %s36 = ssub.s32 32768, 32768
      %37 = vsyncadd [#allocation5], %s36
      %s38 = sshll.u32 [#allocation4], 4
      %s39 = int_to_ptr.vmem [resolvable:$true] %s38
      %44 = dma.hbm_to_vmem [thread:$0]  %s3, 32768, %s39, [#allocation5], 256, 256, 16
    $region17: #{discriminator_forward.1} parent=1 // pred_fallthru
      _
    // Predicated region
    $region18: #{discriminator_forward.1} parent=1 // pred_check
      _
    $region19: #{discriminator_forward.1} parent=1 // pred_check_branch
      %46 = sbr.rel (0) target = $region21
    $region20: #{discriminator_forward.1} parent=1 // pred_region
      _
    $region21: #{discriminator_forward.1} parent=1 // pred_fallthru
      _
    // Predicated region
    $region22: #{discriminator_forward.1} parent=1 // pred_check
      _
    $region23: #{discriminator_forward.1} parent=1 // pred_check_branch
      %48 = sbr.rel (0) target = $region25
    $region24: #{discriminator_forward.1} parent=1 // pred_region
      %s50 = ssub.s32 8192, 8192
      %51 = vsyncadd [#allocation5], %s50
      %s52 = sshll.u32 [#allocation6], 4
      %s53 = int_to_ptr.vmem [resolvable:$true] %s52
      %58 = dma.hbm_to_vmem [thread:$0]  %s5, 8192, %s53, [#allocation5], 128, 128, 8
    $region25: #{discriminator_forward.1} parent=1 // pred_fallthru
      _
    // Predicated region
    $region26: #{discriminator_forward.1} parent=1 // pred_check
      _
    $region27: #{discriminator_forward.1} parent=1 // pred_check_branch
      %60 = sbr.rel (0) target = $region29
    $region28: #{discriminator_forward.1} parent=1 // pred_region
      _
    $region29: #{discriminator_forward.1} parent=1 // pred_fallthru
      _
    // Predicated region
    $region30: #{discriminator_forward.1} parent=1 // pred_check
      _
    $region31: #{discriminator_forward.1} parent=1 // pred_check_branch
      %62 = sbr.rel (0) target = $region33
    $region32: #{discriminator_forward.1} parent=1 // pred_region
      %s64 = ssub.s32 2048, 2048
      %65 = vsyncadd [#allocation8], %s64
      %s66 = sshll.u32 [#allocation7], 4
      %s67 = int_to_ptr.vmem [resolvable:$true] %s66
      %72 = dma.hbm_to_vmem [thread:$0]  %s7, 2048, %s67, [#allocation8], 64, 64, 4
    $region33: #{discriminator_forward.1} parent=1 // pred_fallthru
      _
    // Predicated region
    $region34: #{discriminator_forward.1} parent=1 // pred_check
      _
    $region35: #{discriminator_forward.1} parent=1 // pred_check_branch
      %74 = sbr.rel (0) target = $region37
    $region36: #{discriminator_forward.1} parent=1 // pred_region
      _
    $region37: #{discriminator_forward.1} parent=1 // pred_fallthru
      _
    // Predicated region
    $region38: #{discriminator_forward.1} parent=1 // pred_check
      _
    $region39: #{discriminator_forward.1} parent=1 // pred_check_branch
      %76 = sbr.rel (0) target = $region41
    $region40: #{discriminator_forward.1} parent=1 // pred_region
      %77 = dma.done [#allocation3], 8192
    $region41: #{discriminator_forward.1} parent=1 // pred_fallthru
      _
    // Predicated region
    $region42: #{discriminator_forward.1} parent=1 // pred_check
      _
    $region43: #{discriminator_forward.1} parent=1 // pred_check_branch
      %79 = sbr.rel (0) target = $region45
    $region44: #{discriminator_forward.1} parent=1 // pred_region
      %80 = dma.done [#allocation5], 32768
    $region45: #{discriminator_forward.1} parent=1 // pred_fallthru
      _
    // Predicated region
    $region46: #{discriminator_forward.1} parent=1 // pred_check
      _
    $region47: #{discriminator_forward.1} parent=1 // pred_check_branch
      %82 = sbr.rel (0) target = $region49
    $region48: #{discriminator_forward.1} parent=1 // pred_region
      %83 = dma.done [#allocation5], 8192
    $region49: #{discriminator_forward.1} parent=1 // pred_fallthru
      _
    // Predicated region
    $region50: #{discriminator_forward.1} parent=1 // pred_check
      _
    $region51: #{discriminator_forward.1} parent=1 // pred_check_branch
      %85 = sbr.rel (0) target = $region53
    $region52: #{discriminator_forward.1} parent=1 // pred_region
      %86 = dma.done [#allocation8], 2048
    $region53: #{discriminator_forward.1} parent=1 // pred_fallthru
      _
    %v88 = vld [vmem:[%s0] sm:$0xf]
    %v89 = vld [vmem:[%s0 + $0x4] sm:$0xf]
    %v90 = vld [vmem:[%s0 + $0x8] sm:$0xf]
    %v91 = vld [vmem:[%s0 + $0xc] sm:$0xf]
    %v92 = vld [vmem:[%s0 + $0x10] sm:$0xf]
    %v93 = vld [vmem:[%s0 + $0x14] sm:$0xf]
    %v94 = vld [vmem:[%s0 + $0x18] sm:$0xf]
    %v95 = vld [vmem:[%s0 + $0x1c] sm:$0xf]
    %v96 = vld [vmem:[%s0 + $0x20] sm:$0xf]
    %v97 = vld [vmem:[%s0 + $0x24] sm:$0xf]
    %v98 = vld [vmem:[%s0 + $0x28] sm:$0xf]
    %v99 = vld [vmem:[%s0 + $0x2c] sm:$0xf]
    %v100 = vld [vmem:[%s0 + $0x30] sm:$0xf]
    %v101 = vld [vmem:[%s0 + $0x34] sm:$0xf]
    %v102 = vld [vmem:[%s0 + $0x38] sm:$0xf]
    %v103 = vld [vmem:[%s0 + $0x3c] sm:$0xf]
    %v104 = vld [vmem:[#allocation2] sm:$0xff]
    %v105 = vld [vmem:[#allocation2 + $0x8] sm:$0xff]
    %v106 = vld [vmem:[#allocation2 + $0x10] sm:$0xff]
    %v107 = vld [vmem:[#allocation2 + $0x18] sm:$0xff]
    %v108 = vld [vmem:[#allocation2 + $0x20] sm:$0xff]
    %v109 = vld [vmem:[#allocation2 + $0x28] sm:$0xff]
    %v110 = vld [vmem:[#allocation2 + $0x30] sm:$0xff]
    %v111 = vld [vmem:[#allocation2 + $0x38] sm:$0xff]
    %v112 = vld [vmem:[#allocation2 + $0x40] sm:$0xff]
    %v113 = vld [vmem:[#allocation2 + $0x48] sm:$0xff]
    %v114 = vld [vmem:[#allocation2 + $0x50] sm:$0xff]
    %v115 = vld [vmem:[#allocation2 + $0x58] sm:$0xff]
    %v116 = vld [vmem:[#allocation2 + $0x60] sm:$0xff]
    %v117 = vld [vmem:[#allocation2 + $0x68] sm:$0xff]
    %v118 = vld [vmem:[#allocation2 + $0x70] sm:$0xff]
    %v119 = vld [vmem:[#allocation2 + $0x78] sm:$0xff]
    %v120 = vld [vmem:[#allocation2 + $0x80] sm:$0xff]
    %v121 = vld [vmem:[#allocation2 + $0x88] sm:$0xff]
    %v122 = vld [vmem:[#allocation2 + $0x90] sm:$0xff]
    %v123 = vld [vmem:[#allocation2 + $0x98] sm:$0xff]
    %v124 = vld [vmem:[#allocation2 + $0xa0] sm:$0xff]
    %v125 = vld [vmem:[#allocation2 + $0xa8] sm:$0xff]
    %v126 = vld [vmem:[#allocation2 + $0xb0] sm:$0xff]
    %v127 = vld [vmem:[#allocation2 + $0xb8] sm:$0xff]
    %v128 = vld [vmem:[#allocation2 + $0xc0] sm:$0xff]
    %v129 = vld [vmem:[#allocation2 + $0xc8] sm:$0xff]
    %v130 = vld [vmem:[#allocation2 + $0xd0] sm:$0xff]
    %v131 = vld [vmem:[#allocation2 + $0xd8] sm:$0xff]
    %v132 = vld [vmem:[#allocation2 + $0xe0] sm:$0xff]
    %v133 = vld [vmem:[#allocation2 + $0xe8] sm:$0xff]
    %v134 = vld [vmem:[#allocation2 + $0xf0] sm:$0xff]
    %v135 = vld [vmem:[#allocation2 + $0xf8] sm:$0xff]
    %v136 = vld [vmem:[#allocation2 + $0x100] sm:$0xff]
    %v137 = vld [vmem:[#allocation2 + $0x108] sm:$0xff]
    %v138 = vld [vmem:[#allocation2 + $0x110] sm:$0xff]
    %v139 = vld [vmem:[#allocation2 + $0x118] sm:$0xff]
    %v140 = vld [vmem:[#allocation2 + $0x120] sm:$0xff]
    %v141 = vld [vmem:[#allocation2 + $0x128] sm:$0xff]
    %v142 = vld [vmem:[#allocation2 + $0x130] sm:$0xff]
    %v143 = vld [vmem:[#allocation2 + $0x138] sm:$0xff]
    %v144 = vld [vmem:[#allocation2 + $0x140] sm:$0xff]
    %v145 = vld [vmem:[#allocation2 + $0x148] sm:$0xff]
    %v146 = vld [vmem:[#allocation2 + $0x150] sm:$0xff]
    %v147 = vld [vmem:[#allocation2 + $0x158] sm:$0xff]
    %v148 = vld [vmem:[#allocation2 + $0x160] sm:$0xff]
    %v149 = vld [vmem:[#allocation2 + $0x168] sm:$0xff]
    %v150 = vld [vmem:[#allocation2 + $0x170] sm:$0xff]
    %v151 = vld [vmem:[#allocation2 + $0x178] sm:$0xff]
    %v152 = vld [vmem:[#allocation2 + $0x180] sm:$0xff]
    %v153 = vld [vmem:[#allocation2 + $0x188] sm:$0xff]
    %v154 = vld [vmem:[#allocation2 + $0x190] sm:$0xff]
    %v155 = vld [vmem:[#allocation2 + $0x198] sm:$0xff]
    %v156 = vld [vmem:[#allocation2 + $0x1a0] sm:$0xff]
    %v157 = vld [vmem:[#allocation2 + $0x1a8] sm:$0xff]
    %v158 = vld [vmem:[#allocation2 + $0x1b0] sm:$0xff]
    %v159 = vld [vmem:[#allocation2 + $0x1b8] sm:$0xff]
    %v160 = vld [vmem:[#allocation2 + $0x1c0] sm:$0xff]
    %v161 = vld [vmem:[#allocation2 + $0x1c8] sm:$0xff]
    %v162 = vld [vmem:[#allocation2 + $0x1d0] sm:$0xff]
    %v163 = vld [vmem:[#allocation2 + $0x1d8] sm:$0xff]
    %v164 = vld [vmem:[#allocation2 + $0x1e0] sm:$0xff]
    %v165 = vld [vmem:[#allocation2 + $0x1e8] sm:$0xff]
    %v166 = vld [vmem:[#allocation2 + $0x1f0] sm:$0xff]
    %v167 = vld [vmem:[#allocation2 + $0x1f8] sm:$0xff]
    %v168 = vld [vmem:[%s2] sm:$0xff]
    %v170 = vlaneseq
    %v171 = vshrl.u32 %v170, 7
    %v172 = vsub.s32 0, %v171
    %v173 = vrot.slane %v168, %v172
    %v174 = vlaneseq
    %v175 = vshrl.u32 %v174, 7
    %v176 = vsub.s32 1, %v175
    %v177 = vrot.slane %v168, %v176
    %v178 = vlaneseq
    %v179 = vshrl.u32 %v178, 7
    %v180 = vsub.s32 2, %v179
    %v181 = vrot.slane %v168, %v180
    %v182 = vlaneseq
    %v183 = vshrl.u32 %v182, 7
    %v184 = vsub.s32 3, %v183
    %v185 = vrot.slane %v168, %v184
    %v186 = vlaneseq
    %v187 = vshrl.u32 %v186, 7
    %v188 = vsub.s32 4, %v187
    %v189 = vrot.slane %v168, %v188
    %v190 = vlaneseq
    %v191 = vshrl.u32 %v190, 7
    %v192 = vsub.s32 5, %v191
    %v193 = vrot.slane %v168, %v192
    %v194 = vlaneseq
    %v195 = vshrl.u32 %v194, 7
    %v196 = vsub.s32 6, %v195
    %v197 = vrot.slane %v168, %v196
    %v198 = vlaneseq
    %v199 = vshrl.u32 %v198, 7
    %v200 = vsub.s32 7, %v199
    %v201 = vrot.slane %v168, %v200
    %v226 = vunpack.c.l.b16 %v88
    %v227 = vunpack.c.l.b16 %v89
    %v228 = vunpack.c.l.b16 %v90
    %v229 = vunpack.c.l.b16 %v91
    %v230 = vunpack.c.l.b16 %v92
    %v231 = vunpack.c.l.b16 %v93
    %v232 = vunpack.c.l.b16 %v94
    %v233 = vunpack.c.l.b16 %v95
    %v234 = vunpack.c.l.b16 %v96
    %v235 = vunpack.c.l.b16 %v97
    %v236 = vunpack.c.l.b16 %v98
    %v237 = vunpack.c.l.b16 %v99
    %v238 = vunpack.c.l.b16 %v100
    %v239 = vunpack.c.l.b16 %v101
    %v240 = vunpack.c.l.b16 %v102
    %v241 = vunpack.c.l.b16 %v103
    %v242 = vpack.c.b16 %v227, %v226
    %v243 = vpack.c.b16 %v229, %v228
    %v244 = vpack.c.b16 %v231, %v230
    %v245 = vpack.c.b16 %v233, %v232
    %v246 = vpack.c.b16 %v235, %v234
    %v247 = vpack.c.b16 %v237, %v236
    %v248 = vpack.c.b16 %v239, %v238
    %v249 = vpack.c.b16 %v241, %v240
    %v322 = vunpack.c.l.b16 %v104
    %v323 = vunpack.c.h.b16 %v104
    %v324 = vunpack.c.l.b16 %v105
    %v325 = vunpack.c.h.b16 %v105
    %v326 = vunpack.c.l.b16 %v106
    %v327 = vunpack.c.h.b16 %v106
    %v328 = vunpack.c.l.b16 %v107
    %v329 = vunpack.c.h.b16 %v107
    %v330 = vunpack.c.l.b16 %v108
    %v331 = vunpack.c.h.b16 %v108
    %v332 = vunpack.c.l.b16 %v109
    %v333 = vunpack.c.h.b16 %v109
    %v334 = vunpack.c.l.b16 %v110
    %v335 = vunpack.c.h.b16 %v110
    %v336 = vunpack.c.l.b16 %v111
    %v337 = vunpack.c.h.b16 %v111
    %v338 = vunpack.c.l.b16 %v112
    %v339 = vunpack.c.h.b16 %v112
    %v340 = vunpack.c.l.b16 %v113
    %v341 = vunpack.c.h.b16 %v113
    %v342 = vunpack.c.l.b16 %v114
    %v343 = vunpack.c.h.b16 %v114
    %v344 = vunpack.c.l.b16 %v115
    %v345 = vunpack.c.h.b16 %v115
    %v346 = vunpack.c.l.b16 %v116
    %v347 = vunpack.c.h.b16 %v116
    %v348 = vunpack.c.l.b16 %v117
    %v349 = vunpack.c.h.b16 %v117
    %v350 = vunpack.c.l.b16 %v118
    %v351 = vunpack.c.h.b16 %v118
    %v352 = vunpack.c.l.b16 %v119
    %v353 = vunpack.c.h.b16 %v119
    %v354 = vunpack.c.l.b16 %v120
    %v355 = vunpack.c.h.b16 %v120
    %v356 = vunpack.c.l.b16 %v121
    %v357 = vunpack.c.h.b16 %v121
    %v358 = vunpack.c.l.b16 %v122
    %v359 = vunpack.c.h.b16 %v122
    %v360 = vunpack.c.l.b16 %v123
    %v361 = vunpack.c.h.b16 %v123
    %v362 = vunpack.c.l.b16 %v124
    %v363 = vunpack.c.h.b16 %v124
    %v364 = vunpack.c.l.b16 %v125
    %v365 = vunpack.c.h.b16 %v125
    %v366 = vunpack.c.l.b16 %v126
    %v367 = vunpack.c.h.b16 %v126
    %v368 = vunpack.c.l.b16 %v127
    %v369 = vunpack.c.h.b16 %v127
    %v370 = vunpack.c.l.b16 %v128
    %v371 = vunpack.c.h.b16 %v128
    %v372 = vunpack.c.l.b16 %v129
    %v373 = vunpack.c.h.b16 %v129
    %v374 = vunpack.c.l.b16 %v130
    %v375 = vunpack.c.h.b16 %v130
    %v376 = vunpack.c.l.b16 %v131
    %v377 = vunpack.c.h.b16 %v131
    %v378 = vunpack.c.l.b16 %v132
    %v379 = vunpack.c.h.b16 %v132
    %v380 = vunpack.c.l.b16 %v133
    %v381 = vunpack.c.h.b16 %v133
    %v382 = vunpack.c.l.b16 %v134
    %v383 = vunpack.c.h.b16 %v134
    %v384 = vunpack.c.l.b16 %v135
    %v385 = vunpack.c.h.b16 %v135
    %v386 = vunpack.c.l.b16 %v136
    %v387 = vunpack.c.h.b16 %v136
    %v388 = vunpack.c.l.b16 %v137
    %v389 = vunpack.c.h.b16 %v137
    %v390 = vunpack.c.l.b16 %v138
    %v391 = vunpack.c.h.b16 %v138
    %v392 = vunpack.c.l.b16 %v139
    %v393 = vunpack.c.h.b16 %v139
    %v394 = vunpack.c.l.b16 %v140
    %v395 = vunpack.c.h.b16 %v140
    %v396 = vunpack.c.l.b16 %v141
    %v397 = vunpack.c.h.b16 %v141
    %v398 = vunpack.c.l.b16 %v142
    %v399 = vunpack.c.h.b16 %v142
    %v400 = vunpack.c.l.b16 %v143
    %v401 = vunpack.c.h.b16 %v143
    %v402 = vunpack.c.l.b16 %v144
    %v403 = vunpack.c.h.b16 %v144
    %v404 = vunpack.c.l.b16 %v145
    %v405 = vunpack.c.h.b16 %v145
    %v406 = vunpack.c.l.b16 %v146
    %v407 = vunpack.c.h.b16 %v146
    %v408 = vunpack.c.l.b16 %v147
    %v409 = vunpack.c.h.b16 %v147
    %v410 = vunpack.c.l.b16 %v148
    %v411 = vunpack.c.h.b16 %v148
    %v412 = vunpack.c.l.b16 %v149
    %v413 = vunpack.c.h.b16 %v149
    %v414 = vunpack.c.l.b16 %v150
    %v415 = vunpack.c.h.b16 %v150
    %v416 = vunpack.c.l.b16 %v151
    %v417 = vunpack.c.h.b16 %v151
    %v418 = vunpack.c.l.b16 %v152
    %v419 = vunpack.c.h.b16 %v152
    %v420 = vunpack.c.l.b16 %v153
    %v421 = vunpack.c.h.b16 %v153
    %v422 = vunpack.c.l.b16 %v154
    %v423 = vunpack.c.h.b16 %v154
    %v424 = vunpack.c.l.b16 %v155
    %v425 = vunpack.c.h.b16 %v155
    %v426 = vunpack.c.l.b16 %v156
    %v427 = vunpack.c.h.b16 %v156
    %v428 = vunpack.c.l.b16 %v157
    %v429 = vunpack.c.h.b16 %v157
    %v430 = vunpack.c.l.b16 %v158
    %v431 = vunpack.c.h.b16 %v158
    %v432 = vunpack.c.l.b16 %v159
    %v433 = vunpack.c.h.b16 %v159
    %v434 = vunpack.c.l.b16 %v160
    %v435 = vunpack.c.h.b16 %v160
    %v436 = vunpack.c.l.b16 %v161
    %v437 = vunpack.c.h.b16 %v161
    %v438 = vunpack.c.l.b16 %v162
    %v439 = vunpack.c.h.b16 %v162
    %v440 = vunpack.c.l.b16 %v163
    %v441 = vunpack.c.h.b16 %v163
    %v442 = vunpack.c.l.b16 %v164
    %v443 = vunpack.c.h.b16 %v164
    %v444 = vunpack.c.l.b16 %v165
    %v445 = vunpack.c.h.b16 %v165
    %v446 = vunpack.c.l.b16 %v166
    %v447 = vunpack.c.h.b16 %v166
    %v448 = vunpack.c.l.b16 %v167
    %v449 = vunpack.c.h.b16 %v167
    %v450 = vpack.c.b16 %v330, %v322
    %v451 = vpack.c.b16 %v331, %v323
    %v452 = vpack.c.b16 %v332, %v324
    %v453 = vpack.c.b16 %v333, %v325
    %v454 = vpack.c.b16 %v334, %v326
    %v455 = vpack.c.b16 %v335, %v327
    %v456 = vpack.c.b16 %v336, %v328
    %v457 = vpack.c.b16 %v337, %v329
    %v458 = vpack.c.b16 %v346, %v338
    %v459 = vpack.c.b16 %v347, %v339
    %v460 = vpack.c.b16 %v348, %v340
    %v461 = vpack.c.b16 %v349, %v341
    %v462 = vpack.c.b16 %v350, %v342
    %v463 = vpack.c.b16 %v351, %v343
    %v464 = vpack.c.b16 %v352, %v344
    %v465 = vpack.c.b16 %v353, %v345
    %v466 = vpack.c.b16 %v362, %v354
    %v467 = vpack.c.b16 %v363, %v355
    %v468 = vpack.c.b16 %v364, %v356
    %v469 = vpack.c.b16 %v365, %v357
    %v470 = vpack.c.b16 %v366, %v358
    %v471 = vpack.c.b16 %v367, %v359
    %v472 = vpack.c.b16 %v368, %v360
    %v473 = vpack.c.b16 %v369, %v361
    %v474 = vpack.c.b16 %v378, %v370
    %v475 = vpack.c.b16 %v379, %v371
    %v476 = vpack.c.b16 %v380, %v372
    %v477 = vpack.c.b16 %v381, %v373
    %v478 = vpack.c.b16 %v382, %v374
    %v479 = vpack.c.b16 %v383, %v375
    %v480 = vpack.c.b16 %v384, %v376
    %v481 = vpack.c.b16 %v385, %v377
    %v482 = vpack.c.b16 %v394, %v386
    %v483 = vpack.c.b16 %v395, %v387
    %v484 = vpack.c.b16 %v396, %v388
    %v485 = vpack.c.b16 %v397, %v389
    %v486 = vpack.c.b16 %v398, %v390
    %v487 = vpack.c.b16 %v399, %v391
    %v488 = vpack.c.b16 %v400, %v392
    %v489 = vpack.c.b16 %v401, %v393
    %v490 = vpack.c.b16 %v410, %v402
    %v491 = vpack.c.b16 %v411, %v403
    %v492 = vpack.c.b16 %v412, %v404
    %v493 = vpack.c.b16 %v413, %v405
    %v494 = vpack.c.b16 %v414, %v406
    %v495 = vpack.c.b16 %v415, %v407
    %v496 = vpack.c.b16 %v416, %v408
    %v497 = vpack.c.b16 %v417, %v409
    %v498 = vpack.c.b16 %v426, %v418
    %v499 = vpack.c.b16 %v427, %v419
    %v500 = vpack.c.b16 %v428, %v420
    %v501 = vpack.c.b16 %v429, %v421
    %v502 = vpack.c.b16 %v430, %v422
    %v503 = vpack.c.b16 %v431, %v423
    %v504 = vpack.c.b16 %v432, %v424
    %v505 = vpack.c.b16 %v433, %v425
    %v506 = vpack.c.b16 %v442, %v434
    %v507 = vpack.c.b16 %v443, %v435
    %v508 = vpack.c.b16 %v444, %v436
    %v509 = vpack.c.b16 %v445, %v437
    %v510 = vpack.c.b16 %v446, %v438
    %v511 = vpack.c.b16 %v447, %v439
    %v512 = vpack.c.b16 %v448, %v440
    %v513 = vpack.c.b16 %v449, %v441
    %578 = vmatprep.subr.bf16.mxu0 %v451
    %579 = vmatpush1.bf16.msra.mxu0 %v450
    %580 = vmatprep.subr.bf16.mxu0 %v459
    %581 = vmatpush1.bf16.msra.mxu0 %v458
    %582 = vmatprep.subr.bf16.mxu0 %v467
    %583 = vmatpush1.bf16.msra.mxu0 %v466
    %584 = vmatprep.subr.bf16.mxu0 %v475
    %585 = vmatpush1.bf16.msra.mxu0 %v474
    %586 = vmatprep.subr.bf16.mxu0 %v483
    %587 = vmatpush1.bf16.msra.mxu0 %v482
    %588 = vmatprep.subr.bf16.mxu0 %v491
    %589 = vmatpush1.bf16.msra.mxu0 %v490
    %590 = vmatprep.subr.bf16.mxu0 %v499
    %591 = vmatpush1.bf16.msra.mxu0 %v498
    %592 = vmatprep.subr.bf16.mxu0 %v507
    %593 = vmatpush1.bf16.msra.mxu0 %v506
    %594 = vmatprep.subr.bf16.mxu0 0
    %595 = vmatpush1.bf16.msra.mxu0 0
    %596 = vmatprep.subr.bf16.mxu0 0
    %597 = vmatpush1.bf16.msra.mxu0 0
    %598 = vmatprep.subr.bf16.mxu0 0
    %599 = vmatpush1.bf16.msra.mxu0 0
    %600 = vmatprep.subr.bf16.mxu0 0
    %601 = vmatpush1.bf16.msra.mxu0 0
    %602 = vmatprep.subr.bf16.mxu0 0
    %603 = vmatpush1.bf16.msra.mxu0 0
    %604 = vmatprep.subr.bf16.mxu0 0
    %605 = vmatpush1.bf16.msra.mxu0 0
    %606 = vmatprep.subr.bf16.mxu0 0
    %607 = vmatpush1.bf16.msra.mxu0 0
    %608 = vmatprep.subr.bf16.mxu0 0
    %609 = vmatpush1.bf16.msra.mxu0 0
    %610 = vmatprep.mubr.bf16.mxu0 0
    %611 = vmatmul.mubr.bf16.gmra.mrb[0].mxu0 %v242
    %v612 = vpop.f32.mrb[0].mxu0
    %v613 = vadd.f32 %v173, %v612
    %v614 = vpop.f32.mrb[0].mxu0
    %v615 = vadd.f32 %v177, %v614
    %v616 = vpop.f32.mrb[0].mxu0
    %v617 = vadd.f32 %v173, %v616
    %v618 = vpop.f32.mrb[0].mxu0
    %v619 = vadd.f32 %v177, %v618
    %620 = vmatprep.mubr.bf16.mxu0 0
    %621 = vmatmul.mubr.bf16.gmra.mrb[0].mxu0 %v243
    %v622 = vpop.f32.mrb[0].mxu0
    %v623 = vadd.f32 %v173, %v622
    %v624 = vpop.f32.mrb[0].mxu0
    %v625 = vadd.f32 %v177, %v624
    %v626 = vpop.f32.mrb[0].mxu0
    %v627 = vadd.f32 %v173, %v626
    %v628 = vpop.f32.mrb[0].mxu0
    %v629 = vadd.f32 %v177, %v628
    %630 = vmatprep.mubr.bf16.mxu0 0
    %631 = vmatmul.mubr.bf16.gmra.mrb[0].mxu0 %v244
    %v632 = vpop.f32.mrb[0].mxu0
    %v633 = vadd.f32 %v173, %v632
    %v634 = vpop.f32.mrb[0].mxu0
    %v635 = vadd.f32 %v177, %v634
    %v636 = vpop.f32.mrb[0].mxu0
    %v637 = vadd.f32 %v173, %v636
    %v638 = vpop.f32.mrb[0].mxu0
    %v639 = vadd.f32 %v177, %v638
    %640 = vmatprep.mubr.bf16.mxu0 0
    %641 = vmatmul.mubr.bf16.gmra.mrb[0].mxu0 %v245
    %v642 = vpop.f32.mrb[0].mxu0
    %v643 = vadd.f32 %v173, %v642
    %v644 = vpop.f32.mrb[0].mxu0
    %v645 = vadd.f32 %v177, %v644
    %v646 = vpop.f32.mrb[0].mxu0
    %v647 = vadd.f32 %v173, %v646
    %v648 = vpop.f32.mrb[0].mxu0
    %v649 = vadd.f32 %v177, %v648
    %650 = vmatprep.mubr.bf16.mxu0 0
    %651 = vmatmul.mubr.bf16.gmra.mrb[0].mxu0 %v246
    %v652 = vpop.f32.mrb[0].mxu0
    %v653 = vadd.f32 %v173, %v652
    %v654 = vpop.f32.mrb[0].mxu0
    %v655 = vadd.f32 %v177, %v654
    %v656 = vpop.f32.mrb[0].mxu0
    %v657 = vadd.f32 %v173, %v656
    %v658 = vpop.f32.mrb[0].mxu0
    %v659 = vadd.f32 %v177, %v658
    %660 = vmatprep.mubr.bf16.mxu0 0
    %661 = vmatmul.mubr.bf16.gmra.mrb[0].mxu0 %v247
    %v662 = vpop.f32.mrb[0].mxu0
    %v663 = vadd.f32 %v173, %v662
    %v664 = vpop.f32.mrb[0].mxu0
    %v665 = vadd.f32 %v177, %v664
    %v666 = vpop.f32.mrb[0].mxu0
    %v667 = vadd.f32 %v173, %v666
    %v668 = vpop.f32.mrb[0].mxu0
    %v669 = vadd.f32 %v177, %v668
    %670 = vmatprep.mubr.bf16.mxu0 0
    %671 = vmatmul.mubr.bf16.gmra.mrb[0].mxu0 %v248
    %v672 = vpop.f32.mrb[0].mxu0
    %v673 = vadd.f32 %v173, %v672
    %v674 = vpop.f32.mrb[0].mxu0
    %v675 = vadd.f32 %v177, %v674
    %v676 = vpop.f32.mrb[0].mxu0
    %v677 = vadd.f32 %v173, %v676
    %v678 = vpop.f32.mrb[0].mxu0
    %v679 = vadd.f32 %v177, %v678
    %680 = vmatprep.mubr.bf16.mxu0 0
    %681 = vmatmul.mubr.bf16.gmra.mrb[0].mxu0 %v249
    %v682 = vpop.f32.mrb[0].mxu0
    %v683 = vadd.f32 %v173, %v682
    %v684 = vpop.f32.mrb[0].mxu0
    %v685 = vadd.f32 %v177, %v684
    %v686 = vpop.f32.mrb[0].mxu0
    %v687 = vadd.f32 %v173, %v686
    %v688 = vpop.f32.mrb[0].mxu0
    %v689 = vadd.f32 %v177, %v688
    %690 = vdwg.mxu0
    %691 = vmatprep.subr.bf16.mxu0 %v453
    %692 = vmatpush1.bf16.msra.mxu0 %v452
    %693 = vmatprep.subr.bf16.mxu0 %v461
    %694 = vmatpush1.bf16.msra.mxu0 %v460
    %695 = vmatprep.subr.bf16.mxu0 %v469
    %696 = vmatpush1.bf16.msra.mxu0 %v468
    %697 = vmatprep.subr.bf16.mxu0 %v477
    %698 = vmatpush1.bf16.msra.mxu0 %v476
    %699 = vmatprep.subr.bf16.mxu0 %v485
    %700 = vmatpush1.bf16.msra.mxu0 %v484
    %701 = vmatprep.subr.bf16.mxu0 %v493
    %702 = vmatpush1.bf16.msra.mxu0 %v492
    %703 = vmatprep.subr.bf16.mxu0 %v501
    %704 = vmatpush1.bf16.msra.mxu0 %v500
    %705 = vmatprep.subr.bf16.mxu0 %v509
    %706 = vmatpush1.bf16.msra.mxu0 %v508
    %707 = vmatprep.subr.bf16.mxu0 0
    %708 = vmatpush1.bf16.msra.mxu0 0
    %709 = vmatprep.subr.bf16.mxu0 0
    %710 = vmatpush1.bf16.msra.mxu0 0
    %711 = vmatprep.subr.bf16.mxu0 0
    %712 = vmatpush1.bf16.msra.mxu0 0
    %713 = vmatprep.subr.bf16.mxu0 0
    %714 = vmatpush1.bf16.msra.mxu0 0
    %715 = vmatprep.subr.bf16.mxu0 0
    %716 = vmatpush1.bf16.msra.mxu0 0
    %717 = vmatprep.subr.bf16.mxu0 0
    %718 = vmatpush1.bf16.msra.mxu0 0
    %719 = vmatprep.subr.bf16.mxu0 0
    %720 = vmatpush1.bf16.msra.mxu0 0
    %721 = vmatprep.subr.bf16.mxu0 0
    %722 = vmatpush1.bf16.msra.mxu0 0
    %723 = vmatprep.mubr.bf16.mxu0 0
    %724 = vmatmul.mubr.bf16.gmra.mrb[0].mxu0 %v242
    %v725 = vpop.f32.mrb[0].mxu0
    %v726 = vadd.f32 %v181, %v725
    %v727 = vpop.f32.mrb[0].mxu0
    %v728 = vadd.f32 %v185, %v727
    %v729 = vpop.f32.mrb[0].mxu0
    %v730 = vadd.f32 %v181, %v729
    %v731 = vpop.f32.mrb[0].mxu0
    %v732 = vadd.f32 %v185, %v731
    %733 = vmatprep.mubr.bf16.mxu0 0
    %734 = vmatmul.mubr.bf16.gmra.mrb[0].mxu0 %v243
    %v735 = vpop.f32.mrb[0].mxu0
    %v736 = vadd.f32 %v181, %v735
    %v737 = vpop.f32.mrb[0].mxu0
    %v738 = vadd.f32 %v185, %v737
    %v739 = vpop.f32.mrb[0].mxu0
    %v740 = vadd.f32 %v181, %v739
    %v741 = vpop.f32.mrb[0].mxu0
    %v742 = vadd.f32 %v185, %v741
    %743 = vmatprep.mubr.bf16.mxu0 0
    %744 = vmatmul.mubr.bf16.gmra.mrb[0].mxu0 %v244
    %v745 = vpop.f32.mrb[0].mxu0
    %v746 = vadd.f32 %v181, %v745
    %v747 = vpop.f32.mrb[0].mxu0
    %v748 = vadd.f32 %v185, %v747
    %v749 = vpop.f32.mrb[0].mxu0
    %v750 = vadd.f32 %v181, %v749
    %v751 = vpop.f32.mrb[0].mxu0
    %v752 = vadd.f32 %v185, %v751
    %753 = vmatprep.mubr.bf16.mxu0 0
    %754 = vmatmul.mubr.bf16.gmra.mrb[0].mxu0 %v245
    %v755 = vpop.f32.mrb[0].mxu0
    %v756 = vadd.f32 %v181, %v755
    %v757 = vpop.f32.mrb[0].mxu0
    %v758 = vadd.f32 %v185, %v757
    %v759 = vpop.f32.mrb[0].mxu0
    %v760 = vadd.f32 %v181, %v759
    %v761 = vpop.f32.mrb[0].mxu0
    %v762 = vadd.f32 %v185, %v761
    %763 = vmatprep.mubr.bf16.mxu0 0
    %764 = vmatmul.mubr.bf16.gmra.mrb[0].mxu0 %v246
    %v765 = vpop.f32.mrb[0].mxu0
    %v766 = vadd.f32 %v181, %v765
    %v767 = vpop.f32.mrb[0].mxu0
    %v768 = vadd.f32 %v185, %v767
    %v769 = vpop.f32.mrb[0].mxu0
    %v770 = vadd.f32 %v181, %v769
    %v771 = vpop.f32.mrb[0].mxu0
    %v772 = vadd.f32 %v185, %v771
    %773 = vmatprep.mubr.bf16.mxu0 0
    %774 = vmatmul.mubr.bf16.gmra.mrb[0].mxu0 %v247
    %v775 = vpop.f32.mrb[0].mxu0
    %v776 = vadd.f32 %v181, %v775
    %v777 = vpop.f32.mrb[0].mxu0
    %v778 = vadd.f32 %v185, %v777
    %v779 = vpop.f32.mrb[0].mxu0
    %v780 = vadd.f32 %v181, %v779
    %v781 = vpop.f32.mrb[0].mxu0
    %v782 = vadd.f32 %v185, %v781
    %783 = vmatprep.mubr.bf16.mxu0 0
    %784 = vmatmul.mubr.bf16.gmra.mrb[0].mxu0 %v248
    %v785 = vpop.f32.mrb[0].mxu0
    %v786 = vadd.f32 %v181, %v785
    %v787 = vpop.f32.mrb[0].mxu0
    %v788 = vadd.f32 %v185, %v787
    %v789 = vpop.f32.mrb[0].mxu0
    %v790 = vadd.f32 %v181, %v789
    %v791 = vpop.f32.mrb[0].mxu0
    %v792 = vadd.f32 %v185, %v791
    %793 = vmatprep.mubr.bf16.mxu0 0
    %794 = vmatmul.mubr.bf16.gmra.mrb[0].mxu0 %v249
    %v795 = vpop.f32.mrb[0].mxu0
    %v796 = vadd.f32 %v181, %v795
    %v797 = vpop.f32.mrb[0].mxu0
    %v798 = vadd.f32 %v185, %v797
    %v799 = vpop.f32.mrb[0].mxu0
    %v800 = vadd.f32 %v181, %v799
    %v801 = vpop.f32.mrb[0].mxu0
    %v802 = vadd.f32 %v185, %v801
    %803 = vdwg.mxu0
    %804 = vmatprep.subr.bf16.mxu0 %v455
    %805 = vmatpush1.bf16.msra.mxu0 %v454
    %806 = vmatprep.subr.bf16.mxu0 %v463
    %807 = vmatpush1.bf16.msra.mxu0 %v462
    %808 = vmatprep.subr.bf16.mxu0 %v471
    %809 = vmatpush1.bf16.msra.mxu0 %v470
    %810 = vmatprep.subr.bf16.mxu0 %v479
    %811 = vmatpush1.bf16.msra.mxu0 %v478
    %812 = vmatprep.subr.bf16.mxu0 %v487
    %813 = vmatpush1.bf16.msra.mxu0 %v486
    %814 = vmatprep.subr.bf16.mxu0 %v495
    %815 = vmatpush1.bf16.msra.mxu0 %v494
    %816 = vmatprep.subr.bf16.mxu0 %v503
    %817 = vmatpush1.bf16.msra.mxu0 %v502
    %818 = vmatprep.subr.bf16.mxu0 %v511
    %819 = vmatpush1.bf16.msra.mxu0 %v510
    %820 = vmatprep.subr.bf16.mxu0 0
    %821 = vmatpush1.bf16.msra.mxu0 0
    %822 = vmatprep.subr.bf16.mxu0 0
    %823 = vmatpush1.bf16.msra.mxu0 0
    %824 = vmatprep.subr.bf16.mxu0 0
    %825 = vmatpush1.bf16.msra.mxu0 0
    %826 = vmatprep.subr.bf16.mxu0 0
    %827 = vmatpush1.bf16.msra.mxu0 0
    %828 = vmatprep.subr.bf16.mxu0 0
    %829 = vmatpush1.bf16.msra.mxu0 0
    %830 = vmatprep.subr.bf16.mxu0 0
    %831 = vmatpush1.bf16.msra.mxu0 0
    %832 = vmatprep.subr.bf16.mxu0 0
    %833 = vmatpush1.bf16.msra.mxu0 0
    %834 = vmatprep.subr.bf16.mxu0 0
    %835 = vmatpush1.bf16.msra.mxu0 0
    %836 = vmatprep.mubr.bf16.mxu0 0
    %837 = vmatmul.mubr.bf16.gmra.mrb[0].mxu0 %v242
    %v838 = vpop.f32.mrb[0].mxu0
    %v839 = vadd.f32 %v189, %v838
    %v840 = vpop.f32.mrb[0].mxu0
    %v841 = vadd.f32 %v193, %v840
    %v842 = vpop.f32.mrb[0].mxu0
    %v843 = vadd.f32 %v189, %v842
    %v844 = vpop.f32.mrb[0].mxu0
    %v845 = vadd.f32 %v193, %v844
    %846 = vmatprep.mubr.bf16.mxu0 0
    %847 = vmatmul.mubr.bf16.gmra.mrb[0].mxu0 %v243
    %v848 = vpop.f32.mrb[0].mxu0
    %v849 = vadd.f32 %v189, %v848
    %v850 = vpop.f32.mrb[0].mxu0
    %v851 = vadd.f32 %v193, %v850
    %v852 = vpop.f32.mrb[0].mxu0
    %v853 = vadd.f32 %v189, %v852
    %v854 = vpop.f32.mrb[0].mxu0
    %v855 = vadd.f32 %v193, %v854
    %856 = vmatprep.mubr.bf16.mxu0 0
    %857 = vmatmul.mubr.bf16.gmra.mrb[0].mxu0 %v244
    %v858 = vpop.f32.mrb[0].mxu0
    %v859 = vadd.f32 %v189, %v858
    %v860 = vpop.f32.mrb[0].mxu0
    %v861 = vadd.f32 %v193, %v860
    %v862 = vpop.f32.mrb[0].mxu0
    %v863 = vadd.f32 %v189, %v862
    %v864 = vpop.f32.mrb[0].mxu0
    %v865 = vadd.f32 %v193, %v864
    %866 = vmatprep.mubr.bf16.mxu0 0
    %867 = vmatmul.mubr.bf16.gmra.mrb[0].mxu0 %v245
    %v868 = vpop.f32.mrb[0].mxu0
    %v869 = vadd.f32 %v189, %v868
    %v870 = vpop.f32.mrb[0].mxu0
    %v871 = vadd.f32 %v193, %v870
    %v872 = vpop.f32.mrb[0].mxu0
    %v873 = vadd.f32 %v189, %v872
    %v874 = vpop.f32.mrb[0].mxu0
    %v875 = vadd.f32 %v193, %v874
    %876 = vmatprep.mubr.bf16.mxu0 0
    %877 = vmatmul.mubr.bf16.gmra.mrb[0].mxu0 %v246
    %v878 = vpop.f32.mrb[0].mxu0
    %v879 = vadd.f32 %v189, %v878
    %v880 = vpop.f32.mrb[0].mxu0
    %v881 = vadd.f32 %v193, %v880
    %v882 = vpop.f32.mrb[0].mxu0
    %v883 = vadd.f32 %v189, %v882
    %v884 = vpop.f32.mrb[0].mxu0
    %v885 = vadd.f32 %v193, %v884
    %886 = vmatprep.mubr.bf16.mxu0 0
    %887 = vmatmul.mubr.bf16.gmra.mrb[0].mxu0 %v247
    %v888 = vpop.f32.mrb[0].mxu0
    %v889 = vadd.f32 %v189, %v888
    %v890 = vpop.f32.mrb[0].mxu0
    %v891 = vadd.f32 %v193, %v890
    %v892 = vpop.f32.mrb[0].mxu0
    %v893 = vadd.f32 %v189, %v892
    %v894 = vpop.f32.mrb[0].mxu0
    %v895 = vadd.f32 %v193, %v894
    %896 = vmatprep.mubr.bf16.mxu0 0
    %897 = vmatmul.mubr.bf16.gmra.mrb[0].mxu0 %v248
    %v898 = vpop.f32.mrb[0].mxu0
    %v899 = vadd.f32 %v189, %v898
    %v900 = vpop.f32.mrb[0].mxu0
    %v901 = vadd.f32 %v193, %v900
    %v902 = vpop.f32.mrb[0].mxu0
    %v903 = vadd.f32 %v189, %v902
    %v904 = vpop.f32.mrb[0].mxu0
    %v905 = vadd.f32 %v193, %v904
    %906 = vmatprep.mubr.bf16.mxu0 0
    %907 = vmatmul.mubr.bf16.gmra.mrb[0].mxu0 %v249
    %v908 = vpop.f32.mrb[0].mxu0
    %v909 = vadd.f32 %v189, %v908
    %v910 = vpop.f32.mrb[0].mxu0
    %v911 = vadd.f32 %v193, %v910
    %v912 = vpop.f32.mrb[0].mxu0
    %v913 = vadd.f32 %v189, %v912
    %v914 = vpop.f32.mrb[0].mxu0
    %v915 = vadd.f32 %v193, %v914
    %916 = vdwg.mxu0
    %917 = vmatprep.subr.bf16.mxu0 %v457
    %918 = vmatpush1.bf16.msra.mxu0 %v456
    %919 = vmatprep.subr.bf16.mxu0 %v465
    %920 = vmatpush1.bf16.msra.mxu0 %v464
    %921 = vmatprep.subr.bf16.mxu0 %v473
    %922 = vmatpush1.bf16.msra.mxu0 %v472
    %923 = vmatprep.subr.bf16.mxu0 %v481
    %924 = vmatpush1.bf16.msra.mxu0 %v480
    %925 = vmatprep.subr.bf16.mxu0 %v489
    %926 = vmatpush1.bf16.msra.mxu0 %v488
    %927 = vmatprep.subr.bf16.mxu0 %v497
    %928 = vmatpush1.bf16.msra.mxu0 %v496
    %929 = vmatprep.subr.bf16.mxu0 %v505
    %930 = vmatpush1.bf16.msra.mxu0 %v504
    %931 = vmatprep.subr.bf16.mxu0 %v513
    %932 = vmatpush1.bf16.msra.mxu0 %v512
    %933 = vmatprep.subr.bf16.mxu0 0
    %934 = vmatpush1.bf16.msra.mxu0 0
    %935 = vmatprep.subr.bf16.mxu0 0
    %936 = vmatpush1.bf16.msra.mxu0 0
    %937 = vmatprep.subr.bf16.mxu0 0
    %938 = vmatpush1.bf16.msra.mxu0 0
    %939 = vmatprep.subr.bf16.mxu0 0
    %940 = vmatpush1.bf16.msra.mxu0 0
    %941 = vmatprep.subr.bf16.mxu0 0
    %942 = vmatpush1.bf16.msra.mxu0 0
    %943 = vmatprep.subr.bf16.mxu0 0
    %944 = vmatpush1.bf16.msra.mxu0 0
    %945 = vmatprep.subr.bf16.mxu0 0
    %946 = vmatpush1.bf16.msra.mxu0 0
    %947 = vmatprep.subr.bf16.mxu0 0
    %948 = vmatpush1.bf16.msra.mxu0 0
    %949 = vmatprep.mubr.bf16.mxu0 0
    %950 = vmatmul.mubr.bf16.gmra.mrb[0].mxu0 %v242
    %v951 = vpop.f32.mrb[0].mxu0
    %v952 = vadd.f32 %v197, %v951
    %v953 = vpop.f32.mrb[0].mxu0
    %v954 = vadd.f32 %v201, %v953
    %v955 = vpop.f32.mrb[0].mxu0
    %v956 = vadd.f32 %v197, %v955
    %v957 = vpop.f32.mrb[0].mxu0
    %v958 = vadd.f32 %v201, %v957
    %959 = vmatprep.mubr.bf16.mxu0 0
    %960 = vmatmul.mubr.bf16.gmra.mrb[0].mxu0 %v243
    %v961 = vpop.f32.mrb[0].mxu0
    %v962 = vadd.f32 %v197, %v961
    %v963 = vpop.f32.mrb[0].mxu0
    %v964 = vadd.f32 %v201, %v963
    %v965 = vpop.f32.mrb[0].mxu0
    %v966 = vadd.f32 %v197, %v965
    %v967 = vpop.f32.mrb[0].mxu0
    %v968 = vadd.f32 %v201, %v967
    %969 = vmatprep.mubr.bf16.mxu0 0
    %970 = vmatmul.mubr.bf16.gmra.mrb[0].mxu0 %v244
    %v971 = vpop.f32.mrb[0].mxu0
    %v972 = vadd.f32 %v197, %v971
    %v973 = vpop.f32.mrb[0].mxu0
    %v974 = vadd.f32 %v201, %v973
    %v975 = vpop.f32.mrb[0].mxu0
    %v976 = vadd.f32 %v197, %v975
    %v977 = vpop.f32.mrb[0].mxu0
    %v978 = vadd.f32 %v201, %v977
    %979 = vmatprep.mubr.bf16.mxu0 0
    %980 = vmatmul.mubr.bf16.gmra.mrb[0].mxu0 %v245
    %v981 = vpop.f32.mrb[0].mxu0
    %v982 = vadd.f32 %v197, %v981
    %v983 = vpop.f32.mrb[0].mxu0
    %v984 = vadd.f32 %v201, %v983
    %v985 = vpop.f32.mrb[0].mxu0
    %v986 = vadd.f32 %v197, %v985
    %v987 = vpop.f32.mrb[0].mxu0
    %v988 = vadd.f32 %v201, %v987
    %989 = vmatprep.mubr.bf16.mxu0 0
    %990 = vmatmul.mubr.bf16.gmra.mrb[0].mxu0 %v246
    %v991 = vpop.f32.mrb[0].mxu0
    %v992 = vadd.f32 %v197, %v991
    %v993 = vpop.f32.mrb[0].mxu0
    %v994 = vadd.f32 %v201, %v993
    %v995 = vpop.f32.mrb[0].mxu0
    %v996 = vadd.f32 %v197, %v995
    %v997 = vpop.f32.mrb[0].mxu0
    %v998 = vadd.f32 %v201, %v997
    %999 = vmatprep.mubr.bf16.mxu0 0
    %1000 = vmatmul.mubr.bf16.gmra.mrb[0].mxu0 %v247
    %v1001 = vpop.f32.mrb[0].mxu0
    %v1002 = vadd.f32 %v197, %v1001
    %v1003 = vpop.f32.mrb[0].mxu0
    %v1004 = vadd.f32 %v201, %v1003
    %v1005 = vpop.f32.mrb[0].mxu0
    %v1006 = vadd.f32 %v197, %v1005
    %v1007 = vpop.f32.mrb[0].mxu0
    %v1008 = vadd.f32 %v201, %v1007
    %1009 = vmatprep.mubr.bf16.mxu0 0
    %1010 = vmatmul.mubr.bf16.gmra.mrb[0].mxu0 %v248
    %v1011 = vpop.f32.mrb[0].mxu0
    %v1012 = vadd.f32 %v197, %v1011
    %v1013 = vpop.f32.mrb[0].mxu0
    %v1014 = vadd.f32 %v201, %v1013
    %v1015 = vpop.f32.mrb[0].mxu0
    %v1016 = vadd.f32 %v197, %v1015
    %v1017 = vpop.f32.mrb[0].mxu0
    %v1018 = vadd.f32 %v201, %v1017
    %1019 = vmatprep.mubr.bf16.mxu0 0
    %1020 = vmatmul.mubr.bf16.gmra.mrb[0].mxu0 %v249
    %v1021 = vpop.f32.mrb[0].mxu0
    %v1022 = vadd.f32 %v197, %v1021
    %v1023 = vpop.f32.mrb[0].mxu0
    %v1024 = vadd.f32 %v201, %v1023
    %v1025 = vpop.f32.mrb[0].mxu0
    %v1026 = vadd.f32 %v197, %v1025
    %v1027 = vpop.f32.mrb[0].mxu0
    %v1028 = vadd.f32 %v201, %v1027
    %1029 = vdwg.mxu0
    %vm1030 = vcmp.gt.f32.partialorder %v613, 0.0
    %vm1031 = vcmp.gt.f32.partialorder %v615, 0.0
    %vm1032 = vcmp.gt.f32.partialorder %v726, 0.0
    %vm1033 = vcmp.gt.f32.partialorder %v728, 0.0
    %vm1034 = vcmp.gt.f32.partialorder %v839, 0.0
    %vm1035 = vcmp.gt.f32.partialorder %v841, 0.0
    %vm1036 = vcmp.gt.f32.partialorder %v952, 0.0
    %vm1037 = vcmp.gt.f32.partialorder %v954, 0.0
    %vm1038 = vcmp.gt.f32.partialorder %v617, 0.0
    %vm1039 = vcmp.gt.f32.partialorder %v619, 0.0
    %vm1040 = vcmp.gt.f32.partialorder %v730, 0.0
    %vm1041 = vcmp.gt.f32.partialorder %v732, 0.0
    %vm1042 = vcmp.gt.f32.partialorder %v843, 0.0
    %vm1043 = vcmp.gt.f32.partialorder %v845, 0.0
    %vm1044 = vcmp.gt.f32.partialorder %v956, 0.0
    %vm1045 = vcmp.gt.f32.partialorder %v958, 0.0
    %vm1046 = vcmp.gt.f32.partialorder %v623, 0.0
    %vm1047 = vcmp.gt.f32.partialorder %v625, 0.0
    %vm1048 = vcmp.gt.f32.partialorder %v736, 0.0
    %vm1049 = vcmp.gt.f32.partialorder %v738, 0.0
    %vm1050 = vcmp.gt.f32.partialorder %v849, 0.0
    %vm1051 = vcmp.gt.f32.partialorder %v851, 0.0
    %vm1052 = vcmp.gt.f32.partialorder %v962, 0.0
    %vm1053 = vcmp.gt.f32.partialorder %v964, 0.0
    %vm1054 = vcmp.gt.f32.partialorder %v627, 0.0
    %vm1055 = vcmp.gt.f32.partialorder %v629, 0.0
    %vm1056 = vcmp.gt.f32.partialorder %v740, 0.0
    %vm1057 = vcmp.gt.f32.partialorder %v742, 0.0
    %vm1058 = vcmp.gt.f32.partialorder %v853, 0.0
    %vm1059 = vcmp.gt.f32.partialorder %v855, 0.0
    %vm1060 = vcmp.gt.f32.partialorder %v966, 0.0
    %vm1061 = vcmp.gt.f32.partialorder %v968, 0.0
    %vm1062 = vcmp.gt.f32.partialorder %v633, 0.0
    %vm1063 = vcmp.gt.f32.partialorder %v635, 0.0
    %vm1064 = vcmp.gt.f32.partialorder %v746, 0.0
    %vm1065 = vcmp.gt.f32.partialorder %v748, 0.0
    %vm1066 = vcmp.gt.f32.partialorder %v859, 0.0
    %vm1067 = vcmp.gt.f32.partialorder %v861, 0.0
    %vm1068 = vcmp.gt.f32.partialorder %v972, 0.0
    %vm1069 = vcmp.gt.f32.partialorder %v974, 0.0
    %vm1070 = vcmp.gt.f32.partialorder %v637, 0.0
    %vm1071 = vcmp.gt.f32.partialorder %v639, 0.0
    %vm1072 = vcmp.gt.f32.partialorder %v750, 0.0
    %vm1073 = vcmp.gt.f32.partialorder %v752, 0.0
    %vm1074 = vcmp.gt.f32.partialorder %v863, 0.0
    %vm1075 = vcmp.gt.f32.partialorder %v865, 0.0
    %vm1076 = vcmp.gt.f32.partialorder %v976, 0.0
    %vm1077 = vcmp.gt.f32.partialorder %v978, 0.0
    %vm1078 = vcmp.gt.f32.partialorder %v643, 0.0
    %vm1079 = vcmp.gt.f32.partialorder %v645, 0.0
    %vm1080 = vcmp.gt.f32.partialorder %v756, 0.0
    %vm1081 = vcmp.gt.f32.partialorder %v758, 0.0
    %vm1082 = vcmp.gt.f32.partialorder %v869, 0.0
    %vm1083 = vcmp.gt.f32.partialorder %v871, 0.0
    %vm1084 = vcmp.gt.f32.partialorder %v982, 0.0
    %vm1085 = vcmp.gt.f32.partialorder %v984, 0.0
    %vm1086 = vcmp.gt.f32.partialorder %v647, 0.0
    %vm1087 = vcmp.gt.f32.partialorder %v649, 0.0
    %vm1088 = vcmp.gt.f32.partialorder %v760, 0.0
    %vm1089 = vcmp.gt.f32.partialorder %v762, 0.0
    %vm1090 = vcmp.gt.f32.partialorder %v873, 0.0
    %vm1091 = vcmp.gt.f32.partialorder %v875, 0.0
    %vm1092 = vcmp.gt.f32.partialorder %v986, 0.0
    %vm1093 = vcmp.gt.f32.partialorder %v988, 0.0
    %vm1094 = vcmp.gt.f32.partialorder %v653, 0.0
    %vm1095 = vcmp.gt.f32.partialorder %v655, 0.0
    %vm1096 = vcmp.gt.f32.partialorder %v766, 0.0
    %vm1097 = vcmp.gt.f32.partialorder %v768, 0.0
    %vm1098 = vcmp.gt.f32.partialorder %v879, 0.0
    %vm1099 = vcmp.gt.f32.partialorder %v881, 0.0
    %vm1100 = vcmp.gt.f32.partialorder %v992, 0.0
    %vm1101 = vcmp.gt.f32.partialorder %v994, 0.0
    %vm1102 = vcmp.gt.f32.partialorder %v657, 0.0
    %vm1103 = vcmp.gt.f32.partialorder %v659, 0.0
    %vm1104 = vcmp.gt.f32.partialorder %v770, 0.0
    %vm1105 = vcmp.gt.f32.partialorder %v772, 0.0
    %vm1106 = vcmp.gt.f32.partialorder %v883, 0.0
    %vm1107 = vcmp.gt.f32.partialorder %v885, 0.0
    %vm1108 = vcmp.gt.f32.partialorder %v996, 0.0
    %vm1109 = vcmp.gt.f32.partialorder %v998, 0.0
    %vm1110 = vcmp.gt.f32.partialorder %v663, 0.0
    %vm1111 = vcmp.gt.f32.partialorder %v665, 0.0
    %vm1112 = vcmp.gt.f32.partialorder %v776, 0.0
    %vm1113 = vcmp.gt.f32.partialorder %v778, 0.0
    %vm1114 = vcmp.gt.f32.partialorder %v889, 0.0
    %vm1115 = vcmp.gt.f32.partialorder %v891, 0.0
    %vm1116 = vcmp.gt.f32.partialorder %v1002, 0.0
    %vm1117 = vcmp.gt.f32.partialorder %v1004, 0.0
    %vm1118 = vcmp.gt.f32.partialorder %v667, 0.0
    %vm1119 = vcmp.gt.f32.partialorder %v669, 0.0
    %vm1120 = vcmp.gt.f32.partialorder %v780, 0.0
    %vm1121 = vcmp.gt.f32.partialorder %v782, 0.0
    %vm1122 = vcmp.gt.f32.partialorder %v893, 0.0
    %vm1123 = vcmp.gt.f32.partialorder %v895, 0.0
    %vm1124 = vcmp.gt.f32.partialorder %v1006, 0.0
    %vm1125 = vcmp.gt.f32.partialorder %v1008, 0.0
    %vm1126 = vcmp.gt.f32.partialorder %v673, 0.0
    %vm1127 = vcmp.gt.f32.partialorder %v675, 0.0
    %vm1128 = vcmp.gt.f32.partialorder %v786, 0.0
    %vm1129 = vcmp.gt.f32.partialorder %v788, 0.0
    %vm1130 = vcmp.gt.f32.partialorder %v899, 0.0
    %vm1131 = vcmp.gt.f32.partialorder %v901, 0.0
    %vm1132 = vcmp.gt.f32.partialorder %v1012, 0.0
    %vm1133 = vcmp.gt.f32.partialorder %v1014, 0.0
    %vm1134 = vcmp.gt.f32.partialorder %v677, 0.0
    %vm1135 = vcmp.gt.f32.partialorder %v679, 0.0
    %vm1136 = vcmp.gt.f32.partialorder %v790, 0.0
    %vm1137 = vcmp.gt.f32.partialorder %v792, 0.0
    %vm1138 = vcmp.gt.f32.partialorder %v903, 0.0
    %vm1139 = vcmp.gt.f32.partialorder %v905, 0.0
    %vm1140 = vcmp.gt.f32.partialorder %v1016, 0.0
    %vm1141 = vcmp.gt.f32.partialorder %v1018, 0.0
    %vm1142 = vcmp.gt.f32.partialorder %v683, 0.0
    %vm1143 = vcmp.gt.f32.partialorder %v685, 0.0
    %vm1144 = vcmp.gt.f32.partialorder %v796, 0.0
    %vm1145 = vcmp.gt.f32.partialorder %v798, 0.0
    %vm1146 = vcmp.gt.f32.partialorder %v909, 0.0
    %vm1147 = vcmp.gt.f32.partialorder %v911, 0.0
    %vm1148 = vcmp.gt.f32.partialorder %v1022, 0.0
    %vm1149 = vcmp.gt.f32.partialorder %v1024, 0.0
    %vm1150 = vcmp.gt.f32.partialorder %v687, 0.0
    %vm1151 = vcmp.gt.f32.partialorder %v689, 0.0
    %vm1152 = vcmp.gt.f32.partialorder %v800, 0.0
    %vm1153 = vcmp.gt.f32.partialorder %v802, 0.0
    %vm1154 = vcmp.gt.f32.partialorder %v913, 0.0
    %vm1155 = vcmp.gt.f32.partialorder %v915, 0.0
    %vm1156 = vcmp.gt.f32.partialorder %v1026, 0.0
    %vm1157 = vcmp.gt.f32.partialorder %v1028, 0.0
    %v1158 = vmul.f32 %v613, 0.2
    %v1159 = vmul.f32 %v615, 0.2
    %v1160 = vmul.f32 %v726, 0.2
    %v1161 = vmul.f32 %v728, 0.2
    %v1162 = vmul.f32 %v839, 0.2
    %v1163 = vmul.f32 %v841, 0.2
    %v1164 = vmul.f32 %v952, 0.2
    %v1165 = vmul.f32 %v954, 0.2
    %v1166 = vmul.f32 %v617, 0.2
    %v1167 = vmul.f32 %v619, 0.2
    %v1168 = vmul.f32 %v730, 0.2
    %v1169 = vmul.f32 %v732, 0.2
    %v1170 = vmul.f32 %v843, 0.2
    %v1171 = vmul.f32 %v845, 0.2
    %v1172 = vmul.f32 %v956, 0.2
    %v1173 = vmul.f32 %v958, 0.2
    %v1174 = vmul.f32 %v623, 0.2
    %v1175 = vmul.f32 %v625, 0.2
    %v1176 = vmul.f32 %v736, 0.2
    %v1177 = vmul.f32 %v738, 0.2
    %v1178 = vmul.f32 %v849, 0.2
    %v1179 = vmul.f32 %v851, 0.2
    %v1180 = vmul.f32 %v962, 0.2
    %v1181 = vmul.f32 %v964, 0.2
    %v1182 = vmul.f32 %v627, 0.2
    %v1183 = vmul.f32 %v629, 0.2
    %v1184 = vmul.f32 %v740, 0.2
    %v1185 = vmul.f32 %v742, 0.2
    %v1186 = vmul.f32 %v853, 0.2
    %v1187 = vmul.f32 %v855, 0.2
    %v1188 = vmul.f32 %v966, 0.2
    %v1189 = vmul.f32 %v968, 0.2
    %v1190 = vmul.f32 %v633, 0.2
    %v1191 = vmul.f32 %v635, 0.2
    %v1192 = vmul.f32 %v746, 0.2
    %v1193 = vmul.f32 %v748, 0.2
    %v1194 = vmul.f32 %v859, 0.2
    %v1195 = vmul.f32 %v861, 0.2
    %v1196 = vmul.f32 %v972, 0.2
    %v1197 = vmul.f32 %v974, 0.2
    %v1198 = vmul.f32 %v637, 0.2
    %v1199 = vmul.f32 %v639, 0.2
    %v1200 = vmul.f32 %v750, 0.2
    %v1201 = vmul.f32 %v752, 0.2
    %v1202 = vmul.f32 %v863, 0.2
    %v1203 = vmul.f32 %v865, 0.2
    %v1204 = vmul.f32 %v976, 0.2
    %v1205 = vmul.f32 %v978, 0.2
    %v1206 = vmul.f32 %v643, 0.2
    %v1207 = vmul.f32 %v645, 0.2
    %v1208 = vmul.f32 %v756, 0.2
    %v1209 = vmul.f32 %v758, 0.2
    %v1210 = vmul.f32 %v869, 0.2
    %v1211 = vmul.f32 %v871, 0.2
    %v1212 = vmul.f32 %v982, 0.2
    %v1213 = vmul.f32 %v984, 0.2
    %v1214 = vmul.f32 %v647, 0.2
    %v1215 = vmul.f32 %v649, 0.2
    %v1216 = vmul.f32 %v760, 0.2
    %v1217 = vmul.f32 %v762, 0.2
    %v1218 = vmul.f32 %v873, 0.2
    %v1219 = vmul.f32 %v875, 0.2
    %v1220 = vmul.f32 %v986, 0.2
    %v1221 = vmul.f32 %v988, 0.2
    %v1222 = vmul.f32 %v653, 0.2
    %v1223 = vmul.f32 %v655, 0.2
    %v1224 = vmul.f32 %v766, 0.2
    %v1225 = vmul.f32 %v768, 0.2
    %v1226 = vmul.f32 %v879, 0.2
    %v1227 = vmul.f32 %v881, 0.2
    %v1228 = vmul.f32 %v992, 0.2
    %v1229 = vmul.f32 %v994, 0.2
    %v1230 = vmul.f32 %v657, 0.2
    %v1231 = vmul.f32 %v659, 0.2
    %v1232 = vmul.f32 %v770, 0.2
    %v1233 = vmul.f32 %v772, 0.2
    %v1234 = vmul.f32 %v883, 0.2
    %v1235 = vmul.f32 %v885, 0.2
    %v1236 = vmul.f32 %v996, 0.2
    %v1237 = vmul.f32 %v998, 0.2
    %v1238 = vmul.f32 %v663, 0.2
    %v1239 = vmul.f32 %v665, 0.2
    %v1240 = vmul.f32 %v776, 0.2
    %v1241 = vmul.f32 %v778, 0.2
    %v1242 = vmul.f32 %v889, 0.2
    %v1243 = vmul.f32 %v891, 0.2
    %v1244 = vmul.f32 %v1002, 0.2
    %v1245 = vmul.f32 %v1004, 0.2
    %v1246 = vmul.f32 %v667, 0.2
    %v1247 = vmul.f32 %v669, 0.2
    %v1248 = vmul.f32 %v780, 0.2
    %v1249 = vmul.f32 %v782, 0.2
    %v1250 = vmul.f32 %v893, 0.2
    %v1251 = vmul.f32 %v895, 0.2
    %v1252 = vmul.f32 %v1006, 0.2
    %v1253 = vmul.f32 %v1008, 0.2
    %v1254 = vmul.f32 %v673, 0.2
    %v1255 = vmul.f32 %v675, 0.2
    %v1256 = vmul.f32 %v786, 0.2
    %v1257 = vmul.f32 %v788, 0.2
    %v1258 = vmul.f32 %v899, 0.2
    %v1259 = vmul.f32 %v901, 0.2
    %v1260 = vmul.f32 %v1012, 0.2
    %v1261 = vmul.f32 %v1014, 0.2
    %v1262 = vmul.f32 %v677, 0.2
    %v1263 = vmul.f32 %v679, 0.2
    %v1264 = vmul.f32 %v790, 0.2
    %v1265 = vmul.f32 %v792, 0.2
    %v1266 = vmul.f32 %v903, 0.2
    %v1267 = vmul.f32 %v905, 0.2
    %v1268 = vmul.f32 %v1016, 0.2
    %v1269 = vmul.f32 %v1018, 0.2
    %v1270 = vmul.f32 %v683, 0.2
    %v1271 = vmul.f32 %v685, 0.2
    %v1272 = vmul.f32 %v796, 0.2
    %v1273 = vmul.f32 %v798, 0.2
    %v1274 = vmul.f32 %v909, 0.2
    %v1275 = vmul.f32 %v911, 0.2
    %v1276 = vmul.f32 %v1022, 0.2
    %v1277 = vmul.f32 %v1024, 0.2
    %v1278 = vmul.f32 %v687, 0.2
    %v1279 = vmul.f32 %v689, 0.2
    %v1280 = vmul.f32 %v800, 0.2
    %v1281 = vmul.f32 %v802, 0.2
    %v1282 = vmul.f32 %v913, 0.2
    %v1283 = vmul.f32 %v915, 0.2
    %v1284 = vmul.f32 %v1026, 0.2
    %v1285 = vmul.f32 %v1028, 0.2
    %v1286 = vsel %vm1030, %v613, %v1158
    %v1287 = vsel %vm1031, %v615, %v1159
    %v1288 = vsel %vm1032, %v726, %v1160
    %v1289 = vsel %vm1033, %v728, %v1161
    %v1290 = vsel %vm1034, %v839, %v1162
    %v1291 = vsel %vm1035, %v841, %v1163
    %v1292 = vsel %vm1036, %v952, %v1164
    %v1293 = vsel %vm1037, %v954, %v1165
    %v1294 = vsel %vm1038, %v617, %v1166
    %v1295 = vsel %vm1039, %v619, %v1167
    %v1296 = vsel %vm1040, %v730, %v1168
    %v1297 = vsel %vm1041, %v732, %v1169
    %v1298 = vsel %vm1042, %v843, %v1170
    %v1299 = vsel %vm1043, %v845, %v1171
    %v1300 = vsel %vm1044, %v956, %v1172
    %v1301 = vsel %vm1045, %v958, %v1173
    %v1302 = vsel %vm1046, %v623, %v1174
    %v1303 = vsel %vm1047, %v625, %v1175
    %v1304 = vsel %vm1048, %v736, %v1176
    %v1305 = vsel %vm1049, %v738, %v1177
    %v1306 = vsel %vm1050, %v849, %v1178
    %v1307 = vsel %vm1051, %v851, %v1179
    %v1308 = vsel %vm1052, %v962, %v1180
    %v1309 = vsel %vm1053, %v964, %v1181
    %v1310 = vsel %vm1054, %v627, %v1182
    %v1311 = vsel %vm1055, %v629, %v1183
    %v1312 = vsel %vm1056, %v740, %v1184
    %v1313 = vsel %vm1057, %v742, %v1185
    %v1314 = vsel %vm1058, %v853, %v1186
    %v1315 = vsel %vm1059, %v855, %v1187
    %v1316 = vsel %vm1060, %v966, %v1188
    %v1317 = vsel %vm1061, %v968, %v1189
    %v1318 = vsel %vm1062, %v633, %v1190
    %v1319 = vsel %vm1063, %v635, %v1191
    %v1320 = vsel %vm1064, %v746, %v1192
    %v1321 = vsel %vm1065, %v748, %v1193
    %v1322 = vsel %vm1066, %v859, %v1194
    %v1323 = vsel %vm1067, %v861, %v1195
    %v1324 = vsel %vm1068, %v972, %v1196
    %v1325 = vsel %vm1069, %v974, %v1197
    %v1326 = vsel %vm1070, %v637, %v1198
    %v1327 = vsel %vm1071, %v639, %v1199
    %v1328 = vsel %vm1072, %v750, %v1200
    %v1329 = vsel %vm1073, %v752, %v1201
    %v1330 = vsel %vm1074, %v863, %v1202
    %v1331 = vsel %vm1075, %v865, %v1203
    %v1332 = vsel %vm1076, %v976, %v1204
    %v1333 = vsel %vm1077, %v978, %v1205
    %v1334 = vsel %vm1078, %v643, %v1206
    %v1335 = vsel %vm1079, %v645, %v1207
    %v1336 = vsel %vm1080, %v756, %v1208
    %v1337 = vsel %vm1081, %v758, %v1209
    %v1338 = vsel %vm1082, %v869, %v1210
    %v1339 = vsel %vm1083, %v871, %v1211
    %v1340 = vsel %vm1084, %v982, %v1212
    %v1341 = vsel %vm1085, %v984, %v1213
    %v1342 = vsel %vm1086, %v647, %v1214
    %v1343 = vsel %vm1087, %v649, %v1215
    %v1344 = vsel %vm1088, %v760, %v1216
    %v1345 = vsel %vm1089, %v762, %v1217
    %v1346 = vsel %vm1090, %v873, %v1218
    %v1347 = vsel %vm1091, %v875, %v1219
    %v1348 = vsel %vm1092, %v986, %v1220
    %v1349 = vsel %vm1093, %v988, %v1221
    %v1350 = vsel %vm1094, %v653, %v1222
    %v1351 = vsel %vm1095, %v655, %v1223
    %v1352 = vsel %vm1096, %v766, %v1224
    %v1353 = vsel %vm1097, %v768, %v1225
    %v1354 = vsel %vm1098, %v879, %v1226
    %v1355 = vsel %vm1099, %v881, %v1227
    %v1356 = vsel %vm1100, %v992, %v1228
    %v1357 = vsel %vm1101, %v994, %v1229
    %v1358 = vsel %vm1102, %v657, %v1230
    %v1359 = vsel %vm1103, %v659, %v1231
    %v1360 = vsel %vm1104, %v770, %v1232
    %v1361 = vsel %vm1105, %v772, %v1233
    %v1362 = vsel %vm1106, %v883, %v1234
    %v1363 = vsel %vm1107, %v885, %v1235
    %v1364 = vsel %vm1108, %v996, %v1236
    %v1365 = vsel %vm1109, %v998, %v1237
    %v1366 = vsel %vm1110, %v663, %v1238
    %v1367 = vsel %vm1111, %v665, %v1239
    %v1368 = vsel %vm1112, %v776, %v1240
    %v1369 = vsel %vm1113, %v778, %v1241
    %v1370 = vsel %vm1114, %v889, %v1242
    %v1371 = vsel %vm1115, %v891, %v1243
    %v1372 = vsel %vm1116, %v1002, %v1244
    %v1373 = vsel %vm1117, %v1004, %v1245
    %v1374 = vsel %vm1118, %v667, %v1246
    %v1375 = vsel %vm1119, %v669, %v1247
    %v1376 = vsel %vm1120, %v780, %v1248
    %v1377 = vsel %vm1121, %v782, %v1249
    %v1378 = vsel %vm1122, %v893, %v1250
    %v1379 = vsel %vm1123, %v895, %v1251
    %v1380 = vsel %vm1124, %v1006, %v1252
    %v1381 = vsel %vm1125, %v1008, %v1253
    %v1382 = vsel %vm1126, %v673, %v1254
    %v1383 = vsel %vm1127, %v675, %v1255
    %v1384 = vsel %vm1128, %v786, %v1256
    %v1385 = vsel %vm1129, %v788, %v1257
    %v1386 = vsel %vm1130, %v899, %v1258
    %v1387 = vsel %vm1131, %v901, %v1259
    %v1388 = vsel %vm1132, %v1012, %v1260
    %v1389 = vsel %vm1133, %v1014, %v1261
    %v1390 = vsel %vm1134, %v677, %v1262
    %v1391 = vsel %vm1135, %v679, %v1263
    %v1392 = vsel %vm1136, %v790, %v1264
    %v1393 = vsel %vm1137, %v792, %v1265
    %v1394 = vsel %vm1138, %v903, %v1266
    %v1395 = vsel %vm1139, %v905, %v1267
    %v1396 = vsel %vm1140, %v1016, %v1268
    %v1397 = vsel %vm1141, %v1018, %v1269
    %v1398 = vsel %vm1142, %v683, %v1270
    %v1399 = vsel %vm1143, %v685, %v1271
    %v1400 = vsel %vm1144, %v796, %v1272
    %v1401 = vsel %vm1145, %v798, %v1273
    %v1402 = vsel %vm1146, %v909, %v1274
    %v1403 = vsel %vm1147, %v911, %v1275
    %v1404 = vsel %vm1148, %v1022, %v1276
    %v1405 = vsel %vm1149, %v1024, %v1277
    %v1406 = vsel %vm1150, %v687, %v1278
    %v1407 = vsel %vm1151, %v689, %v1279
    %v1408 = vsel %vm1152, %v800, %v1280
    %v1409 = vsel %vm1153, %v802, %v1281
    %v1410 = vsel %vm1154, %v913, %v1282
    %v1411 = vsel %vm1155, %v915, %v1283
    %v1412 = vsel %vm1156, %v1026, %v1284
    %v1413 = vsel %vm1157, %v1028, %v1285
    %v1414 = vpack.c.bf16 %v1294, %v1286
    %v1415 = vpack.c.bf16 %v1295, %v1287
    %v1416 = vpack.c.bf16 %v1296, %v1288
    %v1417 = vpack.c.bf16 %v1297, %v1289
    %v1418 = vpack.c.bf16 %v1298, %v1290
    %v1419 = vpack.c.bf16 %v1299, %v1291
    %v1420 = vpack.c.bf16 %v1300, %v1292
    %v1421 = vpack.c.bf16 %v1301, %v1293
    %v1422 = vpack.c.bf16 %v1310, %v1302
    %v1423 = vpack.c.bf16 %v1311, %v1303
    %v1424 = vpack.c.bf16 %v1312, %v1304
    %v1425 = vpack.c.bf16 %v1313, %v1305
    %v1426 = vpack.c.bf16 %v1314, %v1306
    %v1427 = vpack.c.bf16 %v1315, %v1307
    %v1428 = vpack.c.bf16 %v1316, %v1308
    %v1429 = vpack.c.bf16 %v1317, %v1309
    %v1430 = vpack.c.bf16 %v1326, %v1318
    %v1431 = vpack.c.bf16 %v1327, %v1319
    %v1432 = vpack.c.bf16 %v1328, %v1320
    %v1433 = vpack.c.bf16 %v1329, %v1321
    %v1434 = vpack.c.bf16 %v1330, %v1322
    %v1435 = vpack.c.bf16 %v1331, %v1323
    %v1436 = vpack.c.bf16 %v1332, %v1324
    %v1437 = vpack.c.bf16 %v1333, %v1325
    %v1438 = vpack.c.bf16 %v1342, %v1334
    %v1439 = vpack.c.bf16 %v1343, %v1335
    %v1440 = vpack.c.bf16 %v1344, %v1336
    %v1441 = vpack.c.bf16 %v1345, %v1337
    %v1442 = vpack.c.bf16 %v1346, %v1338
    %v1443 = vpack.c.bf16 %v1347, %v1339
    %v1444 = vpack.c.bf16 %v1348, %v1340
    %v1445 = vpack.c.bf16 %v1349, %v1341
    %v1446 = vpack.c.bf16 %v1358, %v1350
    %v1447 = vpack.c.bf16 %v1359, %v1351
    %v1448 = vpack.c.bf16 %v1360, %v1352
    %v1449 = vpack.c.bf16 %v1361, %v1353
    %v1450 = vpack.c.bf16 %v1362, %v1354
    %v1451 = vpack.c.bf16 %v1363, %v1355
    %v1452 = vpack.c.bf16 %v1364, %v1356
    %v1453 = vpack.c.bf16 %v1365, %v1357
    %v1454 = vpack.c.bf16 %v1374, %v1366
    %v1455 = vpack.c.bf16 %v1375, %v1367
    %v1456 = vpack.c.bf16 %v1376, %v1368
    %v1457 = vpack.c.bf16 %v1377, %v1369
    %v1458 = vpack.c.bf16 %v1378, %v1370
    %v1459 = vpack.c.bf16 %v1379, %v1371
    %v1460 = vpack.c.bf16 %v1380, %v1372
    %v1461 = vpack.c.bf16 %v1381, %v1373
    %v1462 = vpack.c.bf16 %v1390, %v1382
    %v1463 = vpack.c.bf16 %v1391, %v1383
    %v1464 = vpack.c.bf16 %v1392, %v1384
    %v1465 = vpack.c.bf16 %v1393, %v1385
    %v1466 = vpack.c.bf16 %v1394, %v1386
    %v1467 = vpack.c.bf16 %v1395, %v1387
    %v1468 = vpack.c.bf16 %v1396, %v1388
    %v1469 = vpack.c.bf16 %v1397, %v1389
    %v1470 = vpack.c.bf16 %v1406, %v1398
    %v1471 = vpack.c.bf16 %v1407, %v1399
    %v1472 = vpack.c.bf16 %v1408, %v1400
    %v1473 = vpack.c.bf16 %v1409, %v1401
    %v1474 = vpack.c.bf16 %v1410, %v1402
    %v1475 = vpack.c.bf16 %v1411, %v1403
    %v1476 = vpack.c.bf16 %v1412, %v1404
    %v1477 = vpack.c.bf16 %v1413, %v1405
    %v1478 = vld [vmem:[#allocation4] sm:$0xff]
    %v1479 = vld [vmem:[#allocation4 + $0x8] sm:$0xff]
    %v1480 = vld [vmem:[#allocation4 + $0x10] sm:$0xff]
    %v1481 = vld [vmem:[#allocation4 + $0x18] sm:$0xff]
    %v1482 = vld [vmem:[#allocation4 + $0x20] sm:$0xff]
    %v1483 = vld [vmem:[#allocation4 + $0x28] sm:$0xff]
    %v1484 = vld [vmem:[#allocation4 + $0x30] sm:$0xff]
    %v1485 = vld [vmem:[#allocation4 + $0x38] sm:$0xff]
    %v1486 = vld [vmem:[#allocation4 + $0x40] sm:$0xff]
    %v1487 = vld [vmem:[#allocation4 + $0x48] sm:$0xff]
    %v1488 = vld [vmem:[#allocation4 + $0x50] sm:$0xff]
    %v1489 = vld [vmem:[#allocation4 + $0x58] sm:$0xff]
    %v1490 = vld [vmem:[#allocation4 + $0x60] sm:$0xff]
    %v1491 = vld [vmem:[#allocation4 + $0x68] sm:$0xff]
    %v1492 = vld [vmem:[#allocation4 + $0x70] sm:$0xff]
    %v1493 = vld [vmem:[#allocation4 + $0x78] sm:$0xff]
    %v1494 = vld [vmem:[#allocation4 + $0x80] sm:$0xff]
    %v1495 = vld [vmem:[#allocation4 + $0x88] sm:$0xff]
    %v1496 = vld [vmem:[#allocation4 + $0x90] sm:$0xff]
    %v1497 = vld [vmem:[#allocation4 + $0x98] sm:$0xff]
    %v1498 = vld [vmem:[#allocation4 + $0xa0] sm:$0xff]
    %v1499 = vld [vmem:[#allocation4 + $0xa8] sm:$0xff]
    %v1500 = vld [vmem:[#allocation4 + $0xb0] sm:$0xff]
    %v1501 = vld [vmem:[#allocation4 + $0xb8] sm:$0xff]
    %v1502 = vld [vmem:[#allocation4 + $0xc0] sm:$0xff]
    %v1503 = vld [vmem:[#allocation4 + $0xc8] sm:$0xff]
    %v1504 = vld [vmem:[#allocation4 + $0xd0] sm:$0xff]
    %v1505 = vld [vmem:[#allocation4 + $0xd8] sm:$0xff]
    %v1506 = vld [vmem:[#allocation4 + $0xe0] sm:$0xff]
    %v1507 = vld [vmem:[#allocation4 + $0xe8] sm:$0xff]
    %v1508 = vld [vmem:[#allocation4 + $0xf0] sm:$0xff]
    %v1509 = vld [vmem:[#allocation4 + $0xf8] sm:$0xff]
    %v1510 = vld [vmem:[#allocation4 + $0x100] sm:$0xff]
    %v1511 = vld [vmem:[#allocation4 + $0x108] sm:$0xff]
    %v1512 = vld [vmem:[#allocation4 + $0x110] sm:$0xff]
    %v1513 = vld [vmem:[#allocation4 + $0x118] sm:$0xff]
    %v1514 = vld [vmem:[#allocation4 + $0x120] sm:$0xff]
    %v1515 = vld [vmem:[#allocation4 + $0x128] sm:$0xff]
    %v1516 = vld [vmem:[#allocation4 + $0x130] sm:$0xff]
    %v1517 = vld [vmem:[#allocation4 + $0x138] sm:$0xff]
    %v1518 = vld [vmem:[#allocation4 + $0x140] sm:$0xff]
    %v1519 = vld [vmem:[#allocation4 + $0x148] sm:$0xff]
    %v1520 = vld [vmem:[#allocation4 + $0x150] sm:$0xff]
    %v1521 = vld [vmem:[#allocation4 + $0x158] sm:$0xff]
    %v1522 = vld [vmem:[#allocation4 + $0x160] sm:$0xff]
    %v1523 = vld [vmem:[#allocation4 + $0x168] sm:$0xff]
    %v1524 = vld [vmem:[#allocation4 + $0x170] sm:$0xff]
    %v1525 = vld [vmem:[#allocation4 + $0x178] sm:$0xff]
    %v1526 = vld [vmem:[#allocation4 + $0x180] sm:$0xff]
    %v1527 = vld [vmem:[#allocation4 + $0x188] sm:$0xff]
    %v1528 = vld [vmem:[#allocation4 + $0x190] sm:$0xff]
    %v1529 = vld [vmem:[#allocation4 + $0x198] sm:$0xff]
    %v1530 = vld [vmem:[#allocation4 + $0x1a0] sm:$0xff]
    %v1531 = vld [vmem:[#allocation4 + $0x1a8] sm:$0xff]
    %v1532 = vld [vmem:[#allocation4 + $0x1b0] sm:$0xff]
    %v1533 = vld [vmem:[#allocation4 + $0x1b8] sm:$0xff]
    %v1534 = vld [vmem:[#allocation4 + $0x1c0] sm:$0xff]
    %v1535 = vld [vmem:[#allocation4 + $0x1c8] sm:$0xff]
    %v1536 = vld [vmem:[#allocation4 + $0x1d0] sm:$0xff]
    %v1537 = vld [vmem:[#allocation4 + $0x1d8] sm:$0xff]
    %v1538 = vld [vmem:[#allocation4 + $0x1e0] sm:$0xff]
    %v1539 = vld [vmem:[#allocation4 + $0x1e8] sm:$0xff]
    %v1540 = vld [vmem:[#allocation4 + $0x1f0] sm:$0xff]
    %v1541 = vld [vmem:[#allocation4 + $0x1f8] sm:$0xff]
    %v1542 = vld [vmem:[#allocation4 + $0x200] sm:$0xff]
    %v1543 = vld [vmem:[#allocation4 + $0x208] sm:$0xff]
    %v1544 = vld [vmem:[#allocation4 + $0x210] sm:$0xff]
    %v1545 = vld [vmem:[#allocation4 + $0x218] sm:$0xff]
    %v1546 = vld [vmem:[#allocation4 + $0x220] sm:$0xff]
    %v1547 = vld [vmem:[#allocation4 + $0x228] sm:$0xff]
    %v1548 = vld [vmem:[#allocation4 + $0x230] sm:$0xff]
    %v1549 = vld [vmem:[#allocation4 + $0x238] sm:$0xff]
    %v1550 = vld [vmem:[#allocation4 + $0x240] sm:$0xff]
    %v1551 = vld [vmem:[#allocation4 + $0x248] sm:$0xff]
    %v1552 = vld [vmem:[#allocation4 + $0x250] sm:$0xff]
    %v1553 = vld [vmem:[#allocation4 + $0x258] sm:$0xff]
    %v1554 = vld [vmem:[#allocation4 + $0x260] sm:$0xff]
    %v1555 = vld [vmem:[#allocation4 + $0x268] sm:$0xff]
    %v1556 = vld [vmem:[#allocation4 + $0x270] sm:$0xff]
    %v1557 = vld [vmem:[#allocation4 + $0x278] sm:$0xff]
    %v1558 = vld [vmem:[#allocation4 + $0x280] sm:$0xff]
    %v1559 = vld [vmem:[#allocation4 + $0x288] sm:$0xff]
    %v1560 = vld [vmem:[#allocation4 + $0x290] sm:$0xff]
    %v1561 = vld [vmem:[#allocation4 + $0x298] sm:$0xff]
    %v1562 = vld [vmem:[#allocation4 + $0x2a0] sm:$0xff]
    %v1563 = vld [vmem:[#allocation4 + $0x2a8] sm:$0xff]
    %v1564 = vld [vmem:[#allocation4 + $0x2b0] sm:$0xff]
    %v1565 = vld [vmem:[#allocation4 + $0x2b8] sm:$0xff]
    %v1566 = vld [vmem:[#allocation4 + $0x2c0] sm:$0xff]
    %v1567 = vld [vmem:[#allocation4 + $0x2c8] sm:$0xff]
    %v1568 = vld [vmem:[#allocation4 + $0x2d0] sm:$0xff]
    %v1569 = vld [vmem:[#allocation4 + $0x2d8] sm:$0xff]
    %v1570 = vld [vmem:[#allocation4 + $0x2e0] sm:$0xff]
    %v1571 = vld [vmem:[#allocation4 + $0x2e8] sm:$0xff]
    %v1572 = vld [vmem:[#allocation4 + $0x2f0] sm:$0xff]
    %v1573 = vld [vmem:[#allocation4 + $0x2f8] sm:$0xff]
    %v1574 = vld [vmem:[#allocation4 + $0x300] sm:$0xff]
    %v1575 = vld [vmem:[#allocation4 + $0x308] sm:$0xff]
    %v1576 = vld [vmem:[#allocation4 + $0x310] sm:$0xff]
    %v1577 = vld [vmem:[#allocation4 + $0x318] sm:$0xff]
    %v1578 = vld [vmem:[#allocation4 + $0x320] sm:$0xff]
    %v1579 = vld [vmem:[#allocation4 + $0x328] sm:$0xff]
    %v1580 = vld [vmem:[#allocation4 + $0x330] sm:$0xff]
    %v1581 = vld [vmem:[#allocation4 + $0x338] sm:$0xff]
    %v1582 = vld [vmem:[#allocation4 + $0x340] sm:$0xff]
    %v1583 = vld [vmem:[#allocation4 + $0x348] sm:$0xff]
    %v1584 = vld [vmem:[#allocation4 + $0x350] sm:$0xff]
    %v1585 = vld [vmem:[#allocation4 + $0x358] sm:$0xff]
    %v1586 = vld [vmem:[#allocation4 + $0x360] sm:$0xff]
    %v1587 = vld [vmem:[#allocation4 + $0x368] sm:$0xff]
    %v1588 = vld [vmem:[#allocation4 + $0x370] sm:$0xff]
    %v1589 = vld [vmem:[#allocation4 + $0x378] sm:$0xff]
    %v1590 = vld [vmem:[#allocation4 + $0x380] sm:$0xff]
    %v1591 = vld [vmem:[#allocation4 + $0x388] sm:$0xff]
    %v1592 = vld [vmem:[#allocation4 + $0x390] sm:$0xff]
    %v1593 = vld [vmem:[#allocation4 + $0x398] sm:$0xff]
    %v1594 = vld [vmem:[#allocation4 + $0x3a0] sm:$0xff]
    %v1595 = vld [vmem:[#allocation4 + $0x3a8] sm:$0xff]
    %v1596 = vld [vmem:[#allocation4 + $0x3b0] sm:$0xff]
    %v1597 = vld [vmem:[#allocation4 + $0x3b8] sm:$0xff]
    %v1598 = vld [vmem:[#allocation4 + $0x3c0] sm:$0xff]
    %v1599 = vld [vmem:[#allocation4 + $0x3c8] sm:$0xff]
    %v1600 = vld [vmem:[#allocation4 + $0x3d0] sm:$0xff]
    %v1601 = vld [vmem:[#allocation4 + $0x3d8] sm:$0xff]
    %v1602 = vld [vmem:[#allocation4 + $0x3e0] sm:$0xff]
    %v1603 = vld [vmem:[#allocation4 + $0x3e8] sm:$0xff]
    %v1604 = vld [vmem:[#allocation4 + $0x3f0] sm:$0xff]
    %v1605 = vld [vmem:[#allocation4 + $0x3f8] sm:$0xff]
    %v1606 = vld [vmem:[#allocation4 + $0x400] sm:$0xff]
    %v1607 = vld [vmem:[#allocation4 + $0x408] sm:$0xff]
    %v1608 = vld [vmem:[#allocation4 + $0x410] sm:$0xff]
    %v1609 = vld [vmem:[#allocation4 + $0x418] sm:$0xff]
    %v1610 = vld [vmem:[#allocation4 + $0x420] sm:$0xff]
    %v1611 = vld [vmem:[#allocation4 + $0x428] sm:$0xff]
    %v1612 = vld [vmem:[#allocation4 + $0x430] sm:$0xff]
    %v1613 = vld [vmem:[#allocation4 + $0x438] sm:$0xff]
    %v1614 = vld [vmem:[#allocation4 + $0x440] sm:$0xff]
    %v1615 = vld [vmem:[#allocation4 + $0x448] sm:$0xff]
    %v1616 = vld [vmem:[#allocation4 + $0x450] sm:$0xff]
    %v1617 = vld [vmem:[#allocation4 + $0x458] sm:$0xff]
    %v1618 = vld [vmem:[#allocation4 + $0x460] sm:$0xff]
    %v1619 = vld [vmem:[#allocation4 + $0x468] sm:$0xff]
    %v1620 = vld [vmem:[#allocation4 + $0x470] sm:$0xff]
    %v1621 = vld [vmem:[#allocation4 + $0x478] sm:$0xff]
    %v1622 = vld [vmem:[#allocation4 + $0x480] sm:$0xff]
    %v1623 = vld [vmem:[#allocation4 + $0x488] sm:$0xff]
    %v1624 = vld [vmem:[#allocation4 + $0x490] sm:$0xff]
    %v1625 = vld [vmem:[#allocation4 + $0x498] sm:$0xff]
    %v1626 = vld [vmem:[#allocation4 + $0x4a0] sm:$0xff]
    %v1627 = vld [vmem:[#allocation4 + $0x4a8] sm:$0xff]
    %v1628 = vld [vmem:[#allocation4 + $0x4b0] sm:$0xff]
    %v1629 = vld [vmem:[#allocation4 + $0x4b8] sm:$0xff]
    %v1630 = vld [vmem:[#allocation4 + $0x4c0] sm:$0xff]
    %v1631 = vld [vmem:[#allocation4 + $0x4c8] sm:$0xff]
    %v1632 = vld [vmem:[#allocation4 + $0x4d0] sm:$0xff]
    %v1633 = vld [vmem:[#allocation4 + $0x4d8] sm:$0xff]
    %v1634 = vld [vmem:[#allocation4 + $0x4e0] sm:$0xff]
    %v1635 = vld [vmem:[#allocation4 + $0x4e8] sm:$0xff]
    %v1636 = vld [vmem:[#allocation4 + $0x4f0] sm:$0xff]
    %v1637 = vld [vmem:[#allocation4 + $0x4f8] sm:$0xff]
    %v1638 = vld [vmem:[#allocation4 + $0x500] sm:$0xff]
    %v1639 = vld [vmem:[#allocation4 + $0x508] sm:$0xff]
    %v1640 = vld [vmem:[#allocation4 + $0x510] sm:$0xff]
    %v1641 = vld [vmem:[#allocation4 + $0x518] sm:$0xff]
    %v1642 = vld [vmem:[#allocation4 + $0x520] sm:$0xff]
    %v1643 = vld [vmem:[#allocation4 + $0x528] sm:$0xff]
    %v1644 = vld [vmem:[#allocation4 + $0x530] sm:$0xff]
    %v1645 = vld [vmem:[#allocation4 + $0x538] sm:$0xff]
    %v1646 = vld [vmem:[#allocation4 + $0x540] sm:$0xff]
    %v1647 = vld [vmem:[#allocation4 + $0x548] sm:$0xff]
    %v1648 = vld [vmem:[#allocation4 + $0x550] sm:$0xff]
    %v1649 = vld [vmem:[#allocation4 + $0x558] sm:$0xff]
    %v1650 = vld [vmem:[#allocation4 + $0x560] sm:$0xff]
    %v1651 = vld [vmem:[#allocation4 + $0x568] sm:$0xff]
    %v1652 = vld [vmem:[#allocation4 + $0x570] sm:$0xff]
    %v1653 = vld [vmem:[#allocation4 + $0x578] sm:$0xff]
    %v1654 = vld [vmem:[#allocation4 + $0x580] sm:$0xff]
    %v1655 = vld [vmem:[#allocation4 + $0x588] sm:$0xff]
    %v1656 = vld [vmem:[#allocation4 + $0x590] sm:$0xff]
    %v1657 = vld [vmem:[#allocation4 + $0x598] sm:$0xff]
    %v1658 = vld [vmem:[#allocation4 + $0x5a0] sm:$0xff]
    %v1659 = vld [vmem:[#allocation4 + $0x5a8] sm:$0xff]
    %v1660 = vld [vmem:[#allocation4 + $0x5b0] sm:$0xff]
    %v1661 = vld [vmem:[#allocation4 + $0x5b8] sm:$0xff]
    %v1662 = vld [vmem:[#allocation4 + $0x5c0] sm:$0xff]
    %v1663 = vld [vmem:[#allocation4 + $0x5c8] sm:$0xff]
    %v1664 = vld [vmem:[#allocation4 + $0x5d0] sm:$0xff]
    %v1665 = vld [vmem:[#allocation4 + $0x5d8] sm:$0xff]
    %v1666 = vld [vmem:[#allocation4 + $0x5e0] sm:$0xff]
    %v1667 = vld [vmem:[#allocation4 + $0x5e8] sm:$0xff]
    %v1668 = vld [vmem:[#allocation4 + $0x5f0] sm:$0xff]
    %v1669 = vld [vmem:[#allocation4 + $0x5f8] sm:$0xff]
    %v1670 = vld [vmem:[#allocation4 + $0x600] sm:$0xff]
    %v1671 = vld [vmem:[#allocation4 + $0x608] sm:$0xff]
    %v1672 = vld [vmem:[#allocation4 + $0x610] sm:$0xff]
    %v1673 = vld [vmem:[#allocation4 + $0x618] sm:$0xff]
    %v1674 = vld [vmem:[#allocation4 + $0x620] sm:$0xff]
    %v1675 = vld [vmem:[#allocation4 + $0x628] sm:$0xff]
    %v1676 = vld [vmem:[#allocation4 + $0x630] sm:$0xff]
    %v1677 = vld [vmem:[#allocation4 + $0x638] sm:$0xff]
    %v1678 = vld [vmem:[#allocation4 + $0x640] sm:$0xff]
    %v1679 = vld [vmem:[#allocation4 + $0x648] sm:$0xff]
    %v1680 = vld [vmem:[#allocation4 + $0x650] sm:$0xff]
    %v1681 = vld [vmem:[#allocation4 + $0x658] sm:$0xff]
    %v1682 = vld [vmem:[#allocation4 + $0x660] sm:$0xff]
    %v1683 = vld [vmem:[#allocation4 + $0x668] sm:$0xff]
    %v1684 = vld [vmem:[#allocation4 + $0x670] sm:$0xff]
    %v1685 = vld [vmem:[#allocation4 + $0x678] sm:$0xff]
    %v1686 = vld [vmem:[#allocation4 + $0x680] sm:$0xff]
    %v1687 = vld [vmem:[#allocation4 + $0x688] sm:$0xff]
    %v1688 = vld [vmem:[#allocation4 + $0x690] sm:$0xff]
    %v1689 = vld [vmem:[#allocation4 + $0x698] sm:$0xff]
    %v1690 = vld [vmem:[#allocation4 + $0x6a0] sm:$0xff]
    %v1691 = vld [vmem:[#allocation4 + $0x6a8] sm:$0xff]
    %v1692 = vld [vmem:[#allocation4 + $0x6b0] sm:$0xff]
    %v1693 = vld [vmem:[#allocation4 + $0x6b8] sm:$0xff]
    %v1694 = vld [vmem:[#allocation4 + $0x6c0] sm:$0xff]
    %v1695 = vld [vmem:[#allocation4 + $0x6c8] sm:$0xff]
    %v1696 = vld [vmem:[#allocation4 + $0x6d0] sm:$0xff]
    %v1697 = vld [vmem:[#allocation4 + $0x6d8] sm:$0xff]
    %v1698 = vld [vmem:[#allocation4 + $0x6e0] sm:$0xff]
    %v1699 = vld [vmem:[#allocation4 + $0x6e8] sm:$0xff]
    %v1700 = vld [vmem:[#allocation4 + $0x6f0] sm:$0xff]
    %v1701 = vld [vmem:[#allocation4 + $0x6f8] sm:$0xff]
    %v1702 = vld [vmem:[#allocation4 + $0x700] sm:$0xff]
    %v1703 = vld [vmem:[#allocation4 + $0x708] sm:$0xff]
    %v1704 = vld [vmem:[#allocation4 + $0x710] sm:$0xff]
    %v1705 = vld [vmem:[#allocation4 + $0x718] sm:$0xff]
    %v1706 = vld [vmem:[#allocation4 + $0x720] sm:$0xff]
    %v1707 = vld [vmem:[#allocation4 + $0x728] sm:$0xff]
    %v1708 = vld [vmem:[#allocation4 + $0x730] sm:$0xff]
    %v1709 = vld [vmem:[#allocation4 + $0x738] sm:$0xff]
    %v1710 = vld [vmem:[#allocation4 + $0x740] sm:$0xff]
    %v1711 = vld [vmem:[#allocation4 + $0x748] sm:$0xff]
    %v1712 = vld [vmem:[#allocation4 + $0x750] sm:$0xff]
    %v1713 = vld [vmem:[#allocation4 + $0x758] sm:$0xff]
    %v1714 = vld [vmem:[#allocation4 + $0x760] sm:$0xff]
    %v1715 = vld [vmem:[#allocation4 + $0x768] sm:$0xff]
    %v1716 = vld [vmem:[#allocation4 + $0x770] sm:$0xff]
    %v1717 = vld [vmem:[#allocation4 + $0x778] sm:$0xff]
    %v1718 = vld [vmem:[#allocation4 + $0x780] sm:$0xff]
    %v1719 = vld [vmem:[#allocation4 + $0x788] sm:$0xff]
    %v1720 = vld [vmem:[#allocation4 + $0x790] sm:$0xff]
    %v1721 = vld [vmem:[#allocation4 + $0x798] sm:$0xff]
    %v1722 = vld [vmem:[#allocation4 + $0x7a0] sm:$0xff]
    %v1723 = vld [vmem:[#allocation4 + $0x7a8] sm:$0xff]
    %v1724 = vld [vmem:[#allocation4 + $0x7b0] sm:$0xff]
    %v1725 = vld [vmem:[#allocation4 + $0x7b8] sm:$0xff]
    %v1726 = vld [vmem:[#allocation4 + $0x7c0] sm:$0xff]
    %v1727 = vld [vmem:[#allocation4 + $0x7c8] sm:$0xff]
    %v1728 = vld [vmem:[#allocation4 + $0x7d0] sm:$0xff]
    %v1729 = vld [vmem:[#allocation4 + $0x7d8] sm:$0xff]
    %v1730 = vld [vmem:[#allocation4 + $0x7e0] sm:$0xff]
    %v1731 = vld [vmem:[#allocation4 + $0x7e8] sm:$0xff]
    %v1732 = vld [vmem:[#allocation4 + $0x7f0] sm:$0xff]
    %v1733 = vld [vmem:[#allocation4 + $0x7f8] sm:$0xff]
    %v1734 = vld [vmem:[%s4] sm:$0xf]
    %v1736 = vlaneseq
    %v1737 = vshrl.u32 %v1736, 7
    %v1738 = vsub.s32 0, %v1737
    %v1739 = vrot.slane %v1734, %v1738
    %v1740 = vlaneseq
    %v1741 = vshrl.u32 %v1740, 7
    %v1742 = vsub.s32 1, %v1741
    %v1743 = vrot.slane %v1734, %v1742
    %v1744 = vlaneseq
    %v1745 = vshrl.u32 %v1744, 7
    %v1746 = vsub.s32 2, %v1745
    %v1747 = vrot.slane %v1734, %v1746
    %v1748 = vlaneseq
    %v1749 = vshrl.u32 %v1748, 7
    %v1750 = vsub.s32 3, %v1749
    %v1751 = vrot.slane %v1734, %v1750
    %v2012 = vunpack.c.l.b16 %v1478
    %v2013 = vunpack.c.h.b16 %v1478
    %v2014 = vunpack.c.l.b16 %v1479
    %v2015 = vunpack.c.h.b16 %v1479
    %v2016 = vunpack.c.l.b16 %v1480
    %v2017 = vunpack.c.h.b16 %v1480
    %v2018 = vunpack.c.l.b16 %v1481
    %v2019 = vunpack.c.h.b16 %v1481
    %v2020 = vunpack.c.l.b16 %v1482
    %v2021 = vunpack.c.h.b16 %v1482
    %v2022 = vunpack.c.l.b16 %v1483
    %v2023 = vunpack.c.h.b16 %v1483
    %v2024 = vunpack.c.l.b16 %v1484
    %v2025 = vunpack.c.h.b16 %v1484
    %v2026 = vunpack.c.l.b16 %v1485
    %v2027 = vunpack.c.h.b16 %v1485
    %v2028 = vunpack.c.l.b16 %v1486
    %v2029 = vunpack.c.h.b16 %v1486
    %v2030 = vunpack.c.l.b16 %v1487
    %v2031 = vunpack.c.h.b16 %v1487
    %v2032 = vunpack.c.l.b16 %v1488
    %v2033 = vunpack.c.h.b16 %v1488
    %v2034 = vunpack.c.l.b16 %v1489
    %v2035 = vunpack.c.h.b16 %v1489
    %v2036 = vunpack.c.l.b16 %v1490
    %v2037 = vunpack.c.h.b16 %v1490
    %v2038 = vunpack.c.l.b16 %v1491
    %v2039 = vunpack.c.h.b16 %v1491
    %v2040 = vunpack.c.l.b16 %v1492
    %v2041 = vunpack.c.h.b16 %v1492
    %v2042 = vunpack.c.l.b16 %v1493
    %v2043 = vunpack.c.h.b16 %v1493
    %v2044 = vunpack.c.l.b16 %v1494
    %v2045 = vunpack.c.h.b16 %v1494
    %v2046 = vunpack.c.l.b16 %v1495
    %v2047 = vunpack.c.h.b16 %v1495
    %v2048 = vunpack.c.l.b16 %v1496
    %v2049 = vunpack.c.h.b16 %v1496
    %v2050 = vunpack.c.l.b16 %v1497
    %v2051 = vunpack.c.h.b16 %v1497
    %v2052 = vunpack.c.l.b16 %v1498
    %v2053 = vunpack.c.h.b16 %v1498
    %v2054 = vunpack.c.l.b16 %v1499
    %v2055 = vunpack.c.h.b16 %v1499
    %v2056 = vunpack.c.l.b16 %v1500
    %v2057 = vunpack.c.h.b16 %v1500
    %v2058 = vunpack.c.l.b16 %v1501
    %v2059 = vunpack.c.h.b16 %v1501
    %v2060 = vunpack.c.l.b16 %v1502
    %v2061 = vunpack.c.h.b16 %v1502
    %v2062 = vunpack.c.l.b16 %v1503
    %v2063 = vunpack.c.h.b16 %v1503
    %v2064 = vunpack.c.l.b16 %v1504
    %v2065 = vunpack.c.h.b16 %v1504
    %v2066 = vunpack.c.l.b16 %v1505
    %v2067 = vunpack.c.h.b16 %v1505
    %v2068 = vunpack.c.l.b16 %v1506
    %v2069 = vunpack.c.h.b16 %v1506
    %v2070 = vunpack.c.l.b16 %v1507
    %v2071 = vunpack.c.h.b16 %v1507
    %v2072 = vunpack.c.l.b16 %v1508
    %v2073 = vunpack.c.h.b16 %v1508
    %v2074 = vunpack.c.l.b16 %v1509
    %v2075 = vunpack.c.h.b16 %v1509
    %v2076 = vunpack.c.l.b16 %v1510
    %v2077 = vunpack.c.h.b16 %v1510
    %v2078 = vunpack.c.l.b16 %v1511
    %v2079 = vunpack.c.h.b16 %v1511
    %v2080 = vunpack.c.l.b16 %v1512
    %v2081 = vunpack.c.h.b16 %v1512
    %v2082 = vunpack.c.l.b16 %v1513
    %v2083 = vunpack.c.h.b16 %v1513
    %v2084 = vunpack.c.l.b16 %v1514
    %v2085 = vunpack.c.h.b16 %v1514
    %v2086 = vunpack.c.l.b16 %v1515
    %v2087 = vunpack.c.h.b16 %v1515
    %v2088 = vunpack.c.l.b16 %v1516
    %v2089 = vunpack.c.h.b16 %v1516
    %v2090 = vunpack.c.l.b16 %v1517
    %v2091 = vunpack.c.h.b16 %v1517
    %v2092 = vunpack.c.l.b16 %v1518
    %v2093 = vunpack.c.h.b16 %v1518
    %v2094 = vunpack.c.l.b16 %v1519
    %v2095 = vunpack.c.h.b16 %v1519
    %v2096 = vunpack.c.l.b16 %v1520
    %v2097 = vunpack.c.h.b16 %v1520
    %v2098 = vunpack.c.l.b16 %v1521
    %v2099 = vunpack.c.h.b16 %v1521
    %v2100 = vunpack.c.l.b16 %v1522
    %v2101 = vunpack.c.h.b16 %v1522
    %v2102 = vunpack.c.l.b16 %v1523
    %v2103 = vunpack.c.h.b16 %v1523
    %v2104 = vunpack.c.l.b16 %v1524
    %v2105 = vunpack.c.h.b16 %v1524
    %v2106 = vunpack.c.l.b16 %v1525
    %v2107 = vunpack.c.h.b16 %v1525
    %v2108 = vunpack.c.l.b16 %v1526
    %v2109 = vunpack.c.h.b16 %v1526
    %v2110 = vunpack.c.l.b16 %v1527
    %v2111 = vunpack.c.h.b16 %v1527
    %v2112 = vunpack.c.l.b16 %v1528
    %v2113 = vunpack.c.h.b16 %v1528
    %v2114 = vunpack.c.l.b16 %v1529
    %v2115 = vunpack.c.h.b16 %v1529
    %v2116 = vunpack.c.l.b16 %v1530
    %v2117 = vunpack.c.h.b16 %v1530
    %v2118 = vunpack.c.l.b16 %v1531
    %v2119 = vunpack.c.h.b16 %v1531
    %v2120 = vunpack.c.l.b16 %v1532
    %v2121 = vunpack.c.h.b16 %v1532
    %v2122 = vunpack.c.l.b16 %v1533
    %v2123 = vunpack.c.h.b16 %v1533
    %v2124 = vunpack.c.l.b16 %v1534
    %v2125 = vunpack.c.h.b16 %v1534
    %v2126 = vunpack.c.l.b16 %v1535
    %v2127 = vunpack.c.h.b16 %v1535
    %v2128 = vunpack.c.l.b16 %v1536
    %v2129 = vunpack.c.h.b16 %v1536
    %v2130 = vunpack.c.l.b16 %v1537
    %v2131 = vunpack.c.h.b16 %v1537
    %v2132 = vunpack.c.l.b16 %v1538
    %v2133 = vunpack.c.h.b16 %v1538
    %v2134 = vunpack.c.l.b16 %v1539
    %v2135 = vunpack.c.h.b16 %v1539
    %v2136 = vunpack.c.l.b16 %v1540
    %v2137 = vunpack.c.h.b16 %v1540
    %v2138 = vunpack.c.l.b16 %v1541
    %v2139 = vunpack.c.h.b16 %v1541
    %v2140 = vunpack.c.l.b16 %v1542
    %v2141 = vunpack.c.h.b16 %v1542
    %v2142 = vunpack.c.l.b16 %v1543
    %v2143 = vunpack.c.h.b16 %v1543
    %v2144 = vunpack.c.l.b16 %v1544
    %v2145 = vunpack.c.h.b16 %v1544
    %v2146 = vunpack.c.l.b16 %v1545
    %v2147 = vunpack.c.h.b16 %v1545
    %v2148 = vunpack.c.l.b16 %v1546
    %v2149 = vunpack.c.h.b16 %v1546
    %v2150 = vunpack.c.l.b16 %v1547
    %v2151 = vunpack.c.h.b16 %v1547
    %v2152 = vunpack.c.l.b16 %v1548
    %v2153 = vunpack.c.h.b16 %v1548
    %v2154 = vunpack.c.l.b16 %v1549
    %v2155 = vunpack.c.h.b16 %v1549
    %v2156 = vunpack.c.l.b16 %v1550
    %v2157 = vunpack.c.h.b16 %v1550
    %v2158 = vunpack.c.l.b16 %v1551
    %v2159 = vunpack.c.h.b16 %v1551
    %v2160 = vunpack.c.l.b16 %v1552
    %v2161 = vunpack.c.h.b16 %v1552
    %v2162 = vunpack.c.l.b16 %v1553
    %v2163 = vunpack.c.h.b16 %v1553
    %v2164 = vunpack.c.l.b16 %v1554
    %v2165 = vunpack.c.h.b16 %v1554
    %v2166 = vunpack.c.l.b16 %v1555
    %v2167 = vunpack.c.h.b16 %v1555
    %v2168 = vunpack.c.l.b16 %v1556
    %v2169 = vunpack.c.h.b16 %v1556
    %v2170 = vunpack.c.l.b16 %v1557
    %v2171 = vunpack.c.h.b16 %v1557
    %v2172 = vunpack.c.l.b16 %v1558
    %v2173 = vunpack.c.h.b16 %v1558
    %v2174 = vunpack.c.l.b16 %v1559
    %v2175 = vunpack.c.h.b16 %v1559
    %v2176 = vunpack.c.l.b16 %v1560
    %v2177 = vunpack.c.h.b16 %v1560
    %v2178 = vunpack.c.l.b16 %v1561
    %v2179 = vunpack.c.h.b16 %v1561
    %v2180 = vunpack.c.l.b16 %v1562
    %v2181 = vunpack.c.h.b16 %v1562
    %v2182 = vunpack.c.l.b16 %v1563
    %v2183 = vunpack.c.h.b16 %v1563
    %v2184 = vunpack.c.l.b16 %v1564
    %v2185 = vunpack.c.h.b16 %v1564
    %v2186 = vunpack.c.l.b16 %v1565
    %v2187 = vunpack.c.h.b16 %v1565
    %v2188 = vunpack.c.l.b16 %v1566
    %v2189 = vunpack.c.h.b16 %v1566
    %v2190 = vunpack.c.l.b16 %v1567
    %v2191 = vunpack.c.h.b16 %v1567
    %v2192 = vunpack.c.l.b16 %v1568
    %v2193 = vunpack.c.h.b16 %v1568
    %v2194 = vunpack.c.l.b16 %v1569
    %v2195 = vunpack.c.h.b16 %v1569
    %v2196 = vunpack.c.l.b16 %v1570
    %v2197 = vunpack.c.h.b16 %v1570
    %v2198 = vunpack.c.l.b16 %v1571
    %v2199 = vunpack.c.h.b16 %v1571
    %v2200 = vunpack.c.l.b16 %v1572
    %v2201 = vunpack.c.h.b16 %v1572
    %v2202 = vunpack.c.l.b16 %v1573
    %v2203 = vunpack.c.h.b16 %v1573
    %v2204 = vunpack.c.l.b16 %v1574
    %v2205 = vunpack.c.h.b16 %v1574
    %v2206 = vunpack.c.l.b16 %v1575
    %v2207 = vunpack.c.h.b16 %v1575
    %v2208 = vunpack.c.l.b16 %v1576
    %v2209 = vunpack.c.h.b16 %v1576
    %v2210 = vunpack.c.l.b16 %v1577
    %v2211 = vunpack.c.h.b16 %v1577
    %v2212 = vunpack.c.l.b16 %v1578
    %v2213 = vunpack.c.h.b16 %v1578
    %v2214 = vunpack.c.l.b16 %v1579
    %v2215 = vunpack.c.h.b16 %v1579
    %v2216 = vunpack.c.l.b16 %v1580
    %v2217 = vunpack.c.h.b16 %v1580
    %v2218 = vunpack.c.l.b16 %v1581
    %v2219 = vunpack.c.h.b16 %v1581
    %v2220 = vunpack.c.l.b16 %v1582
    %v2221 = vunpack.c.h.b16 %v1582
    %v2222 = vunpack.c.l.b16 %v1583
    %v2223 = vunpack.c.h.b16 %v1583
    %v2224 = vunpack.c.l.b16 %v1584
    %v2225 = vunpack.c.h.b16 %v1584
    %v2226 = vunpack.c.l.b16 %v1585
    %v2227 = vunpack.c.h.b16 %v1585
    %v2228 = vunpack.c.l.b16 %v1586
    %v2229 = vunpack.c.h.b16 %v1586
    %v2230 = vunpack.c.l.b16 %v1587
    %v2231 = vunpack.c.h.b16 %v1587
    %v2232 = vunpack.c.l.b16 %v1588
    %v2233 = vunpack.c.h.b16 %v1588
    %v2234 = vunpack.c.l.b16 %v1589
    %v2235 = vunpack.c.h.b16 %v1589
    %v2236 = vunpack.c.l.b16 %v1590
    %v2237 = vunpack.c.h.b16 %v1590
    %v2238 = vunpack.c.l.b16 %v1591
    %v2239 = vunpack.c.h.b16 %v1591
    %v2240 = vunpack.c.l.b16 %v1592
    %v2241 = vunpack.c.h.b16 %v1592
    %v2242 = vunpack.c.l.b16 %v1593
    %v2243 = vunpack.c.h.b16 %v1593
    %v2244 = vunpack.c.l.b16 %v1594
    %v2245 = vunpack.c.h.b16 %v1594
    %v2246 = vunpack.c.l.b16 %v1595
    %v2247 = vunpack.c.h.b16 %v1595
    %v2248 = vunpack.c.l.b16 %v1596
    %v2249 = vunpack.c.h.b16 %v1596
    %v2250 = vunpack.c.l.b16 %v1597
    %v2251 = vunpack.c.h.b16 %v1597
    %v2252 = vunpack.c.l.b16 %v1598
    %v2253 = vunpack.c.h.b16 %v1598
    %v2254 = vunpack.c.l.b16 %v1599
    %v2255 = vunpack.c.h.b16 %v1599
    %v2256 = vunpack.c.l.b16 %v1600
    %v2257 = vunpack.c.h.b16 %v1600
    %v2258 = vunpack.c.l.b16 %v1601
    %v2259 = vunpack.c.h.b16 %v1601
    %v2260 = vunpack.c.l.b16 %v1602
    %v2261 = vunpack.c.h.b16 %v1602
    %v2262 = vunpack.c.l.b16 %v1603
    %v2263 = vunpack.c.h.b16 %v1603
    %v2264 = vunpack.c.l.b16 %v1604
    %v2265 = vunpack.c.h.b16 %v1604
    %v2266 = vunpack.c.l.b16 %v1605
    %v2267 = vunpack.c.h.b16 %v1605
    %v2268 = vunpack.c.l.b16 %v1606
    %v2269 = vunpack.c.h.b16 %v1606
    %v2270 = vunpack.c.l.b16 %v1607
    %v2271 = vunpack.c.h.b16 %v1607
    %v2272 = vunpack.c.l.b16 %v1608
    %v2273 = vunpack.c.h.b16 %v1608
    %v2274 = vunpack.c.l.b16 %v1609
    %v2275 = vunpack.c.h.b16 %v1609
    %v2276 = vunpack.c.l.b16 %v1610
    %v2277 = vunpack.c.h.b16 %v1610
    %v2278 = vunpack.c.l.b16 %v1611
    %v2279 = vunpack.c.h.b16 %v1611
    %v2280 = vunpack.c.l.b16 %v1612
    %v2281 = vunpack.c.h.b16 %v1612
    %v2282 = vunpack.c.l.b16 %v1613
    %v2283 = vunpack.c.h.b16 %v1613
    %v2284 = vunpack.c.l.b16 %v1614
    %v2285 = vunpack.c.h.b16 %v1614
    %v2286 = vunpack.c.l.b16 %v1615
    %v2287 = vunpack.c.h.b16 %v1615
    %v2288 = vunpack.c.l.b16 %v1616
    %v2289 = vunpack.c.h.b16 %v1616
    %v2290 = vunpack.c.l.b16 %v1617
    %v2291 = vunpack.c.h.b16 %v1617
    %v2292 = vunpack.c.l.b16 %v1618
    %v2293 = vunpack.c.h.b16 %v1618
    %v2294 = vunpack.c.l.b16 %v1619
    %v2295 = vunpack.c.h.b16 %v1619
    %v2296 = vunpack.c.l.b16 %v1620
    %v2297 = vunpack.c.h.b16 %v1620
    %v2298 = vunpack.c.l.b16 %v1621
    %v2299 = vunpack.c.h.b16 %v1621
    %v2300 = vunpack.c.l.b16 %v1622
    %v2301 = vunpack.c.h.b16 %v1622
    %v2302 = vunpack.c.l.b16 %v1623
    %v2303 = vunpack.c.h.b16 %v1623
    %v2304 = vunpack.c.l.b16 %v1624
    %v2305 = vunpack.c.h.b16 %v1624
    %v2306 = vunpack.c.l.b16 %v1625
    %v2307 = vunpack.c.h.b16 %v1625
    %v2308 = vunpack.c.l.b16 %v1626
    %v2309 = vunpack.c.h.b16 %v1626
    %v2310 = vunpack.c.l.b16 %v1627
    %v2311 = vunpack.c.h.b16 %v1627
    %v2312 = vunpack.c.l.b16 %v1628
    %v2313 = vunpack.c.h.b16 %v1628
    %v2314 = vunpack.c.l.b16 %v1629
    %v2315 = vunpack.c.h.b16 %v1629
    %v2316 = vunpack.c.l.b16 %v1630
    %v2317 = vunpack.c.h.b16 %v1630
    %v2318 = vunpack.c.l.b16 %v1631
    %v2319 = vunpack.c.h.b16 %v1631
    %v2320 = vunpack.c.l.b16 %v1632
    %v2321 = vunpack.c.h.b16 %v1632
    %v2322 = vunpack.c.l.b16 %v1633
    %v2323 = vunpack.c.h.b16 %v1633
    %v2324 = vunpack.c.l.b16 %v1634
    %v2325 = vunpack.c.h.b16 %v1634
    %v2326 = vunpack.c.l.b16 %v1635
    %v2327 = vunpack.c.h.b16 %v1635
    %v2328 = vunpack.c.l.b16 %v1636
    %v2329 = vunpack.c.h.b16 %v1636
    %v2330 = vunpack.c.l.b16 %v1637
    %v2331 = vunpack.c.h.b16 %v1637
    %v2332 = vunpack.c.l.b16 %v1638
    %v2333 = vunpack.c.h.b16 %v1638
    %v2334 = vunpack.c.l.b16 %v1639
    %v2335 = vunpack.c.h.b16 %v1639
    %v2336 = vunpack.c.l.b16 %v1640
    %v2337 = vunpack.c.h.b16 %v1640
    %v2338 = vunpack.c.l.b16 %v1641
    %v2339 = vunpack.c.h.b16 %v1641
    %v2340 = vunpack.c.l.b16 %v1642
    %v2341 = vunpack.c.h.b16 %v1642
    %v2342 = vunpack.c.l.b16 %v1643
    %v2343 = vunpack.c.h.b16 %v1643
    %v2344 = vunpack.c.l.b16 %v1644
    %v2345 = vunpack.c.h.b16 %v1644
    %v2346 = vunpack.c.l.b16 %v1645
    %v2347 = vunpack.c.h.b16 %v1645
    %v2348 = vunpack.c.l.b16 %v1646
    %v2349 = vunpack.c.h.b16 %v1646
    %v2350 = vunpack.c.l.b16 %v1647
    %v2351 = vunpack.c.h.b16 %v1647
    %v2352 = vunpack.c.l.b16 %v1648
    %v2353 = vunpack.c.h.b16 %v1648
    %v2354 = vunpack.c.l.b16 %v1649
    %v2355 = vunpack.c.h.b16 %v1649
    %v2356 = vunpack.c.l.b16 %v1650
    %v2357 = vunpack.c.h.b16 %v1650
    %v2358 = vunpack.c.l.b16 %v1651
    %v2359 = vunpack.c.h.b16 %v1651
    %v2360 = vunpack.c.l.b16 %v1652
    %v2361 = vunpack.c.h.b16 %v1652
    %v2362 = vunpack.c.l.b16 %v1653
    %v2363 = vunpack.c.h.b16 %v1653
    %v2364 = vunpack.c.l.b16 %v1654
    %v2365 = vunpack.c.h.b16 %v1654
    %v2366 = vunpack.c.l.b16 %v1655
    %v2367 = vunpack.c.h.b16 %v1655
    %v2368 = vunpack.c.l.b16 %v1656
    %v2369 = vunpack.c.h.b16 %v1656
    %v2370 = vunpack.c.l.b16 %v1657
    %v2371 = vunpack.c.h.b16 %v1657
    %v2372 = vunpack.c.l.b16 %v1658
    %v2373 = vunpack.c.h.b16 %v1658
    %v2374 = vunpack.c.l.b16 %v1659
    %v2375 = vunpack.c.h.b16 %v1659
    %v2376 = vunpack.c.l.b16 %v1660
    %v2377 = vunpack.c.h.b16 %v1660
    %v2378 = vunpack.c.l.b16 %v1661
    %v2379 = vunpack.c.h.b16 %v1661
    %v2380 = vunpack.c.l.b16 %v1662
    %v2381 = vunpack.c.h.b16 %v1662
    %v2382 = vunpack.c.l.b16 %v1663
    %v2383 = vunpack.c.h.b16 %v1663
    %v2384 = vunpack.c.l.b16 %v1664
    %v2385 = vunpack.c.h.b16 %v1664
    %v2386 = vunpack.c.l.b16 %v1665
    %v2387 = vunpack.c.h.b16 %v1665
    %v2388 = vunpack.c.l.b16 %v1666
    %v2389 = vunpack.c.h.b16 %v1666
    %v2390 = vunpack.c.l.b16 %v1667
    %v2391 = vunpack.c.h.b16 %v1667
    %v2392 = vunpack.c.l.b16 %v1668
    %v2393 = vunpack.c.h.b16 %v1668
    %v2394 = vunpack.c.l.b16 %v1669
    %v2395 = vunpack.c.h.b16 %v1669
    %v2396 = vunpack.c.l.b16 %v1670
    %v2397 = vunpack.c.h.b16 %v1670
    %v2398 = vunpack.c.l.b16 %v1671
    %v2399 = vunpack.c.h.b16 %v1671
    %v2400 = vunpack.c.l.b16 %v1672
    %v2401 = vunpack.c.h.b16 %v1672
    %v2402 = vunpack.c.l.b16 %v1673
    %v2403 = vunpack.c.h.b16 %v1673
    %v2404 = vunpack.c.l.b16 %v1674
    %v2405 = vunpack.c.h.b16 %v1674
    %v2406 = vunpack.c.l.b16 %v1675
    %v2407 = vunpack.c.h.b16 %v1675
    %v2408 = vunpack.c.l.b16 %v1676
    %v2409 = vunpack.c.h.b16 %v1676
    %v2410 = vunpack.c.l.b16 %v1677
    %v2411 = vunpack.c.h.b16 %v1677
    %v2412 = vunpack.c.l.b16 %v1678
    %v2413 = vunpack.c.h.b16 %v1678
    %v2414 = vunpack.c.l.b16 %v1679
    %v2415 = vunpack.c.h.b16 %v1679
    %v2416 = vunpack.c.l.b16 %v1680
    %v2417 = vunpack.c.h.b16 %v1680
    %v2418 = vunpack.c.l.b16 %v1681
    %v2419 = vunpack.c.h.b16 %v1681
    %v2420 = vunpack.c.l.b16 %v1682
    %v2421 = vunpack.c.h.b16 %v1682
    %v2422 = vunpack.c.l.b16 %v1683
    %v2423 = vunpack.c.h.b16 %v1683
    %v2424 = vunpack.c.l.b16 %v1684
    %v2425 = vunpack.c.h.b16 %v1684
    %v2426 = vunpack.c.l.b16 %v1685
    %v2427 = vunpack.c.h.b16 %v1685
    %v2428 = vunpack.c.l.b16 %v1686
    %v2429 = vunpack.c.h.b16 %v1686
    %v2430 = vunpack.c.l.b16 %v1687
    %v2431 = vunpack.c.h.b16 %v1687
    %v2432 = vunpack.c.l.b16 %v1688
    %v2433 = vunpack.c.h.b16 %v1688
    %v2434 = vunpack.c.l.b16 %v1689
    %v2435 = vunpack.c.h.b16 %v1689
    %v2436 = vunpack.c.l.b16 %v1690
    %v2437 = vunpack.c.h.b16 %v1690
    %v2438 = vunpack.c.l.b16 %v1691
    %v2439 = vunpack.c.h.b16 %v1691
    %v2440 = vunpack.c.l.b16 %v1692
    %v2441 = vunpack.c.h.b16 %v1692
    %v2442 = vunpack.c.l.b16 %v1693
    %v2443 = vunpack.c.h.b16 %v1693
    %v2444 = vunpack.c.l.b16 %v1694
    %v2445 = vunpack.c.h.b16 %v1694
    %v2446 = vunpack.c.l.b16 %v1695
    %v2447 = vunpack.c.h.b16 %v1695
    %v2448 = vunpack.c.l.b16 %v1696
    %v2449 = vunpack.c.h.b16 %v1696
    %v2450 = vunpack.c.l.b16 %v1697
    %v2451 = vunpack.c.h.b16 %v1697
    %v2452 = vunpack.c.l.b16 %v1698
    %v2453 = vunpack.c.h.b16 %v1698
    %v2454 = vunpack.c.l.b16 %v1699
    %v2455 = vunpack.c.h.b16 %v1699
    %v2456 = vunpack.c.l.b16 %v1700
    %v2457 = vunpack.c.h.b16 %v1700
    %v2458 = vunpack.c.l.b16 %v1701
    %v2459 = vunpack.c.h.b16 %v1701
    %v2460 = vunpack.c.l.b16 %v1702
    %v2461 = vunpack.c.h.b16 %v1702
    %v2462 = vunpack.c.l.b16 %v1703
    %v2463 = vunpack.c.h.b16 %v1703
    %v2464 = vunpack.c.l.b16 %v1704
    %v2465 = vunpack.c.h.b16 %v1704
    %v2466 = vunpack.c.l.b16 %v1705
    %v2467 = vunpack.c.h.b16 %v1705
    %v2468 = vunpack.c.l.b16 %v1706
    %v2469 = vunpack.c.h.b16 %v1706
    %v2470 = vunpack.c.l.b16 %v1707
    %v2471 = vunpack.c.h.b16 %v1707
    %v2472 = vunpack.c.l.b16 %v1708
    %v2473 = vunpack.c.h.b16 %v1708
    %v2474 = vunpack.c.l.b16 %v1709
    %v2475 = vunpack.c.h.b16 %v1709
    %v2476 = vunpack.c.l.b16 %v1710
    %v2477 = vunpack.c.h.b16 %v1710
    %v2478 = vunpack.c.l.b16 %v1711
    %v2479 = vunpack.c.h.b16 %v1711
    %v2480 = vunpack.c.l.b16 %v1712
    %v2481 = vunpack.c.h.b16 %v1712
    %v2482 = vunpack.c.l.b16 %v1713
    %v2483 = vunpack.c.h.b16 %v1713
    %v2484 = vunpack.c.l.b16 %v1714
    %v2485 = vunpack.c.h.b16 %v1714
    %v2486 = vunpack.c.l.b16 %v1715
    %v2487 = vunpack.c.h.b16 %v1715
    %v2488 = vunpack.c.l.b16 %v1716
    %v2489 = vunpack.c.h.b16 %v1716
    %v2490 = vunpack.c.l.b16 %v1717
    %v2491 = vunpack.c.h.b16 %v1717
    %v2492 = vunpack.c.l.b16 %v1718
    %v2493 = vunpack.c.h.b16 %v1718
    %v2494 = vunpack.c.l.b16 %v1719
    %v2495 = vunpack.c.h.b16 %v1719
    %v2496 = vunpack.c.l.b16 %v1720
    %v2497 = vunpack.c.h.b16 %v1720
    %v2498 = vunpack.c.l.b16 %v1721
    %v2499 = vunpack.c.h.b16 %v1721
    %v2500 = vunpack.c.l.b16 %v1722
    %v2501 = vunpack.c.h.b16 %v1722
    %v2502 = vunpack.c.l.b16 %v1723
    %v2503 = vunpack.c.h.b16 %v1723
    %v2504 = vunpack.c.l.b16 %v1724
    %v2505 = vunpack.c.h.b16 %v1724
    %v2506 = vunpack.c.l.b16 %v1725
    %v2507 = vunpack.c.h.b16 %v1725
    %v2508 = vunpack.c.l.b16 %v1726
    %v2509 = vunpack.c.h.b16 %v1726
    %v2510 = vunpack.c.l.b16 %v1727
    %v2511 = vunpack.c.h.b16 %v1727
    %v2512 = vunpack.c.l.b16 %v1728
    %v2513 = vunpack.c.h.b16 %v1728
    %v2514 = vunpack.c.l.b16 %v1729
    %v2515 = vunpack.c.h.b16 %v1729
    %v2516 = vunpack.c.l.b16 %v1730
    %v2517 = vunpack.c.h.b16 %v1730
    %v2518 = vunpack.c.l.b16 %v1731
    %v2519 = vunpack.c.h.b16 %v1731
    %v2520 = vunpack.c.l.b16 %v1732
    %v2521 = vunpack.c.h.b16 %v1732
    %v2522 = vunpack.c.l.b16 %v1733
    %v2523 = vunpack.c.h.b16 %v1733
    %v2524 = vpack.c.b16 %v2016, %v2012
    %v2525 = vpack.c.b16 %v2017, %v2013
    %v2526 = vpack.c.b16 %v2018, %v2014
    %v2527 = vpack.c.b16 %v2019, %v2015
    %v2528 = vpack.c.b16 %v2024, %v2020
    %v2529 = vpack.c.b16 %v2025, %v2021
    %v2530 = vpack.c.b16 %v2026, %v2022
    %v2531 = vpack.c.b16 %v2027, %v2023
    %v2532 = vpack.c.b16 %v2032, %v2028
    %v2533 = vpack.c.b16 %v2033, %v2029
    %v2534 = vpack.c.b16 %v2034, %v2030
    %v2535 = vpack.c.b16 %v2035, %v2031
    %v2536 = vpack.c.b16 %v2040, %v2036
    %v2537 = vpack.c.b16 %v2041, %v2037
    %v2538 = vpack.c.b16 %v2042, %v2038
    %v2539 = vpack.c.b16 %v2043, %v2039
    %v2540 = vpack.c.b16 %v2048, %v2044
    %v2541 = vpack.c.b16 %v2049, %v2045
    %v2542 = vpack.c.b16 %v2050, %v2046
    %v2543 = vpack.c.b16 %v2051, %v2047
    %v2544 = vpack.c.b16 %v2056, %v2052
    %v2545 = vpack.c.b16 %v2057, %v2053
    %v2546 = vpack.c.b16 %v2058, %v2054
    %v2547 = vpack.c.b16 %v2059, %v2055
    %v2548 = vpack.c.b16 %v2064, %v2060
    %v2549 = vpack.c.b16 %v2065, %v2061
    %v2550 = vpack.c.b16 %v2066, %v2062
    %v2551 = vpack.c.b16 %v2067, %v2063
    %v2552 = vpack.c.b16 %v2072, %v2068
    %v2553 = vpack.c.b16 %v2073, %v2069
    %v2554 = vpack.c.b16 %v2074, %v2070
    %v2555 = vpack.c.b16 %v2075, %v2071
    %v2556 = vpack.c.b16 %v2080, %v2076
    %v2557 = vpack.c.b16 %v2081, %v2077
    %v2558 = vpack.c.b16 %v2082, %v2078
    %v2559 = vpack.c.b16 %v2083, %v2079
    %v2560 = vpack.c.b16 %v2088, %v2084
    %v2561 = vpack.c.b16 %v2089, %v2085
    %v2562 = vpack.c.b16 %v2090, %v2086
    %v2563 = vpack.c.b16 %v2091, %v2087
    %v2564 = vpack.c.b16 %v2096, %v2092
    %v2565 = vpack.c.b16 %v2097, %v2093
    %v2566 = vpack.c.b16 %v2098, %v2094
    %v2567 = vpack.c.b16 %v2099, %v2095
    %v2568 = vpack.c.b16 %v2104, %v2100
    %v2569 = vpack.c.b16 %v2105, %v2101
    %v2570 = vpack.c.b16 %v2106, %v2102
    %v2571 = vpack.c.b16 %v2107, %v2103
    %v2572 = vpack.c.b16 %v2112, %v2108
    %v2573 = vpack.c.b16 %v2113, %v2109
    %v2574 = vpack.c.b16 %v2114, %v2110
    %v2575 = vpack.c.b16 %v2115, %v2111
    %v2576 = vpack.c.b16 %v2120, %v2116
    %v2577 = vpack.c.b16 %v2121, %v2117
    %v2578 = vpack.c.b16 %v2122, %v2118
    %v2579 = vpack.c.b16 %v2123, %v2119
    %v2580 = vpack.c.b16 %v2128, %v2124
    %v2581 = vpack.c.b16 %v2129, %v2125
    %v2582 = vpack.c.b16 %v2130, %v2126
    %v2583 = vpack.c.b16 %v2131, %v2127
    %v2584 = vpack.c.b16 %v2136, %v2132
    %v2585 = vpack.c.b16 %v2137, %v2133
    %v2586 = vpack.c.b16 %v2138, %v2134
    %v2587 = vpack.c.b16 %v2139, %v2135
    %v2588 = vpack.c.b16 %v2144, %v2140
    %v2589 = vpack.c.b16 %v2145, %v2141
    %v2590 = vpack.c.b16 %v2146, %v2142
    %v2591 = vpack.c.b16 %v2147, %v2143
    %v2592 = vpack.c.b16 %v2152, %v2148
    %v2593 = vpack.c.b16 %v2153, %v2149
    %v2594 = vpack.c.b16 %v2154, %v2150
    %v2595 = vpack.c.b16 %v2155, %v2151
    %v2596 = vpack.c.b16 %v2160, %v2156
    %v2597 = vpack.c.b16 %v2161, %v2157
    %v2598 = vpack.c.b16 %v2162, %v2158
    %v2599 = vpack.c.b16 %v2163, %v2159
    %v2600 = vpack.c.b16 %v2168, %v2164
    %v2601 = vpack.c.b16 %v2169, %v2165
    %v2602 = vpack.c.b16 %v2170, %v2166
    %v2603 = vpack.c.b16 %v2171, %v2167
    %v2604 = vpack.c.b16 %v2176, %v2172
    %v2605 = vpack.c.b16 %v2177, %v2173
    %v2606 = vpack.c.b16 %v2178, %v2174
    %v2607 = vpack.c.b16 %v2179, %v2175
    %v2608 = vpack.c.b16 %v2184, %v2180
    %v2609 = vpack.c.b16 %v2185, %v2181
    %v2610 = vpack.c.b16 %v2186, %v2182
    %v2611 = vpack.c.b16 %v2187, %v2183
    %v2612 = vpack.c.b16 %v2192, %v2188
    %v2613 = vpack.c.b16 %v2193, %v2189
    %v2614 = vpack.c.b16 %v2194, %v2190
    %v2615 = vpack.c.b16 %v2195, %v2191
    %v2616 = vpack.c.b16 %v2200, %v2196
    %v2617 = vpack.c.b16 %v2201, %v2197
    %v2618 = vpack.c.b16 %v2202, %v2198
    %v2619 = vpack.c.b16 %v2203, %v2199
    %v2620 = vpack.c.b16 %v2208, %v2204
    %v2621 = vpack.c.b16 %v2209, %v2205
    %v2622 = vpack.c.b16 %v2210, %v2206
    %v2623 = vpack.c.b16 %v2211, %v2207
    %v2624 = vpack.c.b16 %v2216, %v2212
    %v2625 = vpack.c.b16 %v2217, %v2213
    %v2626 = vpack.c.b16 %v2218, %v2214
    %v2627 = vpack.c.b16 %v2219, %v2215
    %v2628 = vpack.c.b16 %v2224, %v2220
    %v2629 = vpack.c.b16 %v2225, %v2221
    %v2630 = vpack.c.b16 %v2226, %v2222
    %v2631 = vpack.c.b16 %v2227, %v2223
    %v2632 = vpack.c.b16 %v2232, %v2228
    %v2633 = vpack.c.b16 %v2233, %v2229
    %v2634 = vpack.c.b16 %v2234, %v2230
    %v2635 = vpack.c.b16 %v2235, %v2231
    %v2636 = vpack.c.b16 %v2240, %v2236
    %v2637 = vpack.c.b16 %v2241, %v2237
    %v2638 = vpack.c.b16 %v2242, %v2238
    %v2639 = vpack.c.b16 %v2243, %v2239
    %v2640 = vpack.c.b16 %v2248, %v2244
    %v2641 = vpack.c.b16 %v2249, %v2245
    %v2642 = vpack.c.b16 %v2250, %v2246
    %v2643 = vpack.c.b16 %v2251, %v2247
    %v2644 = vpack.c.b16 %v2256, %v2252
    %v2645 = vpack.c.b16 %v2257, %v2253
    %v2646 = vpack.c.b16 %v2258, %v2254
    %v2647 = vpack.c.b16 %v2259, %v2255
    %v2648 = vpack.c.b16 %v2264, %v2260
    %v2649 = vpack.c.b16 %v2265, %v2261
    %v2650 = vpack.c.b16 %v2266, %v2262
    %v2651 = vpack.c.b16 %v2267, %v2263
    %v2652 = vpack.c.b16 %v2272, %v2268
    %v2653 = vpack.c.b16 %v2273, %v2269
    %v2654 = vpack.c.b16 %v2274, %v2270
    %v2655 = vpack.c.b16 %v2275, %v2271
    %v2656 = vpack.c.b16 %v2280, %v2276
    %v2657 = vpack.c.b16 %v2281, %v2277
    %v2658 = vpack.c.b16 %v2282, %v2278
    %v2659 = vpack.c.b16 %v2283, %v2279
    %v2660 = vpack.c.b16 %v2288, %v2284
    %v2661 = vpack.c.b16 %v2289, %v2285
    %v2662 = vpack.c.b16 %v2290, %v2286
    %v2663 = vpack.c.b16 %v2291, %v2287
    %v2664 = vpack.c.b16 %v2296, %v2292
    %v2665 = vpack.c.b16 %v2297, %v2293
    %v2666 = vpack.c.b16 %v2298, %v2294
    %v2667 = vpack.c.b16 %v2299, %v2295
    %v2668 = vpack.c.b16 %v2304, %v2300
    %v2669 = vpack.c.b16 %v2305, %v2301
    %v2670 = vpack.c.b16 %v2306, %v2302
    %v2671 = vpack.c.b16 %v2307, %v2303
    %v2672 = vpack.c.b16 %v2312, %v2308
    %v2673 = vpack.c.b16 %v2313, %v2309
    %v2674 = vpack.c.b16 %v2314, %v2310
    %v2675 = vpack.c.b16 %v2315, %v2311
    %v2676 = vpack.c.b16 %v2320, %v2316
    %v2677 = vpack.c.b16 %v2321, %v2317
    %v2678 = vpack.c.b16 %v2322, %v2318
    %v2679 = vpack.c.b16 %v2323, %v2319
    %v2680 = vpack.c.b16 %v2328, %v2324
    %v2681 = vpack.c.b16 %v2329, %v2325
    %v2682 = vpack.c.b16 %v2330, %v2326
    %v2683 = vpack.c.b16 %v2331, %v2327
    %v2684 = vpack.c.b16 %v2336, %v2332
    %v2685 = vpack.c.b16 %v2337, %v2333
    %v2686 = vpack.c.b16 %v2338, %v2334
    %v2687 = vpack.c.b16 %v2339, %v2335
    %v2688 = vpack.c.b16 %v2344, %v2340
    %v2689 = vpack.c.b16 %v2345, %v2341
    %v2690 = vpack.c.b16 %v2346, %v2342
    %v2691 = vpack.c.b16 %v2347, %v2343
    %v2692 = vpack.c.b16 %v2352, %v2348
    %v2693 = vpack.c.b16 %v2353, %v2349
    %v2694 = vpack.c.b16 %v2354, %v2350
    %v2695 = vpack.c.b16 %v2355, %v2351
    %v2696 = vpack.c.b16 %v2360, %v2356
    %v2697 = vpack.c.b16 %v2361, %v2357
    %v2698 = vpack.c.b16 %v2362, %v2358
    %v2699 = vpack.c.b16 %v2363, %v2359
    %v2700 = vpack.c.b16 %v2368, %v2364
    %v2701 = vpack.c.b16 %v2369, %v2365
    %v2702 = vpack.c.b16 %v2370, %v2366
    %v2703 = vpack.c.b16 %v2371, %v2367
    %v2704 = vpack.c.b16 %v2376, %v2372
    %v2705 = vpack.c.b16 %v2377, %v2373
    %v2706 = vpack.c.b16 %v2378, %v2374
    %v2707 = vpack.c.b16 %v2379, %v2375
    %v2708 = vpack.c.b16 %v2384, %v2380
    %v2709 = vpack.c.b16 %v2385, %v2381
    %v2710 = vpack.c.b16 %v2386, %v2382
    %v2711 = vpack.c.b16 %v2387, %v2383
    %v2712 = vpack.c.b16 %v2392, %v2388
    %v2713 = vpack.c.b16 %v2393, %v2389
    %v2714 = vpack.c.b16 %v2394, %v2390
    %v2715 = vpack.c.b16 %v2395, %v2391
    %v2716 = vpack.c.b16 %v2400, %v2396
    %v2717 = vpack.c.b16 %v2401, %v2397
    %v2718 = vpack.c.b16 %v2402, %v2398
    %v2719 = vpack.c.b16 %v2403, %v2399
    %v2720 = vpack.c.b16 %v2408, %v2404
    %v2721 = vpack.c.b16 %v2409, %v2405
    %v2722 = vpack.c.b16 %v2410, %v2406
    %v2723 = vpack.c.b16 %v2411, %v2407
    %v2724 = vpack.c.b16 %v2416, %v2412
    %v2725 = vpack.c.b16 %v2417, %v2413
    %v2726 = vpack.c.b16 %v2418, %v2414
    %v2727 = vpack.c.b16 %v2419, %v2415
    %v2728 = vpack.c.b16 %v2424, %v2420
    %v2729 = vpack.c.b16 %v2425, %v2421
    %v2730 = vpack.c.b16 %v2426, %v2422
    %v2731 = vpack.c.b16 %v2427, %v2423
    %v2732 = vpack.c.b16 %v2432, %v2428
    %v2733 = vpack.c.b16 %v2433, %v2429
    %v2734 = vpack.c.b16 %v2434, %v2430
    %v2735 = vpack.c.b16 %v2435, %v2431
    %v2736 = vpack.c.b16 %v2440, %v2436
    %v2737 = vpack.c.b16 %v2441, %v2437
    %v2738 = vpack.c.b16 %v2442, %v2438
    %v2739 = vpack.c.b16 %v2443, %v2439
    %v2740 = vpack.c.b16 %v2448, %v2444
    %v2741 = vpack.c.b16 %v2449, %v2445
    %v2742 = vpack.c.b16 %v2450, %v2446
    %v2743 = vpack.c.b16 %v2451, %v2447
    %v2744 = vpack.c.b16 %v2456, %v2452
    %v2745 = vpack.c.b16 %v2457, %v2453
    %v2746 = vpack.c.b16 %v2458, %v2454
    %v2747 = vpack.c.b16 %v2459, %v2455
    %v2748 = vpack.c.b16 %v2464, %v2460
    %v2749 = vpack.c.b16 %v2465, %v2461
    %v2750 = vpack.c.b16 %v2466, %v2462
    %v2751 = vpack.c.b16 %v2467, %v2463
    %v2752 = vpack.c.b16 %v2472, %v2468
    %v2753 = vpack.c.b16 %v2473, %v2469
    %v2754 = vpack.c.b16 %v2474, %v2470
    %v2755 = vpack.c.b16 %v2475, %v2471
    %v2756 = vpack.c.b16 %v2480, %v2476
    %v2757 = vpack.c.b16 %v2481, %v2477
    %v2758 = vpack.c.b16 %v2482, %v2478
    %v2759 = vpack.c.b16 %v2483, %v2479
    %v2760 = vpack.c.b16 %v2488, %v2484
    %v2761 = vpack.c.b16 %v2489, %v2485
    %v2762 = vpack.c.b16 %v2490, %v2486
    %v2763 = vpack.c.b16 %v2491, %v2487
    %v2764 = vpack.c.b16 %v2496, %v2492
    %v2765 = vpack.c.b16 %v2497, %v2493
    %v2766 = vpack.c.b16 %v2498, %v2494
    %v2767 = vpack.c.b16 %v2499, %v2495
    %v2768 = vpack.c.b16 %v2504, %v2500
    %v2769 = vpack.c.b16 %v2505, %v2501
    %v2770 = vpack.c.b16 %v2506, %v2502
    %v2771 = vpack.c.b16 %v2507, %v2503
    %v2772 = vpack.c.b16 %v2512, %v2508
    %v2773 = vpack.c.b16 %v2513, %v2509
    %v2774 = vpack.c.b16 %v2514, %v2510
    %v2775 = vpack.c.b16 %v2515, %v2511
    %v2776 = vpack.c.b16 %v2520, %v2516
    %v2777 = vpack.c.b16 %v2521, %v2517
    %v2778 = vpack.c.b16 %v2522, %v2518
    %v2779 = vpack.c.b16 %v2523, %v2519
    %3036 = vmatprep.subr.bf16.mxu0 %v2525
    %3037 = vmatpush1.bf16.msra.mxu0 %v2524
    %3038 = vmatprep.subr.bf16.mxu0 %v2529
    %3039 = vmatpush1.bf16.msra.mxu0 %v2528
    %3040 = vmatprep.subr.bf16.mxu0 %v2533
    %3041 = vmatpush1.bf16.msra.mxu0 %v2532
    %3042 = vmatprep.subr.bf16.mxu0 %v2537
    %3043 = vmatpush1.bf16.msra.mxu0 %v2536
    %3044 = vmatprep.subr.bf16.mxu0 %v2541
    %3045 = vmatpush1.bf16.msra.mxu0 %v2540
    %3046 = vmatprep.subr.bf16.mxu0 %v2545
    %3047 = vmatpush1.bf16.msra.mxu0 %v2544
    %3048 = vmatprep.subr.bf16.mxu0 %v2549
    %3049 = vmatpush1.bf16.msra.mxu0 %v2548
    %3050 = vmatprep.subr.bf16.mxu0 %v2553
    %3051 = vmatpush1.bf16.msra.mxu0 %v2552
    %3052 = vmatprep.subr.bf16.mxu0 %v2557
    %3053 = vmatpush1.bf16.msra.mxu0 %v2556
    %3054 = vmatprep.subr.bf16.mxu0 %v2561
    %3055 = vmatpush1.bf16.msra.mxu0 %v2560
    %3056 = vmatprep.subr.bf16.mxu0 %v2565
    %3057 = vmatpush1.bf16.msra.mxu0 %v2564
    %3058 = vmatprep.subr.bf16.mxu0 %v2569
    %3059 = vmatpush1.bf16.msra.mxu0 %v2568
    %3060 = vmatprep.subr.bf16.mxu0 %v2573
    %3061 = vmatpush1.bf16.msra.mxu0 %v2572
    %3062 = vmatprep.subr.bf16.mxu0 %v2577
    %3063 = vmatpush1.bf16.msra.mxu0 %v2576
    %3064 = vmatprep.subr.bf16.mxu0 %v2581
    %3065 = vmatpush1.bf16.msra.mxu0 %v2580
    %3066 = vmatprep.subr.bf16.mxu0 %v2585
    %3067 = vmatpush1.bf16.msra.mxu0 %v2584
    %3068 = vmatprep.mubr.bf16.mxu0 %v1415
    %3069 = vmatmul.mubr.bf16.gmra.mrb[0].mxu0 %v1414
    %v3070 = vpop.f32.mrb[0].mxu0
    %v3071 = vadd.f32 %v1739, %v3070
    %v3072 = vpop.f32.mrb[0].mxu0
    %v3073 = vadd.f32 %v1743, %v3072
    %v3074 = vpop.f32.mrb[0].mxu0
    %v3075 = vadd.f32 %v1739, %v3074
    %v3076 = vpop.f32.mrb[0].mxu0
    %v3077 = vadd.f32 %v1743, %v3076
    %3078 = vmatprep.mubr.bf16.mxu0 %v1423
    %3079 = vmatmul.mubr.bf16.gmra.mrb[0].mxu0 %v1422
    %v3080 = vpop.f32.mrb[0].mxu0
    %v3081 = vadd.f32 %v1739, %v3080
    %v3082 = vpop.f32.mrb[0].mxu0
    %v3083 = vadd.f32 %v1743, %v3082
    %v3084 = vpop.f32.mrb[0].mxu0
    %v3085 = vadd.f32 %v1739, %v3084
    %v3086 = vpop.f32.mrb[0].mxu0
    %v3087 = vadd.f32 %v1743, %v3086
    %3088 = vmatprep.mubr.bf16.mxu0 %v1431
    %3089 = vmatmul.mubr.bf16.gmra.mrb[0].mxu0 %v1430
    %v3090 = vpop.f32.mrb[0].mxu0
    %v3091 = vadd.f32 %v1739, %v3090
    %v3092 = vpop.f32.mrb[0].mxu0
    %v3093 = vadd.f32 %v1743, %v3092
    %v3094 = vpop.f32.mrb[0].mxu0
    %v3095 = vadd.f32 %v1739, %v3094
    %v3096 = vpop.f32.mrb[0].mxu0
    %v3097 = vadd.f32 %v1743, %v3096
    %3098 = vmatprep.mubr.bf16.mxu0 %v1439
    %3099 = vmatmul.mubr.bf16.gmra.mrb[0].mxu0 %v1438
    %v3100 = vpop.f32.mrb[0].mxu0
    %v3101 = vadd.f32 %v1739, %v3100
    %v3102 = vpop.f32.mrb[0].mxu0
    %v3103 = vadd.f32 %v1743, %v3102
    %v3104 = vpop.f32.mrb[0].mxu0
    %v3105 = vadd.f32 %v1739, %v3104
    %v3106 = vpop.f32.mrb[0].mxu0
    %v3107 = vadd.f32 %v1743, %v3106
    %3108 = vmatprep.mubr.bf16.mxu0 %v1447
    %3109 = vmatmul.mubr.bf16.gmra.mrb[0].mxu0 %v1446
    %v3110 = vpop.f32.mrb[0].mxu0
    %v3111 = vadd.f32 %v1739, %v3110
    %v3112 = vpop.f32.mrb[0].mxu0
    %v3113 = vadd.f32 %v1743, %v3112
    %v3114 = vpop.f32.mrb[0].mxu0
    %v3115 = vadd.f32 %v1739, %v3114
    %v3116 = vpop.f32.mrb[0].mxu0
    %v3117 = vadd.f32 %v1743, %v3116
    %3118 = vmatprep.mubr.bf16.mxu0 %v1455
    %3119 = vmatmul.mubr.bf16.gmra.mrb[0].mxu0 %v1454
    %v3120 = vpop.f32.mrb[0].mxu0
    %v3121 = vadd.f32 %v1739, %v3120
    %v3122 = vpop.f32.mrb[0].mxu0
    %v3123 = vadd.f32 %v1743, %v3122
    %v3124 = vpop.f32.mrb[0].mxu0
    %v3125 = vadd.f32 %v1739, %v3124
    %v3126 = vpop.f32.mrb[0].mxu0
    %v3127 = vadd.f32 %v1743, %v3126
    %3128 = vmatprep.mubr.bf16.mxu0 %v1463
    %3129 = vmatmul.mubr.bf16.gmra.mrb[0].mxu0 %v1462
    %v3130 = vpop.f32.mrb[0].mxu0
    %v3131 = vadd.f32 %v1739, %v3130
    %v3132 = vpop.f32.mrb[0].mxu0
    %v3133 = vadd.f32 %v1743, %v3132
    %v3134 = vpop.f32.mrb[0].mxu0
    %v3135 = vadd.f32 %v1739, %v3134
    %v3136 = vpop.f32.mrb[0].mxu0
    %v3137 = vadd.f32 %v1743, %v3136
    %3138 = vmatprep.mubr.bf16.mxu0 %v1471
    %3139 = vmatmul.mubr.bf16.gmra.mrb[0].mxu0 %v1470
    %v3140 = vpop.f32.mrb[0].mxu0
    %v3141 = vadd.f32 %v1739, %v3140
    %v3142 = vpop.f32.mrb[0].mxu0
    %v3143 = vadd.f32 %v1743, %v3142
    %v3144 = vpop.f32.mrb[0].mxu0
    %v3145 = vadd.f32 %v1739, %v3144
    %v3146 = vpop.f32.mrb[0].mxu0
    %v3147 = vadd.f32 %v1743, %v3146
    %3148 = vdwg.mxu0
    %3149 = vmatprep.subr.bf16.mxu0 %v2589
    %3150 = vmatpush1.bf16.msra.mxu0 %v2588
    %3151 = vmatprep.subr.bf16.mxu0 %v2593
    %3152 = vmatpush1.bf16.msra.mxu0 %v2592
    %3153 = vmatprep.subr.bf16.mxu0 %v2597
    %3154 = vmatpush1.bf16.msra.mxu0 %v2596
    %3155 = vmatprep.subr.bf16.mxu0 %v2601
    %3156 = vmatpush1.bf16.msra.mxu0 %v2600
    %3157 = vmatprep.subr.bf16.mxu0 %v2605
    %3158 = vmatpush1.bf16.msra.mxu0 %v2604
    %3159 = vmatprep.subr.bf16.mxu0 %v2609
    %3160 = vmatpush1.bf16.msra.mxu0 %v2608
    %3161 = vmatprep.subr.bf16.mxu0 %v2613
    %3162 = vmatpush1.bf16.msra.mxu0 %v2612
    %3163 = vmatprep.subr.bf16.mxu0 %v2617
    %3164 = vmatpush1.bf16.msra.mxu0 %v2616
    %3165 = vmatprep.subr.bf16.mxu0 %v2621
    %3166 = vmatpush1.bf16.msra.mxu0 %v2620
    %3167 = vmatprep.subr.bf16.mxu0 %v2625
    %3168 = vmatpush1.bf16.msra.mxu0 %v2624
    %3169 = vmatprep.subr.bf16.mxu0 %v2629
    %3170 = vmatpush1.bf16.msra.mxu0 %v2628
    %3171 = vmatprep.subr.bf16.mxu0 %v2633
    %3172 = vmatpush1.bf16.msra.mxu0 %v2632
    %3173 = vmatprep.subr.bf16.mxu0 %v2637
    %3174 = vmatpush1.bf16.msra.mxu0 %v2636
    %3175 = vmatprep.subr.bf16.mxu0 %v2641
    %3176 = vmatpush1.bf16.msra.mxu0 %v2640
    %3177 = vmatprep.subr.bf16.mxu0 %v2645
    %3178 = vmatpush1.bf16.msra.mxu0 %v2644
    %3179 = vmatprep.subr.bf16.mxu0 %v2649
    %3180 = vmatpush1.bf16.msra.mxu0 %v2648
    %3181 = vmatprep.mubr.bf16.mxu0 %v1417
    %3182 = vmatmul.mubr.bf16.gmra.mrb[0].mxu0 %v1416
    %v3183 = vpop.f32.mrb[0].mxu0
    %v3184 = vadd.f32 %v3071, %v3183
    %v3185 = vpop.f32.mrb[0].mxu0
    %v3186 = vadd.f32 %v3073, %v3185
    %v3187 = vpop.f32.mrb[0].mxu0
    %v3188 = vadd.f32 %v3075, %v3187
    %v3189 = vpop.f32.mrb[0].mxu0
    %v3190 = vadd.f32 %v3077, %v3189
    %3191 = vmatprep.mubr.bf16.mxu0 %v1425
    %3192 = vmatmul.mubr.bf16.gmra.mrb[0].mxu0 %v1424
    %v3193 = vpop.f32.mrb[0].mxu0
    %v3194 = vadd.f32 %v3081, %v3193
    %v3195 = vpop.f32.mrb[0].mxu0
    %v3196 = vadd.f32 %v3083, %v3195
    %v3197 = vpop.f32.mrb[0].mxu0
    %v3198 = vadd.f32 %v3085, %v3197
    %v3199 = vpop.f32.mrb[0].mxu0
    %v3200 = vadd.f32 %v3087, %v3199
    %3201 = vmatprep.mubr.bf16.mxu0 %v1433
    %3202 = vmatmul.mubr.bf16.gmra.mrb[0].mxu0 %v1432
    %v3203 = vpop.f32.mrb[0].mxu0
    %v3204 = vadd.f32 %v3091, %v3203
    %v3205 = vpop.f32.mrb[0].mxu0
    %v3206 = vadd.f32 %v3093, %v3205
    %v3207 = vpop.f32.mrb[0].mxu0
    %v3208 = vadd.f32 %v3095, %v3207
    %v3209 = vpop.f32.mrb[0].mxu0
    %v3210 = vadd.f32 %v3097, %v3209
    %3211 = vmatprep.mubr.bf16.mxu0 %v1441
    %3212 = vmatmul.mubr.bf16.gmra.mrb[0].mxu0 %v1440
    %v3213 = vpop.f32.mrb[0].mxu0
    %v3214 = vadd.f32 %v3101, %v3213
    %v3215 = vpop.f32.mrb[0].mxu0
    %v3216 = vadd.f32 %v3103, %v3215
    %v3217 = vpop.f32.mrb[0].mxu0
    %v3218 = vadd.f32 %v3105, %v3217
    %v3219 = vpop.f32.mrb[0].mxu0
    %v3220 = vadd.f32 %v3107, %v3219
    %3221 = vmatprep.mubr.bf16.mxu0 %v1449
    %3222 = vmatmul.mubr.bf16.gmra.mrb[0].mxu0 %v1448
    %v3223 = vpop.f32.mrb[0].mxu0
    %v3224 = vadd.f32 %v3111, %v3223
    %v3225 = vpop.f32.mrb[0].mxu0
    %v3226 = vadd.f32 %v3113, %v3225
    %v3227 = vpop.f32.mrb[0].mxu0
    %v3228 = vadd.f32 %v3115, %v3227
    %v3229 = vpop.f32.mrb[0].mxu0
    %v3230 = vadd.f32 %v3117, %v3229
    %3231 = vmatprep.mubr.bf16.mxu0 %v1457
    %3232 = vmatmul.mubr.bf16.gmra.mrb[0].mxu0 %v1456
    %v3233 = vpop.f32.mrb[0].mxu0
    %v3234 = vadd.f32 %v3121, %v3233
    %v3235 = vpop.f32.mrb[0].mxu0
    %v3236 = vadd.f32 %v3123, %v3235
    %v3237 = vpop.f32.mrb[0].mxu0
    %v3238 = vadd.f32 %v3125, %v3237
    %v3239 = vpop.f32.mrb[0].mxu0
    %v3240 = vadd.f32 %v3127, %v3239
    %3241 = vmatprep.mubr.bf16.mxu0 %v1465
    %3242 = vmatmul.mubr.bf16.gmra.mrb[0].mxu0 %v1464
    %v3243 = vpop.f32.mrb[0].mxu0
    %v3244 = vadd.f32 %v3131, %v3243
    %v3245 = vpop.f32.mrb[0].mxu0
    %v3246 = vadd.f32 %v3133, %v3245
    %v3247 = vpop.f32.mrb[0].mxu0
    %v3248 = vadd.f32 %v3135, %v3247
    %v3249 = vpop.f32.mrb[0].mxu0
    %v3250 = vadd.f32 %v3137, %v3249
    %3251 = vmatprep.mubr.bf16.mxu0 %v1473
    %3252 = vmatmul.mubr.bf16.gmra.mrb[0].mxu0 %v1472
    %v3253 = vpop.f32.mrb[0].mxu0
    %v3254 = vadd.f32 %v3141, %v3253
    %v3255 = vpop.f32.mrb[0].mxu0
    %v3256 = vadd.f32 %v3143, %v3255
    %v3257 = vpop.f32.mrb[0].mxu0
    %v3258 = vadd.f32 %v3145, %v3257
    %v3259 = vpop.f32.mrb[0].mxu0
    %v3260 = vadd.f32 %v3147, %v3259
    %3261 = vdwg.mxu0
    %3262 = vmatprep.subr.bf16.mxu0 %v2653
    %3263 = vmatpush1.bf16.msra.mxu0 %v2652
    %3264 = vmatprep.subr.bf16.mxu0 %v2657
    %3265 = vmatpush1.bf16.msra.mxu0 %v2656
    %3266 = vmatprep.subr.bf16.mxu0 %v2661
    %3267 = vmatpush1.bf16.msra.mxu0 %v2660
    %3268 = vmatprep.subr.bf16.mxu0 %v2665
    %3269 = vmatpush1.bf16.msra.mxu0 %v2664
    %3270 = vmatprep.subr.bf16.mxu0 %v2669
    %3271 = vmatpush1.bf16.msra.mxu0 %v2668
    %3272 = vmatprep.subr.bf16.mxu0 %v2673
    %3273 = vmatpush1.bf16.msra.mxu0 %v2672
    %3274 = vmatprep.subr.bf16.mxu0 %v2677
    %3275 = vmatpush1.bf16.msra.mxu0 %v2676
    %3276 = vmatprep.subr.bf16.mxu0 %v2681
    %3277 = vmatpush1.bf16.msra.mxu0 %v2680
    %3278 = vmatprep.subr.bf16.mxu0 %v2685
    %3279 = vmatpush1.bf16.msra.mxu0 %v2684
    %3280 = vmatprep.subr.bf16.mxu0 %v2689
    %3281 = vmatpush1.bf16.msra.mxu0 %v2688
    %3282 = vmatprep.subr.bf16.mxu0 %v2693
    %3283 = vmatpush1.bf16.msra.mxu0 %v2692
    %3284 = vmatprep.subr.bf16.mxu0 %v2697
    %3285 = vmatpush1.bf16.msra.mxu0 %v2696
    %3286 = vmatprep.subr.bf16.mxu0 %v2701
    %3287 = vmatpush1.bf16.msra.mxu0 %v2700
    %3288 = vmatprep.subr.bf16.mxu0 %v2705
    %3289 = vmatpush1.bf16.msra.mxu0 %v2704
    %3290 = vmatprep.subr.bf16.mxu0 %v2709
    %3291 = vmatpush1.bf16.msra.mxu0 %v2708
    %3292 = vmatprep.subr.bf16.mxu0 %v2713
    %3293 = vmatpush1.bf16.msra.mxu0 %v2712
    %3294 = vmatprep.mubr.bf16.mxu0 %v1419
    %3295 = vmatmul.mubr.bf16.gmra.mrb[0].mxu0 %v1418
    %v3296 = vpop.f32.mrb[0].mxu0
    %v3297 = vadd.f32 %v3184, %v3296
    %v3298 = vpop.f32.mrb[0].mxu0
    %v3299 = vadd.f32 %v3186, %v3298
    %v3300 = vpop.f32.mrb[0].mxu0
    %v3301 = vadd.f32 %v3188, %v3300
    %v3302 = vpop.f32.mrb[0].mxu0
    %v3303 = vadd.f32 %v3190, %v3302
    %3304 = vmatprep.mubr.bf16.mxu0 %v1427
    %3305 = vmatmul.mubr.bf16.gmra.mrb[0].mxu0 %v1426
    %v3306 = vpop.f32.mrb[0].mxu0
    %v3307 = vadd.f32 %v3194, %v3306
    %v3308 = vpop.f32.mrb[0].mxu0
    %v3309 = vadd.f32 %v3196, %v3308
    %v3310 = vpop.f32.mrb[0].mxu0
    %v3311 = vadd.f32 %v3198, %v3310
    %v3312 = vpop.f32.mrb[0].mxu0
    %v3313 = vadd.f32 %v3200, %v3312
    %3314 = vmatprep.mubr.bf16.mxu0 %v1435
    %3315 = vmatmul.mubr.bf16.gmra.mrb[0].mxu0 %v1434
    %v3316 = vpop.f32.mrb[0].mxu0
    %v3317 = vadd.f32 %v3204, %v3316
    %v3318 = vpop.f32.mrb[0].mxu0
    %v3319 = vadd.f32 %v3206, %v3318
    %v3320 = vpop.f32.mrb[0].mxu0
    %v3321 = vadd.f32 %v3208, %v3320
    %v3322 = vpop.f32.mrb[0].mxu0
    %v3323 = vadd.f32 %v3210, %v3322
    %3324 = vmatprep.mubr.bf16.mxu0 %v1443
    %3325 = vmatmul.mubr.bf16.gmra.mrb[0].mxu0 %v1442
    %v3326 = vpop.f32.mrb[0].mxu0
    %v3327 = vadd.f32 %v3214, %v3326
    %v3328 = vpop.f32.mrb[0].mxu0
    %v3329 = vadd.f32 %v3216, %v3328
    %v3330 = vpop.f32.mrb[0].mxu0
    %v3331 = vadd.f32 %v3218, %v3330
    %v3332 = vpop.f32.mrb[0].mxu0
    %v3333 = vadd.f32 %v3220, %v3332
    %3334 = vmatprep.mubr.bf16.mxu0 %v1451
    %3335 = vmatmul.mubr.bf16.gmra.mrb[0].mxu0 %v1450
    %v3336 = vpop.f32.mrb[0].mxu0
    %v3337 = vadd.f32 %v3224, %v3336
    %v3338 = vpop.f32.mrb[0].mxu0
    %v3339 = vadd.f32 %v3226, %v3338
    %v3340 = vpop.f32.mrb[0].mxu0
    %v3341 = vadd.f32 %v3228, %v3340
    %v3342 = vpop.f32.mrb[0].mxu0
    %v3343 = vadd.f32 %v3230, %v3342
    %3344 = vmatprep.mubr.bf16.mxu0 %v1459
    %3345 = vmatmul.mubr.bf16.gmra.mrb[0].mxu0 %v1458
    %v3346 = vpop.f32.mrb[0].mxu0
    %v3347 = vadd.f32 %v3234, %v3346
    %v3348 = vpop.f32.mrb[0].mxu0
    %v3349 = vadd.f32 %v3236, %v3348
    %v3350 = vpop.f32.mrb[0].mxu0
    %v3351 = vadd.f32 %v3238, %v3350
    %v3352 = vpop.f32.mrb[0].mxu0
    %v3353 = vadd.f32 %v3240, %v3352
    %3354 = vmatprep.mubr.bf16.mxu0 %v1467
    %3355 = vmatmul.mubr.bf16.gmra.mrb[0].mxu0 %v1466
    %v3356 = vpop.f32.mrb[0].mxu0
    %v3357 = vadd.f32 %v3244, %v3356
    %v3358 = vpop.f32.mrb[0].mxu0
    %v3359 = vadd.f32 %v3246, %v3358
    %v3360 = vpop.f32.mrb[0].mxu0
    %v3361 = vadd.f32 %v3248, %v3360
    %v3362 = vpop.f32.mrb[0].mxu0
    %v3363 = vadd.f32 %v3250, %v3362
    %3364 = vmatprep.mubr.bf16.mxu0 %v1475
    %3365 = vmatmul.mubr.bf16.gmra.mrb[0].mxu0 %v1474
    %v3366 = vpop.f32.mrb[0].mxu0
    %v3367 = vadd.f32 %v3254, %v3366
    %v3368 = vpop.f32.mrb[0].mxu0
    %v3369 = vadd.f32 %v3256, %v3368
    %v3370 = vpop.f32.mrb[0].mxu0
    %v3371 = vadd.f32 %v3258, %v3370
    %v3372 = vpop.f32.mrb[0].mxu0
    %v3373 = vadd.f32 %v3260, %v3372
    %3374 = vdwg.mxu0
    %3375 = vmatprep.subr.bf16.mxu0 %v2717
    %3376 = vmatpush1.bf16.msra.mxu0 %v2716
    %3377 = vmatprep.subr.bf16.mxu0 %v2721
    %3378 = vmatpush1.bf16.msra.mxu0 %v2720
    %3379 = vmatprep.subr.bf16.mxu0 %v2725
    %3380 = vmatpush1.bf16.msra.mxu0 %v2724
    %3381 = vmatprep.subr.bf16.mxu0 %v2729
    %3382 = vmatpush1.bf16.msra.mxu0 %v2728
    %3383 = vmatprep.subr.bf16.mxu0 %v2733
    %3384 = vmatpush1.bf16.msra.mxu0 %v2732
    %3385 = vmatprep.subr.bf16.mxu0 %v2737
    %3386 = vmatpush1.bf16.msra.mxu0 %v2736
    %3387 = vmatprep.subr.bf16.mxu0 %v2741
    %3388 = vmatpush1.bf16.msra.mxu0 %v2740
    %3389 = vmatprep.subr.bf16.mxu0 %v2745
    %3390 = vmatpush1.bf16.msra.mxu0 %v2744
    %3391 = vmatprep.subr.bf16.mxu0 %v2749
    %3392 = vmatpush1.bf16.msra.mxu0 %v2748
    %3393 = vmatprep.subr.bf16.mxu0 %v2753
    %3394 = vmatpush1.bf16.msra.mxu0 %v2752
    %3395 = vmatprep.subr.bf16.mxu0 %v2757
    %3396 = vmatpush1.bf16.msra.mxu0 %v2756
    %3397 = vmatprep.subr.bf16.mxu0 %v2761
    %3398 = vmatpush1.bf16.msra.mxu0 %v2760
    %3399 = vmatprep.subr.bf16.mxu0 %v2765
    %3400 = vmatpush1.bf16.msra.mxu0 %v2764
    %3401 = vmatprep.subr.bf16.mxu0 %v2769
    %3402 = vmatpush1.bf16.msra.mxu0 %v2768
    %3403 = vmatprep.subr.bf16.mxu0 %v2773
    %3404 = vmatpush1.bf16.msra.mxu0 %v2772
    %3405 = vmatprep.subr.bf16.mxu0 %v2777
    %3406 = vmatpush1.bf16.msra.mxu0 %v2776
    %3407 = vmatprep.mubr.bf16.mxu0 %v1421
    %3408 = vmatmul.mubr.bf16.gmra.mrb[0].mxu0 %v1420
    %v3409 = vpop.f32.mrb[0].mxu0
    %v3410 = vadd.f32 %v3297, %v3409
    %v3411 = vpop.f32.mrb[0].mxu0
    %v3412 = vadd.f32 %v3299, %v3411
    %v3413 = vpop.f32.mrb[0].mxu0
    %v3414 = vadd.f32 %v3301, %v3413
    %v3415 = vpop.f32.mrb[0].mxu0
    %v3416 = vadd.f32 %v3303, %v3415
    %3417 = vmatprep.mubr.bf16.mxu0 %v1429
    %3418 = vmatmul.mubr.bf16.gmra.mrb[0].mxu0 %v1428
    %v3419 = vpop.f32.mrb[0].mxu0
    %v3420 = vadd.f32 %v3307, %v3419
    %v3421 = vpop.f32.mrb[0].mxu0
    %v3422 = vadd.f32 %v3309, %v3421
    %v3423 = vpop.f32.mrb[0].mxu0
    %v3424 = vadd.f32 %v3311, %v3423
    %v3425 = vpop.f32.mrb[0].mxu0
    %v3426 = vadd.f32 %v3313, %v3425
    %3427 = vmatprep.mubr.bf16.mxu0 %v1437
    %3428 = vmatmul.mubr.bf16.gmra.mrb[0].mxu0 %v1436
    %v3429 = vpop.f32.mrb[0].mxu0
    %v3430 = vadd.f32 %v3317, %v3429
    %v3431 = vpop.f32.mrb[0].mxu0
    %v3432 = vadd.f32 %v3319, %v3431
    %v3433 = vpop.f32.mrb[0].mxu0
    %v3434 = vadd.f32 %v3321, %v3433
    %v3435 = vpop.f32.mrb[0].mxu0
    %v3436 = vadd.f32 %v3323, %v3435
    %3437 = vmatprep.mubr.bf16.mxu0 %v1445
    %3438 = vmatmul.mubr.bf16.gmra.mrb[0].mxu0 %v1444
    %v3439 = vpop.f32.mrb[0].mxu0
    %v3440 = vadd.f32 %v3327, %v3439
    %v3441 = vpop.f32.mrb[0].mxu0
    %v3442 = vadd.f32 %v3329, %v3441
    %v3443 = vpop.f32.mrb[0].mxu0
    %v3444 = vadd.f32 %v3331, %v3443
    %v3445 = vpop.f32.mrb[0].mxu0
    %v3446 = vadd.f32 %v3333, %v3445
    %3447 = vmatprep.mubr.bf16.mxu0 %v1453
    %3448 = vmatmul.mubr.bf16.gmra.mrb[0].mxu0 %v1452
    %v3449 = vpop.f32.mrb[0].mxu0
    %v3450 = vadd.f32 %v3337, %v3449
    %v3451 = vpop.f32.mrb[0].mxu0
    %v3452 = vadd.f32 %v3339, %v3451
    %v3453 = vpop.f32.mrb[0].mxu0
    %v3454 = vadd.f32 %v3341, %v3453
    %v3455 = vpop.f32.mrb[0].mxu0
    %v3456 = vadd.f32 %v3343, %v3455
    %3457 = vmatprep.mubr.bf16.mxu0 %v1461
    %3458 = vmatmul.mubr.bf16.gmra.mrb[0].mxu0 %v1460
    %v3459 = vpop.f32.mrb[0].mxu0
    %v3460 = vadd.f32 %v3347, %v3459
    %v3461 = vpop.f32.mrb[0].mxu0
    %v3462 = vadd.f32 %v3349, %v3461
    %v3463 = vpop.f32.mrb[0].mxu0
    %v3464 = vadd.f32 %v3351, %v3463
    %v3465 = vpop.f32.mrb[0].mxu0
    %v3466 = vadd.f32 %v3353, %v3465
    %3467 = vmatprep.mubr.bf16.mxu0 %v1469
    %3468 = vmatmul.mubr.bf16.gmra.mrb[0].mxu0 %v1468
    %v3469 = vpop.f32.mrb[0].mxu0
    %v3470 = vadd.f32 %v3357, %v3469
    %v3471 = vpop.f32.mrb[0].mxu0
    %v3472 = vadd.f32 %v3359, %v3471
    %v3473 = vpop.f32.mrb[0].mxu0
    %v3474 = vadd.f32 %v3361, %v3473
    %v3475 = vpop.f32.mrb[0].mxu0
    %v3476 = vadd.f32 %v3363, %v3475
    %3477 = vmatprep.mubr.bf16.mxu0 %v1477
    %3478 = vmatmul.mubr.bf16.gmra.mrb[0].mxu0 %v1476
    %v3479 = vpop.f32.mrb[0].mxu0
    %v3480 = vadd.f32 %v3367, %v3479
    %v3481 = vpop.f32.mrb[0].mxu0
    %v3482 = vadd.f32 %v3369, %v3481
    %v3483 = vpop.f32.mrb[0].mxu0
    %v3484 = vadd.f32 %v3371, %v3483
    %v3485 = vpop.f32.mrb[0].mxu0
    %v3486 = vadd.f32 %v3373, %v3485
    %3487 = vdwg.mxu0
    %3488 = vmatprep.subr.bf16.mxu0 %v2527
    %3489 = vmatpush1.bf16.msra.mxu0 %v2526
    %3490 = vmatprep.subr.bf16.mxu0 %v2531
    %3491 = vmatpush1.bf16.msra.mxu0 %v2530
    %3492 = vmatprep.subr.bf16.mxu0 %v2535
    %3493 = vmatpush1.bf16.msra.mxu0 %v2534
    %3494 = vmatprep.subr.bf16.mxu0 %v2539
    %3495 = vmatpush1.bf16.msra.mxu0 %v2538
    %3496 = vmatprep.subr.bf16.mxu0 %v2543
    %3497 = vmatpush1.bf16.msra.mxu0 %v2542
    %3498 = vmatprep.subr.bf16.mxu0 %v2547
    %3499 = vmatpush1.bf16.msra.mxu0 %v2546
    %3500 = vmatprep.subr.bf16.mxu0 %v2551
    %3501 = vmatpush1.bf16.msra.mxu0 %v2550
    %3502 = vmatprep.subr.bf16.mxu0 %v2555
    %3503 = vmatpush1.bf16.msra.mxu0 %v2554
    %3504 = vmatprep.subr.bf16.mxu0 %v2559
    %3505 = vmatpush1.bf16.msra.mxu0 %v2558
    %3506 = vmatprep.subr.bf16.mxu0 %v2563
    %3507 = vmatpush1.bf16.msra.mxu0 %v2562
    %3508 = vmatprep.subr.bf16.mxu0 %v2567
    %3509 = vmatpush1.bf16.msra.mxu0 %v2566
    %3510 = vmatprep.subr.bf16.mxu0 %v2571
    %3511 = vmatpush1.bf16.msra.mxu0 %v2570
    %3512 = vmatprep.subr.bf16.mxu0 %v2575
    %3513 = vmatpush1.bf16.msra.mxu0 %v2574
    %3514 = vmatprep.subr.bf16.mxu0 %v2579
    %3515 = vmatpush1.bf16.msra.mxu0 %v2578
    %3516 = vmatprep.subr.bf16.mxu0 %v2583
    %3517 = vmatpush1.bf16.msra.mxu0 %v2582
    %3518 = vmatprep.subr.bf16.mxu0 %v2587
    %3519 = vmatpush1.bf16.msra.mxu0 %v2586
    %3520 = vmatprep.mubr.bf16.mxu0 %v1415
    %3521 = vmatmul.mubr.bf16.gmra.mrb[0].mxu0 %v1414
    %v3522 = vpop.f32.mrb[0].mxu0
    %v3523 = vadd.f32 %v1747, %v3522
    %v3524 = vpop.f32.mrb[0].mxu0
    %v3525 = vadd.f32 %v1751, %v3524
    %v3526 = vpop.f32.mrb[0].mxu0
    %v3527 = vadd.f32 %v1747, %v3526
    %v3528 = vpop.f32.mrb[0].mxu0
    %v3529 = vadd.f32 %v1751, %v3528
    %3530 = vmatprep.mubr.bf16.mxu0 %v1423
    %3531 = vmatmul.mubr.bf16.gmra.mrb[0].mxu0 %v1422
    %v3532 = vpop.f32.mrb[0].mxu0
    %v3533 = vadd.f32 %v1747, %v3532
    %v3534 = vpop.f32.mrb[0].mxu0
    %v3535 = vadd.f32 %v1751, %v3534
    %v3536 = vpop.f32.mrb[0].mxu0
    %v3537 = vadd.f32 %v1747, %v3536
    %v3538 = vpop.f32.mrb[0].mxu0
    %v3539 = vadd.f32 %v1751, %v3538
    %3540 = vmatprep.mubr.bf16.mxu0 %v1431
    %3541 = vmatmul.mubr.bf16.gmra.mrb[0].mxu0 %v1430
    %v3542 = vpop.f32.mrb[0].mxu0
    %v3543 = vadd.f32 %v1747, %v3542
    %v3544 = vpop.f32.mrb[0].mxu0
    %v3545 = vadd.f32 %v1751, %v3544
    %v3546 = vpop.f32.mrb[0].mxu0
    %v3547 = vadd.f32 %v1747, %v3546
    %v3548 = vpop.f32.mrb[0].mxu0
    %v3549 = vadd.f32 %v1751, %v3548
    %3550 = vmatprep.mubr.bf16.mxu0 %v1439
    %3551 = vmatmul.mubr.bf16.gmra.mrb[0].mxu0 %v1438
    %v3552 = vpop.f32.mrb[0].mxu0
    %v3553 = vadd.f32 %v1747, %v3552
    %v3554 = vpop.f32.mrb[0].mxu0
    %v3555 = vadd.f32 %v1751, %v3554
    %v3556 = vpop.f32.mrb[0].mxu0
    %v3557 = vadd.f32 %v1747, %v3556
    %v3558 = vpop.f32.mrb[0].mxu0
    %v3559 = vadd.f32 %v1751, %v3558
    %3560 = vmatprep.mubr.bf16.mxu0 %v1447
    %3561 = vmatmul.mubr.bf16.gmra.mrb[0].mxu0 %v1446
    %v3562 = vpop.f32.mrb[0].mxu0
    %v3563 = vadd.f32 %v1747, %v3562
    %v3564 = vpop.f32.mrb[0].mxu0
    %v3565 = vadd.f32 %v1751, %v3564
    %v3566 = vpop.f32.mrb[0].mxu0
    %v3567 = vadd.f32 %v1747, %v3566
    %v3568 = vpop.f32.mrb[0].mxu0
    %v3569 = vadd.f32 %v1751, %v3568
    %3570 = vmatprep.mubr.bf16.mxu0 %v1455
    %3571 = vmatmul.mubr.bf16.gmra.mrb[0].mxu0 %v1454
    %v3572 = vpop.f32.mrb[0].mxu0
    %v3573 = vadd.f32 %v1747, %v3572
    %v3574 = vpop.f32.mrb[0].mxu0
    %v3575 = vadd.f32 %v1751, %v3574
    %v3576 = vpop.f32.mrb[0].mxu0
    %v3577 = vadd.f32 %v1747, %v3576
    %v3578 = vpop.f32.mrb[0].mxu0
    %v3579 = vadd.f32 %v1751, %v3578
    %3580 = vmatprep.mubr.bf16.mxu0 %v1463
    %3581 = vmatmul.mubr.bf16.gmra.mrb[0].mxu0 %v1462
    %v3582 = vpop.f32.mrb[0].mxu0
    %v3583 = vadd.f32 %v1747, %v3582
    %v3584 = vpop.f32.mrb[0].mxu0
    %v3585 = vadd.f32 %v1751, %v3584
    %v3586 = vpop.f32.mrb[0].mxu0
    %v3587 = vadd.f32 %v1747, %v3586
    %v3588 = vpop.f32.mrb[0].mxu0
    %v3589 = vadd.f32 %v1751, %v3588
    %3590 = vmatprep.mubr.bf16.mxu0 %v1471
    %3591 = vmatmul.mubr.bf16.gmra.mrb[0].mxu0 %v1470
    %v3592 = vpop.f32.mrb[0].mxu0
    %v3593 = vadd.f32 %v1747, %v3592
    %v3594 = vpop.f32.mrb[0].mxu0
    %v3595 = vadd.f32 %v1751, %v3594
    %v3596 = vpop.f32.mrb[0].mxu0
    %v3597 = vadd.f32 %v1747, %v3596
    %v3598 = vpop.f32.mrb[0].mxu0
    %v3599 = vadd.f32 %v1751, %v3598
    %3600 = vdwg.mxu0
    %3601 = vmatprep.subr.bf16.mxu0 %v2591
    %3602 = vmatpush1.bf16.msra.mxu0 %v2590
    %3603 = vmatprep.subr.bf16.mxu0 %v2595
    %3604 = vmatpush1.bf16.msra.mxu0 %v2594
    %3605 = vmatprep.subr.bf16.mxu0 %v2599
    %3606 = vmatpush1.bf16.msra.mxu0 %v2598
    %3607 = vmatprep.subr.bf16.mxu0 %v2603
    %3608 = vmatpush1.bf16.msra.mxu0 %v2602
    %3609 = vmatprep.subr.bf16.mxu0 %v2607
    %3610 = vmatpush1.bf16.msra.mxu0 %v2606
    %3611 = vmatprep.subr.bf16.mxu0 %v2611
    %3612 = vmatpush1.bf16.msra.mxu0 %v2610
    %3613 = vmatprep.subr.bf16.mxu0 %v2615
    %3614 = vmatpush1.bf16.msra.mxu0 %v2614
    %3615 = vmatprep.subr.bf16.mxu0 %v2619
    %3616 = vmatpush1.bf16.msra.mxu0 %v2618
    %3617 = vmatprep.subr.bf16.mxu0 %v2623
    %3618 = vmatpush1.bf16.msra.mxu0 %v2622
    %3619 = vmatprep.subr.bf16.mxu0 %v2627
    %3620 = vmatpush1.bf16.msra.mxu0 %v2626
    %3621 = vmatprep.subr.bf16.mxu0 %v2631
    %3622 = vmatpush1.bf16.msra.mxu0 %v2630
    %3623 = vmatprep.subr.bf16.mxu0 %v2635
    %3624 = vmatpush1.bf16.msra.mxu0 %v2634
    %3625 = vmatprep.subr.bf16.mxu0 %v2639
    %3626 = vmatpush1.bf16.msra.mxu0 %v2638
    %3627 = vmatprep.subr.bf16.mxu0 %v2643
    %3628 = vmatpush1.bf16.msra.mxu0 %v2642
    %3629 = vmatprep.subr.bf16.mxu0 %v2647
    %3630 = vmatpush1.bf16.msra.mxu0 %v2646
    %3631 = vmatprep.subr.bf16.mxu0 %v2651
    %3632 = vmatpush1.bf16.msra.mxu0 %v2650
    %3633 = vmatprep.mubr.bf16.mxu0 %v1417
    %3634 = vmatmul.mubr.bf16.gmra.mrb[0].mxu0 %v1416
    %v3635 = vpop.f32.mrb[0].mxu0
    %v3636 = vadd.f32 %v3523, %v3635
    %v3637 = vpop.f32.mrb[0].mxu0
    %v3638 = vadd.f32 %v3525, %v3637
    %v3639 = vpop.f32.mrb[0].mxu0
    %v3640 = vadd.f32 %v3527, %v3639
    %v3641 = vpop.f32.mrb[0].mxu0
    %v3642 = vadd.f32 %v3529, %v3641
    %3643 = vmatprep.mubr.bf16.mxu0 %v1425
    %3644 = vmatmul.mubr.bf16.gmra.mrb[0].mxu0 %v1424
    %v3645 = vpop.f32.mrb[0].mxu0
    %v3646 = vadd.f32 %v3533, %v3645
    %v3647 = vpop.f32.mrb[0].mxu0
    %v3648 = vadd.f32 %v3535, %v3647
    %v3649 = vpop.f32.mrb[0].mxu0
    %v3650 = vadd.f32 %v3537, %v3649
    %v3651 = vpop.f32.mrb[0].mxu0
    %v3652 = vadd.f32 %v3539, %v3651
    %3653 = vmatprep.mubr.bf16.mxu0 %v1433
    %3654 = vmatmul.mubr.bf16.gmra.mrb[0].mxu0 %v1432
    %v3655 = vpop.f32.mrb[0].mxu0
    %v3656 = vadd.f32 %v3543, %v3655
    %v3657 = vpop.f32.mrb[0].mxu0
    %v3658 = vadd.f32 %v3545, %v3657
    %v3659 = vpop.f32.mrb[0].mxu0
    %v3660 = vadd.f32 %v3547, %v3659
    %v3661 = vpop.f32.mrb[0].mxu0
    %v3662 = vadd.f32 %v3549, %v3661
    %3663 = vmatprep.mubr.bf16.mxu0 %v1441
    %3664 = vmatmul.mubr.bf16.gmra.mrb[0].mxu0 %v1440
    %v3665 = vpop.f32.mrb[0].mxu0
    %v3666 = vadd.f32 %v3553, %v3665
    %v3667 = vpop.f32.mrb[0].mxu0
    %v3668 = vadd.f32 %v3555, %v3667
    %v3669 = vpop.f32.mrb[0].mxu0
    %v3670 = vadd.f32 %v3557, %v3669
    %v3671 = vpop.f32.mrb[0].mxu0
    %v3672 = vadd.f32 %v3559, %v3671
    %3673 = vmatprep.mubr.bf16.mxu0 %v1449
    %3674 = vmatmul.mubr.bf16.gmra.mrb[0].mxu0 %v1448
    %v3675 = vpop.f32.mrb[0].mxu0
    %v3676 = vadd.f32 %v3563, %v3675
    %v3677 = vpop.f32.mrb[0].mxu0
    %v3678 = vadd.f32 %v3565, %v3677
    %v3679 = vpop.f32.mrb[0].mxu0
    %v3680 = vadd.f32 %v3567, %v3679
    %v3681 = vpop.f32.mrb[0].mxu0
    %v3682 = vadd.f32 %v3569, %v3681
    %3683 = vmatprep.mubr.bf16.mxu0 %v1457
    %3684 = vmatmul.mubr.bf16.gmra.mrb[0].mxu0 %v1456
    %v3685 = vpop.f32.mrb[0].mxu0
    %v3686 = vadd.f32 %v3573, %v3685
    %v3687 = vpop.f32.mrb[0].mxu0
    %v3688 = vadd.f32 %v3575, %v3687
    %v3689 = vpop.f32.mrb[0].mxu0
    %v3690 = vadd.f32 %v3577, %v3689
    %v3691 = vpop.f32.mrb[0].mxu0
    %v3692 = vadd.f32 %v3579, %v3691
    %3693 = vmatprep.mubr.bf16.mxu0 %v1465
    %3694 = vmatmul.mubr.bf16.gmra.mrb[0].mxu0 %v1464
    %v3695 = vpop.f32.mrb[0].mxu0
    %v3696 = vadd.f32 %v3583, %v3695
    %v3697 = vpop.f32.mrb[0].mxu0
    %v3698 = vadd.f32 %v3585, %v3697
    %v3699 = vpop.f32.mrb[0].mxu0
    %v3700 = vadd.f32 %v3587, %v3699
    %v3701 = vpop.f32.mrb[0].mxu0
    %v3702 = vadd.f32 %v3589, %v3701
    %3703 = vmatprep.mubr.bf16.mxu0 %v1473
    %3704 = vmatmul.mubr.bf16.gmra.mrb[0].mxu0 %v1472
    %v3705 = vpop.f32.mrb[0].mxu0
    %v3706 = vadd.f32 %v3593, %v3705
    %v3707 = vpop.f32.mrb[0].mxu0
    %v3708 = vadd.f32 %v3595, %v3707
    %v3709 = vpop.f32.mrb[0].mxu0
    %v3710 = vadd.f32 %v3597, %v3709
    %v3711 = vpop.f32.mrb[0].mxu0
    %v3712 = vadd.f32 %v3599, %v3711
    %3713 = vdwg.mxu0
    %3714 = vmatprep.subr.bf16.mxu0 %v2655
    %3715 = vmatpush1.bf16.msra.mxu0 %v2654
    %3716 = vmatprep.subr.bf16.mxu0 %v2659
    %3717 = vmatpush1.bf16.msra.mxu0 %v2658
    %3718 = vmatprep.subr.bf16.mxu0 %v2663
    %3719 = vmatpush1.bf16.msra.mxu0 %v2662
    %3720 = vmatprep.subr.bf16.mxu0 %v2667
    %3721 = vmatpush1.bf16.msra.mxu0 %v2666
    %3722 = vmatprep.subr.bf16.mxu0 %v2671
    %3723 = vmatpush1.bf16.msra.mxu0 %v2670
    %3724 = vmatprep.subr.bf16.mxu0 %v2675
    %3725 = vmatpush1.bf16.msra.mxu0 %v2674
    %3726 = vmatprep.subr.bf16.mxu0 %v2679
    %3727 = vmatpush1.bf16.msra.mxu0 %v2678
    %3728 = vmatprep.subr.bf16.mxu0 %v2683
    %3729 = vmatpush1.bf16.msra.mxu0 %v2682
    %3730 = vmatprep.subr.bf16.mxu0 %v2687
    %3731 = vmatpush1.bf16.msra.mxu0 %v2686
    %3732 = vmatprep.subr.bf16.mxu0 %v2691
    %3733 = vmatpush1.bf16.msra.mxu0 %v2690
    %3734 = vmatprep.subr.bf16.mxu0 %v2695
    %3735 = vmatpush1.bf16.msra.mxu0 %v2694
    %3736 = vmatprep.subr.bf16.mxu0 %v2699
    %3737 = vmatpush1.bf16.msra.mxu0 %v2698
    %3738 = vmatprep.subr.bf16.mxu0 %v2703
    %3739 = vmatpush1.bf16.msra.mxu0 %v2702
    %3740 = vmatprep.subr.bf16.mxu0 %v2707
    %3741 = vmatpush1.bf16.msra.mxu0 %v2706
    %3742 = vmatprep.subr.bf16.mxu0 %v2711
    %3743 = vmatpush1.bf16.msra.mxu0 %v2710
    %3744 = vmatprep.subr.bf16.mxu0 %v2715
    %3745 = vmatpush1.bf16.msra.mxu0 %v2714
    %3746 = vmatprep.mubr.bf16.mxu0 %v1419
    %3747 = vmatmul.mubr.bf16.gmra.mrb[0].mxu0 %v1418
    %v3748 = vpop.f32.mrb[0].mxu0
    %v3749 = vadd.f32 %v3636, %v3748
    %v3750 = vpop.f32.mrb[0].mxu0
    %v3751 = vadd.f32 %v3638, %v3750
    %v3752 = vpop.f32.mrb[0].mxu0
    %v3753 = vadd.f32 %v3640, %v3752
    %v3754 = vpop.f32.mrb[0].mxu0
    %v3755 = vadd.f32 %v3642, %v3754
    %3756 = vmatprep.mubr.bf16.mxu0 %v1427
    %3757 = vmatmul.mubr.bf16.gmra.mrb[0].mxu0 %v1426
    %v3758 = vpop.f32.mrb[0].mxu0
    %v3759 = vadd.f32 %v3646, %v3758
    %v3760 = vpop.f32.mrb[0].mxu0
    %v3761 = vadd.f32 %v3648, %v3760
    %v3762 = vpop.f32.mrb[0].mxu0
    %v3763 = vadd.f32 %v3650, %v3762
    %v3764 = vpop.f32.mrb[0].mxu0
    %v3765 = vadd.f32 %v3652, %v3764
    %3766 = vmatprep.mubr.bf16.mxu0 %v1435
    %3767 = vmatmul.mubr.bf16.gmra.mrb[0].mxu0 %v1434
    %v3768 = vpop.f32.mrb[0].mxu0
    %v3769 = vadd.f32 %v3656, %v3768
    %v3770 = vpop.f32.mrb[0].mxu0
    %v3771 = vadd.f32 %v3658, %v3770
    %v3772 = vpop.f32.mrb[0].mxu0
    %v3773 = vadd.f32 %v3660, %v3772
    %v3774 = vpop.f32.mrb[0].mxu0
    %v3775 = vadd.f32 %v3662, %v3774
    %3776 = vmatprep.mubr.bf16.mxu0 %v1443
    %3777 = vmatmul.mubr.bf16.gmra.mrb[0].mxu0 %v1442
    %v3778 = vpop.f32.mrb[0].mxu0
    %v3779 = vadd.f32 %v3666, %v3778
    %v3780 = vpop.f32.mrb[0].mxu0
    %v3781 = vadd.f32 %v3668, %v3780
    %v3782 = vpop.f32.mrb[0].mxu0
    %v3783 = vadd.f32 %v3670, %v3782
    %v3784 = vpop.f32.mrb[0].mxu0
    %v3785 = vadd.f32 %v3672, %v3784
    %3786 = vmatprep.mubr.bf16.mxu0 %v1451
    %3787 = vmatmul.mubr.bf16.gmra.mrb[0].mxu0 %v1450
    %v3788 = vpop.f32.mrb[0].mxu0
    %v3789 = vadd.f32 %v3676, %v3788
    %v3790 = vpop.f32.mrb[0].mxu0
    %v3791 = vadd.f32 %v3678, %v3790
    %v3792 = vpop.f32.mrb[0].mxu0
    %v3793 = vadd.f32 %v3680, %v3792
    %v3794 = vpop.f32.mrb[0].mxu0
    %v3795 = vadd.f32 %v3682, %v3794
    %3796 = vmatprep.mubr.bf16.mxu0 %v1459
    %3797 = vmatmul.mubr.bf16.gmra.mrb[0].mxu0 %v1458
    %v3798 = vpop.f32.mrb[0].mxu0
    %v3799 = vadd.f32 %v3686, %v3798
    %v3800 = vpop.f32.mrb[0].mxu0
    %v3801 = vadd.f32 %v3688, %v3800
    %v3802 = vpop.f32.mrb[0].mxu0
    %v3803 = vadd.f32 %v3690, %v3802
    %v3804 = vpop.f32.mrb[0].mxu0
    %v3805 = vadd.f32 %v3692, %v3804
    %3806 = vmatprep.mubr.bf16.mxu0 %v1467
    %3807 = vmatmul.mubr.bf16.gmra.mrb[0].mxu0 %v1466
    %v3808 = vpop.f32.mrb[0].mxu0
    %v3809 = vadd.f32 %v3696, %v3808
    %v3810 = vpop.f32.mrb[0].mxu0
    %v3811 = vadd.f32 %v3698, %v3810
    %v3812 = vpop.f32.mrb[0].mxu0
    %v3813 = vadd.f32 %v3700, %v3812
    %v3814 = vpop.f32.mrb[0].mxu0
    %v3815 = vadd.f32 %v3702, %v3814
    %3816 = vmatprep.mubr.bf16.mxu0 %v1475
    %3817 = vmatmul.mubr.bf16.gmra.mrb[0].mxu0 %v1474
    %v3818 = vpop.f32.mrb[0].mxu0
    %v3819 = vadd.f32 %v3706, %v3818
    %v3820 = vpop.f32.mrb[0].mxu0
    %v3821 = vadd.f32 %v3708, %v3820
    %v3822 = vpop.f32.mrb[0].mxu0
    %v3823 = vadd.f32 %v3710, %v3822
    %v3824 = vpop.f32.mrb[0].mxu0
    %v3825 = vadd.f32 %v3712, %v3824
    %3826 = vdwg.mxu0
    %3827 = vmatprep.subr.bf16.mxu0 %v2719
    %3828 = vmatpush1.bf16.msra.mxu0 %v2718
    %3829 = vmatprep.subr.bf16.mxu0 %v2723
    %3830 = vmatpush1.bf16.msra.mxu0 %v2722
    %3831 = vmatprep.subr.bf16.mxu0 %v2727
    %3832 = vmatpush1.bf16.msra.mxu0 %v2726
    %3833 = vmatprep.subr.bf16.mxu0 %v2731
    %3834 = vmatpush1.bf16.msra.mxu0 %v2730
    %3835 = vmatprep.subr.bf16.mxu0 %v2735
    %3836 = vmatpush1.bf16.msra.mxu0 %v2734
    %3837 = vmatprep.subr.bf16.mxu0 %v2739
    %3838 = vmatpush1.bf16.msra.mxu0 %v2738
    %3839 = vmatprep.subr.bf16.mxu0 %v2743
    %3840 = vmatpush1.bf16.msra.mxu0 %v2742
    %3841 = vmatprep.subr.bf16.mxu0 %v2747
    %3842 = vmatpush1.bf16.msra.mxu0 %v2746
    %3843 = vmatprep.subr.bf16.mxu0 %v2751
    %3844 = vmatpush1.bf16.msra.mxu0 %v2750
    %3845 = vmatprep.subr.bf16.mxu0 %v2755
    %3846 = vmatpush1.bf16.msra.mxu0 %v2754
    %3847 = vmatprep.subr.bf16.mxu0 %v2759
    %3848 = vmatpush1.bf16.msra.mxu0 %v2758
    %3849 = vmatprep.subr.bf16.mxu0 %v2763
    %3850 = vmatpush1.bf16.msra.mxu0 %v2762
    %3851 = vmatprep.subr.bf16.mxu0 %v2767
    %3852 = vmatpush1.bf16.msra.mxu0 %v2766
    %3853 = vmatprep.subr.bf16.mxu0 %v2771
    %3854 = vmatpush1.bf16.msra.mxu0 %v2770
    %3855 = vmatprep.subr.bf16.mxu0 %v2775
    %3856 = vmatpush1.bf16.msra.mxu0 %v2774
    %3857 = vmatprep.subr.bf16.mxu0 %v2779
    %3858 = vmatpush1.bf16.msra.mxu0 %v2778
    %3859 = vmatprep.mubr.bf16.mxu0 %v1421
    %3860 = vmatmul.mubr.bf16.gmra.mrb[0].mxu0 %v1420
    %v3861 = vpop.f32.mrb[0].mxu0
    %v3862 = vadd.f32 %v3749, %v3861
    %v3863 = vpop.f32.mrb[0].mxu0
    %v3864 = vadd.f32 %v3751, %v3863
    %v3865 = vpop.f32.mrb[0].mxu0
    %v3866 = vadd.f32 %v3753, %v3865
    %v3867 = vpop.f32.mrb[0].mxu0
    %v3868 = vadd.f32 %v3755, %v3867
    %3869 = vmatprep.mubr.bf16.mxu0 %v1429
    %3870 = vmatmul.mubr.bf16.gmra.mrb[0].mxu0 %v1428
    %v3871 = vpop.f32.mrb[0].mxu0
    %v3872 = vadd.f32 %v3759, %v3871
    %v3873 = vpop.f32.mrb[0].mxu0
    %v3874 = vadd.f32 %v3761, %v3873
    %v3875 = vpop.f32.mrb[0].mxu0
    %v3876 = vadd.f32 %v3763, %v3875
    %v3877 = vpop.f32.mrb[0].mxu0
    %v3878 = vadd.f32 %v3765, %v3877
    %3879 = vmatprep.mubr.bf16.mxu0 %v1437
    %3880 = vmatmul.mubr.bf16.gmra.mrb[0].mxu0 %v1436
    %v3881 = vpop.f32.mrb[0].mxu0
    %v3882 = vadd.f32 %v3769, %v3881
    %v3883 = vpop.f32.mrb[0].mxu0
    %v3884 = vadd.f32 %v3771, %v3883
    %v3885 = vpop.f32.mrb[0].mxu0
    %v3886 = vadd.f32 %v3773, %v3885
    %v3887 = vpop.f32.mrb[0].mxu0
    %v3888 = vadd.f32 %v3775, %v3887
    %3889 = vmatprep.mubr.bf16.mxu0 %v1445
    %3890 = vmatmul.mubr.bf16.gmra.mrb[0].mxu0 %v1444
    %v3891 = vpop.f32.mrb[0].mxu0
    %v3892 = vadd.f32 %v3779, %v3891
    %v3893 = vpop.f32.mrb[0].mxu0
    %v3894 = vadd.f32 %v3781, %v3893
    %v3895 = vpop.f32.mrb[0].mxu0
    %v3896 = vadd.f32 %v3783, %v3895
    %v3897 = vpop.f32.mrb[0].mxu0
    %v3898 = vadd.f32 %v3785, %v3897
    %3899 = vmatprep.mubr.bf16.mxu0 %v1453
    %3900 = vmatmul.mubr.bf16.gmra.mrb[0].mxu0 %v1452
    %v3901 = vpop.f32.mrb[0].mxu0
    %v3902 = vadd.f32 %v3789, %v3901
    %v3903 = vpop.f32.mrb[0].mxu0
    %v3904 = vadd.f32 %v3791, %v3903
    %v3905 = vpop.f32.mrb[0].mxu0
    %v3906 = vadd.f32 %v3793, %v3905
    %v3907 = vpop.f32.mrb[0].mxu0
    %v3908 = vadd.f32 %v3795, %v3907
    %3909 = vmatprep.mubr.bf16.mxu0 %v1461
    %3910 = vmatmul.mubr.bf16.gmra.mrb[0].mxu0 %v1460
    %v3911 = vpop.f32.mrb[0].mxu0
    %v3912 = vadd.f32 %v3799, %v3911
    %v3913 = vpop.f32.mrb[0].mxu0
    %v3914 = vadd.f32 %v3801, %v3913
    %v3915 = vpop.f32.mrb[0].mxu0
    %v3916 = vadd.f32 %v3803, %v3915
    %v3917 = vpop.f32.mrb[0].mxu0
    %v3918 = vadd.f32 %v3805, %v3917
    %3919 = vmatprep.mubr.bf16.mxu0 %v1469
    %3920 = vmatmul.mubr.bf16.gmra.mrb[0].mxu0 %v1468
    %v3921 = vpop.f32.mrb[0].mxu0
    %v3922 = vadd.f32 %v3809, %v3921
    %v3923 = vpop.f32.mrb[0].mxu0
    %v3924 = vadd.f32 %v3811, %v3923
    %v3925 = vpop.f32.mrb[0].mxu0
    %v3926 = vadd.f32 %v3813, %v3925
    %v3927 = vpop.f32.mrb[0].mxu0
    %v3928 = vadd.f32 %v3815, %v3927
    %3929 = vmatprep.mubr.bf16.mxu0 %v1477
    %3930 = vmatmul.mubr.bf16.gmra.mrb[0].mxu0 %v1476
    %v3931 = vpop.f32.mrb[0].mxu0
    %v3932 = vadd.f32 %v3819, %v3931
    %v3933 = vpop.f32.mrb[0].mxu0
    %v3934 = vadd.f32 %v3821, %v3933
    %v3935 = vpop.f32.mrb[0].mxu0
    %v3936 = vadd.f32 %v3823, %v3935
    %v3937 = vpop.f32.mrb[0].mxu0
    %v3938 = vadd.f32 %v3825, %v3937
    %3939 = vdwg.mxu0
    %vm3940 = vcmp.gt.f32.partialorder %v3410, 0.0
    %vm3941 = vcmp.gt.f32.partialorder %v3412, 0.0
    %vm3942 = vcmp.gt.f32.partialorder %v3862, 0.0
    %vm3943 = vcmp.gt.f32.partialorder %v3864, 0.0
    %vm3944 = vcmp.gt.f32.partialorder %v3414, 0.0
    %vm3945 = vcmp.gt.f32.partialorder %v3416, 0.0
    %vm3946 = vcmp.gt.f32.partialorder %v3866, 0.0
    %vm3947 = vcmp.gt.f32.partialorder %v3868, 0.0
    %vm3948 = vcmp.gt.f32.partialorder %v3420, 0.0
    %vm3949 = vcmp.gt.f32.partialorder %v3422, 0.0
    %vm3950 = vcmp.gt.f32.partialorder %v3872, 0.0
    %vm3951 = vcmp.gt.f32.partialorder %v3874, 0.0
    %vm3952 = vcmp.gt.f32.partialorder %v3424, 0.0
    %vm3953 = vcmp.gt.f32.partialorder %v3426, 0.0
    %vm3954 = vcmp.gt.f32.partialorder %v3876, 0.0
    %vm3955 = vcmp.gt.f32.partialorder %v3878, 0.0
    %vm3956 = vcmp.gt.f32.partialorder %v3430, 0.0
    %vm3957 = vcmp.gt.f32.partialorder %v3432, 0.0
    %vm3958 = vcmp.gt.f32.partialorder %v3882, 0.0
    %vm3959 = vcmp.gt.f32.partialorder %v3884, 0.0
    %vm3960 = vcmp.gt.f32.partialorder %v3434, 0.0
    %vm3961 = vcmp.gt.f32.partialorder %v3436, 0.0
    %vm3962 = vcmp.gt.f32.partialorder %v3886, 0.0
    %vm3963 = vcmp.gt.f32.partialorder %v3888, 0.0
    %vm3964 = vcmp.gt.f32.partialorder %v3440, 0.0
    %vm3965 = vcmp.gt.f32.partialorder %v3442, 0.0
    %vm3966 = vcmp.gt.f32.partialorder %v3892, 0.0
    %vm3967 = vcmp.gt.f32.partialorder %v3894, 0.0
    %vm3968 = vcmp.gt.f32.partialorder %v3444, 0.0
    %vm3969 = vcmp.gt.f32.partialorder %v3446, 0.0
    %vm3970 = vcmp.gt.f32.partialorder %v3896, 0.0
    %vm3971 = vcmp.gt.f32.partialorder %v3898, 0.0
    %vm3972 = vcmp.gt.f32.partialorder %v3450, 0.0
    %vm3973 = vcmp.gt.f32.partialorder %v3452, 0.0
    %vm3974 = vcmp.gt.f32.partialorder %v3902, 0.0
    %vm3975 = vcmp.gt.f32.partialorder %v3904, 0.0
    %vm3976 = vcmp.gt.f32.partialorder %v3454, 0.0
    %vm3977 = vcmp.gt.f32.partialorder %v3456, 0.0
    %vm3978 = vcmp.gt.f32.partialorder %v3906, 0.0
    %vm3979 = vcmp.gt.f32.partialorder %v3908, 0.0
    %vm3980 = vcmp.gt.f32.partialorder %v3460, 0.0
    %vm3981 = vcmp.gt.f32.partialorder %v3462, 0.0
    %vm3982 = vcmp.gt.f32.partialorder %v3912, 0.0
    %vm3983 = vcmp.gt.f32.partialorder %v3914, 0.0
    %vm3984 = vcmp.gt.f32.partialorder %v3464, 0.0
    %vm3985 = vcmp.gt.f32.partialorder %v3466, 0.0
    %vm3986 = vcmp.gt.f32.partialorder %v3916, 0.0
    %vm3987 = vcmp.gt.f32.partialorder %v3918, 0.0
    %vm3988 = vcmp.gt.f32.partialorder %v3470, 0.0
    %vm3989 = vcmp.gt.f32.partialorder %v3472, 0.0
    %vm3990 = vcmp.gt.f32.partialorder %v3922, 0.0
    %vm3991 = vcmp.gt.f32.partialorder %v3924, 0.0
    %vm3992 = vcmp.gt.f32.partialorder %v3474, 0.0
    %vm3993 = vcmp.gt.f32.partialorder %v3476, 0.0
    %vm3994 = vcmp.gt.f32.partialorder %v3926, 0.0
    %vm3995 = vcmp.gt.f32.partialorder %v3928, 0.0
    %vm3996 = vcmp.gt.f32.partialorder %v3480, 0.0
    %vm3997 = vcmp.gt.f32.partialorder %v3482, 0.0
    %vm3998 = vcmp.gt.f32.partialorder %v3932, 0.0
    %vm3999 = vcmp.gt.f32.partialorder %v3934, 0.0
    %vm4000 = vcmp.gt.f32.partialorder %v3484, 0.0
    %vm4001 = vcmp.gt.f32.partialorder %v3486, 0.0
    %vm4002 = vcmp.gt.f32.partialorder %v3936, 0.0
    %vm4003 = vcmp.gt.f32.partialorder %v3938, 0.0
    %v4004 = vmul.f32 %v3410, 0.2
    %v4005 = vmul.f32 %v3412, 0.2
    %v4006 = vmul.f32 %v3862, 0.2
    %v4007 = vmul.f32 %v3864, 0.2
    %v4008 = vmul.f32 %v3414, 0.2
    %v4009 = vmul.f32 %v3416, 0.2
    %v4010 = vmul.f32 %v3866, 0.2
    %v4011 = vmul.f32 %v3868, 0.2
    %v4012 = vmul.f32 %v3420, 0.2
    %v4013 = vmul.f32 %v3422, 0.2
    %v4014 = vmul.f32 %v3872, 0.2
    %v4015 = vmul.f32 %v3874, 0.2
    %v4016 = vmul.f32 %v3424, 0.2
    %v4017 = vmul.f32 %v3426, 0.2
    %v4018 = vmul.f32 %v3876, 0.2
    %v4019 = vmul.f32 %v3878, 0.2
    %v4020 = vmul.f32 %v3430, 0.2
    %v4021 = vmul.f32 %v3432, 0.2
    %v4022 = vmul.f32 %v3882, 0.2
    %v4023 = vmul.f32 %v3884, 0.2
    %v4024 = vmul.f32 %v3434, 0.2
    %v4025 = vmul.f32 %v3436, 0.2
    %v4026 = vmul.f32 %v3886, 0.2
    %v4027 = vmul.f32 %v3888, 0.2
    %v4028 = vmul.f32 %v3440, 0.2
    %v4029 = vmul.f32 %v3442, 0.2
    %v4030 = vmul.f32 %v3892, 0.2
    %v4031 = vmul.f32 %v3894, 0.2
    %v4032 = vmul.f32 %v3444, 0.2
    %v4033 = vmul.f32 %v3446, 0.2
    %v4034 = vmul.f32 %v3896, 0.2
    %v4035 = vmul.f32 %v3898, 0.2
    %v4036 = vmul.f32 %v3450, 0.2
    %v4037 = vmul.f32 %v3452, 0.2
    %v4038 = vmul.f32 %v3902, 0.2
    %v4039 = vmul.f32 %v3904, 0.2
    %v4040 = vmul.f32 %v3454, 0.2
    %v4041 = vmul.f32 %v3456, 0.2
    %v4042 = vmul.f32 %v3906, 0.2
    %v4043 = vmul.f32 %v3908, 0.2
    %v4044 = vmul.f32 %v3460, 0.2
    %v4045 = vmul.f32 %v3462, 0.2
    %v4046 = vmul.f32 %v3912, 0.2
    %v4047 = vmul.f32 %v3914, 0.2
    %v4048 = vmul.f32 %v3464, 0.2
    %v4049 = vmul.f32 %v3466, 0.2
    %v4050 = vmul.f32 %v3916, 0.2
    %v4051 = vmul.f32 %v3918, 0.2
    %v4052 = vmul.f32 %v3470, 0.2
    %v4053 = vmul.f32 %v3472, 0.2
    %v4054 = vmul.f32 %v3922, 0.2
    %v4055 = vmul.f32 %v3924, 0.2
    %v4056 = vmul.f32 %v3474, 0.2
    %v4057 = vmul.f32 %v3476, 0.2
    %v4058 = vmul.f32 %v3926, 0.2
    %v4059 = vmul.f32 %v3928, 0.2
    %v4060 = vmul.f32 %v3480, 0.2
    %v4061 = vmul.f32 %v3482, 0.2
    %v4062 = vmul.f32 %v3932, 0.2
    %v4063 = vmul.f32 %v3934, 0.2
    %v4064 = vmul.f32 %v3484, 0.2
    %v4065 = vmul.f32 %v3486, 0.2
    %v4066 = vmul.f32 %v3936, 0.2
    %v4067 = vmul.f32 %v3938, 0.2
    %v4068 = vsel %vm3940, %v3410, %v4004
    %v4069 = vsel %vm3941, %v3412, %v4005
    %v4070 = vsel %vm3942, %v3862, %v4006
    %v4071 = vsel %vm3943, %v3864, %v4007
    %v4072 = vsel %vm3944, %v3414, %v4008
    %v4073 = vsel %vm3945, %v3416, %v4009
    %v4074 = vsel %vm3946, %v3866, %v4010
    %v4075 = vsel %vm3947, %v3868, %v4011
    %v4076 = vsel %vm3948, %v3420, %v4012
    %v4077 = vsel %vm3949, %v3422, %v4013
    %v4078 = vsel %vm3950, %v3872, %v4014
    %v4079 = vsel %vm3951, %v3874, %v4015
    %v4080 = vsel %vm3952, %v3424, %v4016
    %v4081 = vsel %vm3953, %v3426, %v4017
    %v4082 = vsel %vm3954, %v3876, %v4018
    %v4083 = vsel %vm3955, %v3878, %v4019
    %v4084 = vsel %vm3956, %v3430, %v4020
    %v4085 = vsel %vm3957, %v3432, %v4021
    %v4086 = vsel %vm3958, %v3882, %v4022
    %v4087 = vsel %vm3959, %v3884, %v4023
    %v4088 = vsel %vm3960, %v3434, %v4024
    %v4089 = vsel %vm3961, %v3436, %v4025
    %v4090 = vsel %vm3962, %v3886, %v4026
    %v4091 = vsel %vm3963, %v3888, %v4027
    %v4092 = vsel %vm3964, %v3440, %v4028
    %v4093 = vsel %vm3965, %v3442, %v4029
    %v4094 = vsel %vm3966, %v3892, %v4030
    %v4095 = vsel %vm3967, %v3894, %v4031
    %v4096 = vsel %vm3968, %v3444, %v4032
    %v4097 = vsel %vm3969, %v3446, %v4033
    %v4098 = vsel %vm3970, %v3896, %v4034
    %v4099 = vsel %vm3971, %v3898, %v4035
    %v4100 = vsel %vm3972, %v3450, %v4036
    %v4101 = vsel %vm3973, %v3452, %v4037
    %v4102 = vsel %vm3974, %v3902, %v4038
    %v4103 = vsel %vm3975, %v3904, %v4039
    %v4104 = vsel %vm3976, %v3454, %v4040
    %v4105 = vsel %vm3977, %v3456, %v4041
    %v4106 = vsel %vm3978, %v3906, %v4042
    %v4107 = vsel %vm3979, %v3908, %v4043
    %v4108 = vsel %vm3980, %v3460, %v4044
    %v4109 = vsel %vm3981, %v3462, %v4045
    %v4110 = vsel %vm3982, %v3912, %v4046
    %v4111 = vsel %vm3983, %v3914, %v4047
    %v4112 = vsel %vm3984, %v3464, %v4048
    %v4113 = vsel %vm3985, %v3466, %v4049
    %v4114 = vsel %vm3986, %v3916, %v4050
    %v4115 = vsel %vm3987, %v3918, %v4051
    %v4116 = vsel %vm3988, %v3470, %v4052
    %v4117 = vsel %vm3989, %v3472, %v4053
    %v4118 = vsel %vm3990, %v3922, %v4054
    %v4119 = vsel %vm3991, %v3924, %v4055
    %v4120 = vsel %vm3992, %v3474, %v4056
    %v4121 = vsel %vm3993, %v3476, %v4057
    %v4122 = vsel %vm3994, %v3926, %v4058
    %v4123 = vsel %vm3995, %v3928, %v4059
    %v4124 = vsel %vm3996, %v3480, %v4060
    %v4125 = vsel %vm3997, %v3482, %v4061
    %v4126 = vsel %vm3998, %v3932, %v4062
    %v4127 = vsel %vm3999, %v3934, %v4063
    %v4128 = vsel %vm4000, %v3484, %v4064
    %v4129 = vsel %vm4001, %v3486, %v4065
    %v4130 = vsel %vm4002, %v3936, %v4066
    %v4131 = vsel %vm4003, %v3938, %v4067
    %v4132 = vpack.c.bf16 %v4072, %v4068
    %v4133 = vpack.c.bf16 %v4073, %v4069
    %v4134 = vpack.c.bf16 %v4074, %v4070
    %v4135 = vpack.c.bf16 %v4075, %v4071
    %v4136 = vpack.c.bf16 %v4080, %v4076
    %v4137 = vpack.c.bf16 %v4081, %v4077
    %v4138 = vpack.c.bf16 %v4082, %v4078
    %v4139 = vpack.c.bf16 %v4083, %v4079
    %v4140 = vpack.c.bf16 %v4088, %v4084
    %v4141 = vpack.c.bf16 %v4089, %v4085
    %v4142 = vpack.c.bf16 %v4090, %v4086
    %v4143 = vpack.c.bf16 %v4091, %v4087
    %v4144 = vpack.c.bf16 %v4096, %v4092
    %v4145 = vpack.c.bf16 %v4097, %v4093
    %v4146 = vpack.c.bf16 %v4098, %v4094
    %v4147 = vpack.c.bf16 %v4099, %v4095
    %v4148 = vpack.c.bf16 %v4104, %v4100
    %v4149 = vpack.c.bf16 %v4105, %v4101
    %v4150 = vpack.c.bf16 %v4106, %v4102
    %v4151 = vpack.c.bf16 %v4107, %v4103
    %v4152 = vpack.c.bf16 %v4112, %v4108
    %v4153 = vpack.c.bf16 %v4113, %v4109
    %v4154 = vpack.c.bf16 %v4114, %v4110
    %v4155 = vpack.c.bf16 %v4115, %v4111
    %v4156 = vpack.c.bf16 %v4120, %v4116
    %v4157 = vpack.c.bf16 %v4121, %v4117
    %v4158 = vpack.c.bf16 %v4122, %v4118
    %v4159 = vpack.c.bf16 %v4123, %v4119
    %v4160 = vpack.c.bf16 %v4128, %v4124
    %v4161 = vpack.c.bf16 %v4129, %v4125
    %v4162 = vpack.c.bf16 %v4130, %v4126
    %v4163 = vpack.c.bf16 %v4131, %v4127
    %v4164 = vld [vmem:[#allocation6] sm:$0xff]
    %v4165 = vld [vmem:[#allocation6 + $0x8] sm:$0xff]
    %v4166 = vld [vmem:[#allocation6 + $0x10] sm:$0xff]
    %v4167 = vld [vmem:[#allocation6 + $0x18] sm:$0xff]
    %v4168 = vld [vmem:[#allocation6 + $0x20] sm:$0xff]
    %v4169 = vld [vmem:[#allocation6 + $0x28] sm:$0xff]
    %v4170 = vld [vmem:[#allocation6 + $0x30] sm:$0xff]
    %v4171 = vld [vmem:[#allocation6 + $0x38] sm:$0xff]
    %v4172 = vld [vmem:[#allocation6 + $0x40] sm:$0xff]
    %v4173 = vld [vmem:[#allocation6 + $0x48] sm:$0xff]
    %v4174 = vld [vmem:[#allocation6 + $0x50] sm:$0xff]
    %v4175 = vld [vmem:[#allocation6 + $0x58] sm:$0xff]
    %v4176 = vld [vmem:[#allocation6 + $0x60] sm:$0xff]
    %v4177 = vld [vmem:[#allocation6 + $0x68] sm:$0xff]
    %v4178 = vld [vmem:[#allocation6 + $0x70] sm:$0xff]
    %v4179 = vld [vmem:[#allocation6 + $0x78] sm:$0xff]
    %v4180 = vld [vmem:[#allocation6 + $0x80] sm:$0xff]
    %v4181 = vld [vmem:[#allocation6 + $0x88] sm:$0xff]
    %v4182 = vld [vmem:[#allocation6 + $0x90] sm:$0xff]
    %v4183 = vld [vmem:[#allocation6 + $0x98] sm:$0xff]
    %v4184 = vld [vmem:[#allocation6 + $0xa0] sm:$0xff]
    %v4185 = vld [vmem:[#allocation6 + $0xa8] sm:$0xff]
    %v4186 = vld [vmem:[#allocation6 + $0xb0] sm:$0xff]
    %v4187 = vld [vmem:[#allocation6 + $0xb8] sm:$0xff]
    %v4188 = vld [vmem:[#allocation6 + $0xc0] sm:$0xff]
    %v4189 = vld [vmem:[#allocation6 + $0xc8] sm:$0xff]
    %v4190 = vld [vmem:[#allocation6 + $0xd0] sm:$0xff]
    %v4191 = vld [vmem:[#allocation6 + $0xd8] sm:$0xff]
    %v4192 = vld [vmem:[#allocation6 + $0xe0] sm:$0xff]
    %v4193 = vld [vmem:[#allocation6 + $0xe8] sm:$0xff]
    %v4194 = vld [vmem:[#allocation6 + $0xf0] sm:$0xff]
    %v4195 = vld [vmem:[#allocation6 + $0xf8] sm:$0xff]
    %v4196 = vld [vmem:[#allocation6 + $0x100] sm:$0xff]
    %v4197 = vld [vmem:[#allocation6 + $0x108] sm:$0xff]
    %v4198 = vld [vmem:[#allocation6 + $0x110] sm:$0xff]
    %v4199 = vld [vmem:[#allocation6 + $0x118] sm:$0xff]
    %v4200 = vld [vmem:[#allocation6 + $0x120] sm:$0xff]
    %v4201 = vld [vmem:[#allocation6 + $0x128] sm:$0xff]
    %v4202 = vld [vmem:[#allocation6 + $0x130] sm:$0xff]
    %v4203 = vld [vmem:[#allocation6 + $0x138] sm:$0xff]
    %v4204 = vld [vmem:[#allocation6 + $0x140] sm:$0xff]
    %v4205 = vld [vmem:[#allocation6 + $0x148] sm:$0xff]
    %v4206 = vld [vmem:[#allocation6 + $0x150] sm:$0xff]
    %v4207 = vld [vmem:[#allocation6 + $0x158] sm:$0xff]
    %v4208 = vld [vmem:[#allocation6 + $0x160] sm:$0xff]
    %v4209 = vld [vmem:[#allocation6 + $0x168] sm:$0xff]
    %v4210 = vld [vmem:[#allocation6 + $0x170] sm:$0xff]
    %v4211 = vld [vmem:[#allocation6 + $0x178] sm:$0xff]
    %v4212 = vld [vmem:[#allocation6 + $0x180] sm:$0xff]
    %v4213 = vld [vmem:[#allocation6 + $0x188] sm:$0xff]
    %v4214 = vld [vmem:[#allocation6 + $0x190] sm:$0xff]
    %v4215 = vld [vmem:[#allocation6 + $0x198] sm:$0xff]
    %v4216 = vld [vmem:[#allocation6 + $0x1a0] sm:$0xff]
    %v4217 = vld [vmem:[#allocation6 + $0x1a8] sm:$0xff]
    %v4218 = vld [vmem:[#allocation6 + $0x1b0] sm:$0xff]
    %v4219 = vld [vmem:[#allocation6 + $0x1b8] sm:$0xff]
    %v4220 = vld [vmem:[#allocation6 + $0x1c0] sm:$0xff]
    %v4221 = vld [vmem:[#allocation6 + $0x1c8] sm:$0xff]
    %v4222 = vld [vmem:[#allocation6 + $0x1d0] sm:$0xff]
    %v4223 = vld [vmem:[#allocation6 + $0x1d8] sm:$0xff]
    %v4224 = vld [vmem:[#allocation6 + $0x1e0] sm:$0xff]
    %v4225 = vld [vmem:[#allocation6 + $0x1e8] sm:$0xff]
    %v4226 = vld [vmem:[#allocation6 + $0x1f0] sm:$0xff]
    %v4227 = vld [vmem:[#allocation6 + $0x1f8] sm:$0xff]
    %v4228 = vld [vmem:[%s6] sm:$0x3]
    %v4230 = vlaneseq
    %v4231 = vshrl.u32 %v4230, 7
    %v4232 = vsub.s32 0, %v4231
    %v4233 = vrot.slane %v4228, %v4232
    %v4234 = vlaneseq
    %v4235 = vshrl.u32 %v4234, 7
    %v4236 = vsub.s32 1, %v4235
    %v4237 = vrot.slane %v4228, %v4236
    %v4304 = vunpack.c.l.b16 %v4164
    %v4305 = vunpack.c.h.b16 %v4164
    %v4306 = vunpack.c.l.b16 %v4165
    %v4307 = vunpack.c.h.b16 %v4165
    %v4308 = vunpack.c.l.b16 %v4166
    %v4309 = vunpack.c.h.b16 %v4166
    %v4310 = vunpack.c.l.b16 %v4167
    %v4311 = vunpack.c.h.b16 %v4167
    %v4312 = vunpack.c.l.b16 %v4168
    %v4313 = vunpack.c.h.b16 %v4168
    %v4314 = vunpack.c.l.b16 %v4169
    %v4315 = vunpack.c.h.b16 %v4169
    %v4316 = vunpack.c.l.b16 %v4170
    %v4317 = vunpack.c.h.b16 %v4170
    %v4318 = vunpack.c.l.b16 %v4171
    %v4319 = vunpack.c.h.b16 %v4171
    %v4320 = vunpack.c.l.b16 %v4172
    %v4321 = vunpack.c.h.b16 %v4172
    %v4322 = vunpack.c.l.b16 %v4173
    %v4323 = vunpack.c.h.b16 %v4173
    %v4324 = vunpack.c.l.b16 %v4174
    %v4325 = vunpack.c.h.b16 %v4174
    %v4326 = vunpack.c.l.b16 %v4175
    %v4327 = vunpack.c.h.b16 %v4175
    %v4328 = vunpack.c.l.b16 %v4176
    %v4329 = vunpack.c.h.b16 %v4176
    %v4330 = vunpack.c.l.b16 %v4177
    %v4331 = vunpack.c.h.b16 %v4177
    %v4332 = vunpack.c.l.b16 %v4178
    %v4333 = vunpack.c.h.b16 %v4178
    %v4334 = vunpack.c.l.b16 %v4179
    %v4335 = vunpack.c.h.b16 %v4179
    %v4336 = vunpack.c.l.b16 %v4180
    %v4337 = vunpack.c.h.b16 %v4180
    %v4338 = vunpack.c.l.b16 %v4181
    %v4339 = vunpack.c.h.b16 %v4181
    %v4340 = vunpack.c.l.b16 %v4182
    %v4341 = vunpack.c.h.b16 %v4182
    %v4342 = vunpack.c.l.b16 %v4183
    %v4343 = vunpack.c.h.b16 %v4183
    %v4344 = vunpack.c.l.b16 %v4184
    %v4345 = vunpack.c.h.b16 %v4184
    %v4346 = vunpack.c.l.b16 %v4185
    %v4347 = vunpack.c.h.b16 %v4185
    %v4348 = vunpack.c.l.b16 %v4186
    %v4349 = vunpack.c.h.b16 %v4186
    %v4350 = vunpack.c.l.b16 %v4187
    %v4351 = vunpack.c.h.b16 %v4187
    %v4352 = vunpack.c.l.b16 %v4188
    %v4353 = vunpack.c.h.b16 %v4188
    %v4354 = vunpack.c.l.b16 %v4189
    %v4355 = vunpack.c.h.b16 %v4189
    %v4356 = vunpack.c.l.b16 %v4190
    %v4357 = vunpack.c.h.b16 %v4190
    %v4358 = vunpack.c.l.b16 %v4191
    %v4359 = vunpack.c.h.b16 %v4191
    %v4360 = vunpack.c.l.b16 %v4192
    %v4361 = vunpack.c.h.b16 %v4192
    %v4362 = vunpack.c.l.b16 %v4193
    %v4363 = vunpack.c.h.b16 %v4193
    %v4364 = vunpack.c.l.b16 %v4194
    %v4365 = vunpack.c.h.b16 %v4194
    %v4366 = vunpack.c.l.b16 %v4195
    %v4367 = vunpack.c.h.b16 %v4195
    %v4368 = vunpack.c.l.b16 %v4196
    %v4369 = vunpack.c.h.b16 %v4196
    %v4370 = vunpack.c.l.b16 %v4197
    %v4371 = vunpack.c.h.b16 %v4197
    %v4372 = vunpack.c.l.b16 %v4198
    %v4373 = vunpack.c.h.b16 %v4198
    %v4374 = vunpack.c.l.b16 %v4199
    %v4375 = vunpack.c.h.b16 %v4199
    %v4376 = vunpack.c.l.b16 %v4200
    %v4377 = vunpack.c.h.b16 %v4200
    %v4378 = vunpack.c.l.b16 %v4201
    %v4379 = vunpack.c.h.b16 %v4201
    %v4380 = vunpack.c.l.b16 %v4202
    %v4381 = vunpack.c.h.b16 %v4202
    %v4382 = vunpack.c.l.b16 %v4203
    %v4383 = vunpack.c.h.b16 %v4203
    %v4384 = vunpack.c.l.b16 %v4204
    %v4385 = vunpack.c.h.b16 %v4204
    %v4386 = vunpack.c.l.b16 %v4205
    %v4387 = vunpack.c.h.b16 %v4205
    %v4388 = vunpack.c.l.b16 %v4206
    %v4389 = vunpack.c.h.b16 %v4206
    %v4390 = vunpack.c.l.b16 %v4207
    %v4391 = vunpack.c.h.b16 %v4207
    %v4392 = vunpack.c.l.b16 %v4208
    %v4393 = vunpack.c.h.b16 %v4208
    %v4394 = vunpack.c.l.b16 %v4209
    %v4395 = vunpack.c.h.b16 %v4209
    %v4396 = vunpack.c.l.b16 %v4210
    %v4397 = vunpack.c.h.b16 %v4210
    %v4398 = vunpack.c.l.b16 %v4211
    %v4399 = vunpack.c.h.b16 %v4211
    %v4400 = vunpack.c.l.b16 %v4212
    %v4401 = vunpack.c.h.b16 %v4212
    %v4402 = vunpack.c.l.b16 %v4213
    %v4403 = vunpack.c.h.b16 %v4213
    %v4404 = vunpack.c.l.b16 %v4214
    %v4405 = vunpack.c.h.b16 %v4214
    %v4406 = vunpack.c.l.b16 %v4215
    %v4407 = vunpack.c.h.b16 %v4215
    %v4408 = vunpack.c.l.b16 %v4216
    %v4409 = vunpack.c.h.b16 %v4216
    %v4410 = vunpack.c.l.b16 %v4217
    %v4411 = vunpack.c.h.b16 %v4217
    %v4412 = vunpack.c.l.b16 %v4218
    %v4413 = vunpack.c.h.b16 %v4218
    %v4414 = vunpack.c.l.b16 %v4219
    %v4415 = vunpack.c.h.b16 %v4219
    %v4416 = vunpack.c.l.b16 %v4220
    %v4417 = vunpack.c.h.b16 %v4220
    %v4418 = vunpack.c.l.b16 %v4221
    %v4419 = vunpack.c.h.b16 %v4221
    %v4420 = vunpack.c.l.b16 %v4222
    %v4421 = vunpack.c.h.b16 %v4222
    %v4422 = vunpack.c.l.b16 %v4223
    %v4423 = vunpack.c.h.b16 %v4223
    %v4424 = vunpack.c.l.b16 %v4224
    %v4425 = vunpack.c.h.b16 %v4224
    %v4426 = vunpack.c.l.b16 %v4225
    %v4427 = vunpack.c.h.b16 %v4225
    %v4428 = vunpack.c.l.b16 %v4226
    %v4429 = vunpack.c.h.b16 %v4226
    %v4430 = vunpack.c.l.b16 %v4227
    %v4431 = vunpack.c.h.b16 %v4227
    %v4432 = vpack.c.b16 %v4306, %v4304
    %v4433 = vpack.c.b16 %v4307, %v4305
    %v4434 = vpack.c.b16 %v4310, %v4308
    %v4435 = vpack.c.b16 %v4311, %v4309
    %v4436 = vpack.c.b16 %v4314, %v4312
    %v4437 = vpack.c.b16 %v4315, %v4313
    %v4438 = vpack.c.b16 %v4318, %v4316
    %v4439 = vpack.c.b16 %v4319, %v4317
    %v4440 = vpack.c.b16 %v4322, %v4320
    %v4441 = vpack.c.b16 %v4323, %v4321
    %v4442 = vpack.c.b16 %v4326, %v4324
    %v4443 = vpack.c.b16 %v4327, %v4325
    %v4444 = vpack.c.b16 %v4330, %v4328
    %v4445 = vpack.c.b16 %v4331, %v4329
    %v4446 = vpack.c.b16 %v4334, %v4332
    %v4447 = vpack.c.b16 %v4335, %v4333
    %v4448 = vpack.c.b16 %v4338, %v4336
    %v4449 = vpack.c.b16 %v4339, %v4337
    %v4450 = vpack.c.b16 %v4342, %v4340
    %v4451 = vpack.c.b16 %v4343, %v4341
    %v4452 = vpack.c.b16 %v4346, %v4344
    %v4453 = vpack.c.b16 %v4347, %v4345
    %v4454 = vpack.c.b16 %v4350, %v4348
    %v4455 = vpack.c.b16 %v4351, %v4349
    %v4456 = vpack.c.b16 %v4354, %v4352
    %v4457 = vpack.c.b16 %v4355, %v4353
    %v4458 = vpack.c.b16 %v4358, %v4356
    %v4459 = vpack.c.b16 %v4359, %v4357
    %v4460 = vpack.c.b16 %v4362, %v4360
    %v4461 = vpack.c.b16 %v4363, %v4361
    %v4462 = vpack.c.b16 %v4366, %v4364
    %v4463 = vpack.c.b16 %v4367, %v4365
    %v4464 = vpack.c.b16 %v4370, %v4368
    %v4465 = vpack.c.b16 %v4371, %v4369
    %v4466 = vpack.c.b16 %v4374, %v4372
    %v4467 = vpack.c.b16 %v4375, %v4373
    %v4468 = vpack.c.b16 %v4378, %v4376
    %v4469 = vpack.c.b16 %v4379, %v4377
    %v4470 = vpack.c.b16 %v4382, %v4380
    %v4471 = vpack.c.b16 %v4383, %v4381
    %v4472 = vpack.c.b16 %v4386, %v4384
    %v4473 = vpack.c.b16 %v4387, %v4385
    %v4474 = vpack.c.b16 %v4390, %v4388
    %v4475 = vpack.c.b16 %v4391, %v4389
    %v4476 = vpack.c.b16 %v4394, %v4392
    %v4477 = vpack.c.b16 %v4395, %v4393
    %v4478 = vpack.c.b16 %v4398, %v4396
    %v4479 = vpack.c.b16 %v4399, %v4397
    %v4480 = vpack.c.b16 %v4402, %v4400
    %v4481 = vpack.c.b16 %v4403, %v4401
    %v4482 = vpack.c.b16 %v4406, %v4404
    %v4483 = vpack.c.b16 %v4407, %v4405
    %v4484 = vpack.c.b16 %v4410, %v4408
    %v4485 = vpack.c.b16 %v4411, %v4409
    %v4486 = vpack.c.b16 %v4414, %v4412
    %v4487 = vpack.c.b16 %v4415, %v4413
    %v4488 = vpack.c.b16 %v4418, %v4416
    %v4489 = vpack.c.b16 %v4419, %v4417
    %v4490 = vpack.c.b16 %v4422, %v4420
    %v4491 = vpack.c.b16 %v4423, %v4421
    %v4492 = vpack.c.b16 %v4426, %v4424
    %v4493 = vpack.c.b16 %v4427, %v4425
    %v4494 = vpack.c.b16 %v4430, %v4428
    %v4495 = vpack.c.b16 %v4431, %v4429
    %4560 = vmatprep.subr.bf16.mxu0 %v4433
    %4561 = vmatpush1.bf16.msra.mxu0 %v4432
    %4562 = vmatprep.subr.bf16.mxu0 %v4435
    %4563 = vmatpush1.bf16.msra.mxu0 %v4434
    %4564 = vmatprep.subr.bf16.mxu0 %v4437
    %4565 = vmatpush1.bf16.msra.mxu0 %v4436
    %4566 = vmatprep.subr.bf16.mxu0 %v4439
    %4567 = vmatpush1.bf16.msra.mxu0 %v4438
    %4568 = vmatprep.subr.bf16.mxu0 %v4441
    %4569 = vmatpush1.bf16.msra.mxu0 %v4440
    %4570 = vmatprep.subr.bf16.mxu0 %v4443
    %4571 = vmatpush1.bf16.msra.mxu0 %v4442
    %4572 = vmatprep.subr.bf16.mxu0 %v4445
    %4573 = vmatpush1.bf16.msra.mxu0 %v4444
    %4574 = vmatprep.subr.bf16.mxu0 %v4447
    %4575 = vmatpush1.bf16.msra.mxu0 %v4446
    %4576 = vmatprep.subr.bf16.mxu0 %v4449
    %4577 = vmatpush1.bf16.msra.mxu0 %v4448
    %4578 = vmatprep.subr.bf16.mxu0 %v4451
    %4579 = vmatpush1.bf16.msra.mxu0 %v4450
    %4580 = vmatprep.subr.bf16.mxu0 %v4453
    %4581 = vmatpush1.bf16.msra.mxu0 %v4452
    %4582 = vmatprep.subr.bf16.mxu0 %v4455
    %4583 = vmatpush1.bf16.msra.mxu0 %v4454
    %4584 = vmatprep.subr.bf16.mxu0 %v4457
    %4585 = vmatpush1.bf16.msra.mxu0 %v4456
    %4586 = vmatprep.subr.bf16.mxu0 %v4459
    %4587 = vmatpush1.bf16.msra.mxu0 %v4458
    %4588 = vmatprep.subr.bf16.mxu0 %v4461
    %4589 = vmatpush1.bf16.msra.mxu0 %v4460
    %4590 = vmatprep.subr.bf16.mxu0 %v4463
    %4591 = vmatpush1.bf16.msra.mxu0 %v4462
    %4592 = vmatprep.mubr.bf16.mxu0 %v4133
    %4593 = vmatmul.mubr.bf16.gmra.mrb[0].mxu0 %v4132
    %v4594 = vpop.f32.mrb[0].mxu0
    %v4595 = vadd.f32 %v4233, %v4594
    %v4596 = vpop.f32.mrb[0].mxu0
    %v4597 = vadd.f32 %v4237, %v4596
    %v4598 = vpop.f32.mrb[0].mxu0
    %v4599 = vadd.f32 %v4233, %v4598
    %v4600 = vpop.f32.mrb[0].mxu0
    %v4601 = vadd.f32 %v4237, %v4600
    %4602 = vmatprep.mubr.bf16.mxu0 %v4137
    %4603 = vmatmul.mubr.bf16.gmra.mrb[0].mxu0 %v4136
    %v4604 = vpop.f32.mrb[0].mxu0
    %v4605 = vadd.f32 %v4233, %v4604
    %v4606 = vpop.f32.mrb[0].mxu0
    %v4607 = vadd.f32 %v4237, %v4606
    %v4608 = vpop.f32.mrb[0].mxu0
    %v4609 = vadd.f32 %v4233, %v4608
    %v4610 = vpop.f32.mrb[0].mxu0
    %v4611 = vadd.f32 %v4237, %v4610
    %4612 = vmatprep.mubr.bf16.mxu0 %v4141
    %4613 = vmatmul.mubr.bf16.gmra.mrb[0].mxu0 %v4140
    %v4614 = vpop.f32.mrb[0].mxu0
    %v4615 = vadd.f32 %v4233, %v4614
    %v4616 = vpop.f32.mrb[0].mxu0
    %v4617 = vadd.f32 %v4237, %v4616
    %v4618 = vpop.f32.mrb[0].mxu0
    %v4619 = vadd.f32 %v4233, %v4618
    %v4620 = vpop.f32.mrb[0].mxu0
    %v4621 = vadd.f32 %v4237, %v4620
    %4622 = vmatprep.mubr.bf16.mxu0 %v4145
    %4623 = vmatmul.mubr.bf16.gmra.mrb[0].mxu0 %v4144
    %v4624 = vpop.f32.mrb[0].mxu0
    %v4625 = vadd.f32 %v4233, %v4624
    %v4626 = vpop.f32.mrb[0].mxu0
    %v4627 = vadd.f32 %v4237, %v4626
    %v4628 = vpop.f32.mrb[0].mxu0
    %v4629 = vadd.f32 %v4233, %v4628
    %v4630 = vpop.f32.mrb[0].mxu0
    %v4631 = vadd.f32 %v4237, %v4630
    %4632 = vmatprep.mubr.bf16.mxu0 %v4149
    %4633 = vmatmul.mubr.bf16.gmra.mrb[0].mxu0 %v4148
    %v4634 = vpop.f32.mrb[0].mxu0
    %v4635 = vadd.f32 %v4233, %v4634
    %v4636 = vpop.f32.mrb[0].mxu0
    %v4637 = vadd.f32 %v4237, %v4636
    %v4638 = vpop.f32.mrb[0].mxu0
    %v4639 = vadd.f32 %v4233, %v4638
    %v4640 = vpop.f32.mrb[0].mxu0
    %v4641 = vadd.f32 %v4237, %v4640
    %4642 = vmatprep.mubr.bf16.mxu0 %v4153
    %4643 = vmatmul.mubr.bf16.gmra.mrb[0].mxu0 %v4152
    %v4644 = vpop.f32.mrb[0].mxu0
    %v4645 = vadd.f32 %v4233, %v4644
    %v4646 = vpop.f32.mrb[0].mxu0
    %v4647 = vadd.f32 %v4237, %v4646
    %v4648 = vpop.f32.mrb[0].mxu0
    %v4649 = vadd.f32 %v4233, %v4648
    %v4650 = vpop.f32.mrb[0].mxu0
    %v4651 = vadd.f32 %v4237, %v4650
    %4652 = vmatprep.mubr.bf16.mxu0 %v4157
    %4653 = vmatmul.mubr.bf16.gmra.mrb[0].mxu0 %v4156
    %v4654 = vpop.f32.mrb[0].mxu0
    %v4655 = vadd.f32 %v4233, %v4654
    %v4656 = vpop.f32.mrb[0].mxu0
    %v4657 = vadd.f32 %v4237, %v4656
    %v4658 = vpop.f32.mrb[0].mxu0
    %v4659 = vadd.f32 %v4233, %v4658
    %v4660 = vpop.f32.mrb[0].mxu0
    %v4661 = vadd.f32 %v4237, %v4660
    %4662 = vmatprep.mubr.bf16.mxu0 %v4161
    %4663 = vmatmul.mubr.bf16.gmra.mrb[0].mxu0 %v4160
    %v4664 = vpop.f32.mrb[0].mxu0
    %v4665 = vadd.f32 %v4233, %v4664
    %v4666 = vpop.f32.mrb[0].mxu0
    %v4667 = vadd.f32 %v4237, %v4666
    %v4668 = vpop.f32.mrb[0].mxu0
    %v4669 = vadd.f32 %v4233, %v4668
    %v4670 = vpop.f32.mrb[0].mxu0
    %v4671 = vadd.f32 %v4237, %v4670
    %4672 = vdwg.mxu0
    %4673 = vmatprep.subr.bf16.mxu0 %v4465
    %4674 = vmatpush1.bf16.msra.mxu0 %v4464
    %4675 = vmatprep.subr.bf16.mxu0 %v4467
    %4676 = vmatpush1.bf16.msra.mxu0 %v4466
    %4677 = vmatprep.subr.bf16.mxu0 %v4469
    %4678 = vmatpush1.bf16.msra.mxu0 %v4468
    %4679 = vmatprep.subr.bf16.mxu0 %v4471
    %4680 = vmatpush1.bf16.msra.mxu0 %v4470
    %4681 = vmatprep.subr.bf16.mxu0 %v4473
    %4682 = vmatpush1.bf16.msra.mxu0 %v4472
    %4683 = vmatprep.subr.bf16.mxu0 %v4475
    %4684 = vmatpush1.bf16.msra.mxu0 %v4474
    %4685 = vmatprep.subr.bf16.mxu0 %v4477
    %4686 = vmatpush1.bf16.msra.mxu0 %v4476
    %4687 = vmatprep.subr.bf16.mxu0 %v4479
    %4688 = vmatpush1.bf16.msra.mxu0 %v4478
    %4689 = vmatprep.subr.bf16.mxu0 %v4481
    %4690 = vmatpush1.bf16.msra.mxu0 %v4480
    %4691 = vmatprep.subr.bf16.mxu0 %v4483
    %4692 = vmatpush1.bf16.msra.mxu0 %v4482
    %4693 = vmatprep.subr.bf16.mxu0 %v4485
    %4694 = vmatpush1.bf16.msra.mxu0 %v4484
    %4695 = vmatprep.subr.bf16.mxu0 %v4487
    %4696 = vmatpush1.bf16.msra.mxu0 %v4486
    %4697 = vmatprep.subr.bf16.mxu0 %v4489
    %4698 = vmatpush1.bf16.msra.mxu0 %v4488
    %4699 = vmatprep.subr.bf16.mxu0 %v4491
    %4700 = vmatpush1.bf16.msra.mxu0 %v4490
    %4701 = vmatprep.subr.bf16.mxu0 %v4493
    %4702 = vmatpush1.bf16.msra.mxu0 %v4492
    %4703 = vmatprep.subr.bf16.mxu0 %v4495
    %4704 = vmatpush1.bf16.msra.mxu0 %v4494
    %4705 = vmatprep.mubr.bf16.mxu0 %v4135
    %4706 = vmatmul.mubr.bf16.gmra.mrb[0].mxu0 %v4134
    %v4707 = vpop.f32.mrb[0].mxu0
    %v4708 = vadd.f32 %v4595, %v4707
    %v4709 = vpop.f32.mrb[0].mxu0
    %v4710 = vadd.f32 %v4597, %v4709
    %v4711 = vpop.f32.mrb[0].mxu0
    %v4712 = vadd.f32 %v4599, %v4711
    %v4713 = vpop.f32.mrb[0].mxu0
    %v4714 = vadd.f32 %v4601, %v4713
    %4715 = vmatprep.mubr.bf16.mxu0 %v4139
    %4716 = vmatmul.mubr.bf16.gmra.mrb[0].mxu0 %v4138
    %v4717 = vpop.f32.mrb[0].mxu0
    %v4718 = vadd.f32 %v4605, %v4717
    %v4719 = vpop.f32.mrb[0].mxu0
    %v4720 = vadd.f32 %v4607, %v4719
    %v4721 = vpop.f32.mrb[0].mxu0
    %v4722 = vadd.f32 %v4609, %v4721
    %v4723 = vpop.f32.mrb[0].mxu0
    %v4724 = vadd.f32 %v4611, %v4723
    %4725 = vmatprep.mubr.bf16.mxu0 %v4143
    %4726 = vmatmul.mubr.bf16.gmra.mrb[0].mxu0 %v4142
    %v4727 = vpop.f32.mrb[0].mxu0
    %v4728 = vadd.f32 %v4615, %v4727
    %v4729 = vpop.f32.mrb[0].mxu0
    %v4730 = vadd.f32 %v4617, %v4729
    %v4731 = vpop.f32.mrb[0].mxu0
    %v4732 = vadd.f32 %v4619, %v4731
    %v4733 = vpop.f32.mrb[0].mxu0
    %v4734 = vadd.f32 %v4621, %v4733
    %4735 = vmatprep.mubr.bf16.mxu0 %v4147
    %4736 = vmatmul.mubr.bf16.gmra.mrb[0].mxu0 %v4146
    %v4737 = vpop.f32.mrb[0].mxu0
    %v4738 = vadd.f32 %v4625, %v4737
    %v4739 = vpop.f32.mrb[0].mxu0
    %v4740 = vadd.f32 %v4627, %v4739
    %v4741 = vpop.f32.mrb[0].mxu0
    %v4742 = vadd.f32 %v4629, %v4741
    %v4743 = vpop.f32.mrb[0].mxu0
    %v4744 = vadd.f32 %v4631, %v4743
    %4745 = vmatprep.mubr.bf16.mxu0 %v4151
    %4746 = vmatmul.mubr.bf16.gmra.mrb[0].mxu0 %v4150
    %v4747 = vpop.f32.mrb[0].mxu0
    %v4748 = vadd.f32 %v4635, %v4747
    %v4749 = vpop.f32.mrb[0].mxu0
    %v4750 = vadd.f32 %v4637, %v4749
    %v4751 = vpop.f32.mrb[0].mxu0
    %v4752 = vadd.f32 %v4639, %v4751
    %v4753 = vpop.f32.mrb[0].mxu0
    %v4754 = vadd.f32 %v4641, %v4753
    %4755 = vmatprep.mubr.bf16.mxu0 %v4155
    %4756 = vmatmul.mubr.bf16.gmra.mrb[0].mxu0 %v4154
    %v4757 = vpop.f32.mrb[0].mxu0
    %v4758 = vadd.f32 %v4645, %v4757
    %v4759 = vpop.f32.mrb[0].mxu0
    %v4760 = vadd.f32 %v4647, %v4759
    %v4761 = vpop.f32.mrb[0].mxu0
    %v4762 = vadd.f32 %v4649, %v4761
    %v4763 = vpop.f32.mrb[0].mxu0
    %v4764 = vadd.f32 %v4651, %v4763
    %4765 = vmatprep.mubr.bf16.mxu0 %v4159
    %4766 = vmatmul.mubr.bf16.gmra.mrb[0].mxu0 %v4158
    %v4767 = vpop.f32.mrb[0].mxu0
    %v4768 = vadd.f32 %v4655, %v4767
    %v4769 = vpop.f32.mrb[0].mxu0
    %v4770 = vadd.f32 %v4657, %v4769
    %v4771 = vpop.f32.mrb[0].mxu0
    %v4772 = vadd.f32 %v4659, %v4771
    %v4773 = vpop.f32.mrb[0].mxu0
    %v4774 = vadd.f32 %v4661, %v4773
    %4775 = vmatprep.mubr.bf16.mxu0 %v4163
    %4776 = vmatmul.mubr.bf16.gmra.mrb[0].mxu0 %v4162
    %v4777 = vpop.f32.mrb[0].mxu0
    %v4778 = vadd.f32 %v4665, %v4777
    %v4779 = vpop.f32.mrb[0].mxu0
    %v4780 = vadd.f32 %v4667, %v4779
    %v4781 = vpop.f32.mrb[0].mxu0
    %v4782 = vadd.f32 %v4669, %v4781
    %v4783 = vpop.f32.mrb[0].mxu0
    %v4784 = vadd.f32 %v4671, %v4783
    %4785 = vdwg.mxu0
    %vm4786 = vcmp.gt.f32.partialorder %v4708, 0.0
    %vm4787 = vcmp.gt.f32.partialorder %v4710, 0.0
    %vm4788 = vcmp.gt.f32.partialorder %v4712, 0.0
    %vm4789 = vcmp.gt.f32.partialorder %v4714, 0.0
    %vm4790 = vcmp.gt.f32.partialorder %v4718, 0.0
    %vm4791 = vcmp.gt.f32.partialorder %v4720, 0.0
    %vm4792 = vcmp.gt.f32.partialorder %v4722, 0.0
    %vm4793 = vcmp.gt.f32.partialorder %v4724, 0.0
    %vm4794 = vcmp.gt.f32.partialorder %v4728, 0.0
    %vm4795 = vcmp.gt.f32.partialorder %v4730, 0.0
    %vm4796 = vcmp.gt.f32.partialorder %v4732, 0.0
    %vm4797 = vcmp.gt.f32.partialorder %v4734, 0.0
    %vm4798 = vcmp.gt.f32.partialorder %v4738, 0.0
    %vm4799 = vcmp.gt.f32.partialorder %v4740, 0.0
    %vm4800 = vcmp.gt.f32.partialorder %v4742, 0.0
    %vm4801 = vcmp.gt.f32.partialorder %v4744, 0.0
    %vm4802 = vcmp.gt.f32.partialorder %v4748, 0.0
    %vm4803 = vcmp.gt.f32.partialorder %v4750, 0.0
    %vm4804 = vcmp.gt.f32.partialorder %v4752, 0.0
    %vm4805 = vcmp.gt.f32.partialorder %v4754, 0.0
    %vm4806 = vcmp.gt.f32.partialorder %v4758, 0.0
    %vm4807 = vcmp.gt.f32.partialorder %v4760, 0.0
    %vm4808 = vcmp.gt.f32.partialorder %v4762, 0.0
    %vm4809 = vcmp.gt.f32.partialorder %v4764, 0.0
    %vm4810 = vcmp.gt.f32.partialorder %v4768, 0.0
    %vm4811 = vcmp.gt.f32.partialorder %v4770, 0.0
    %vm4812 = vcmp.gt.f32.partialorder %v4772, 0.0
    %vm4813 = vcmp.gt.f32.partialorder %v4774, 0.0
    %vm4814 = vcmp.gt.f32.partialorder %v4778, 0.0
    %vm4815 = vcmp.gt.f32.partialorder %v4780, 0.0
    %vm4816 = vcmp.gt.f32.partialorder %v4782, 0.0
    %vm4817 = vcmp.gt.f32.partialorder %v4784, 0.0
    %v4818 = vmul.f32 %v4708, 0.2
    %v4819 = vmul.f32 %v4710, 0.2
    %v4820 = vmul.f32 %v4712, 0.2
    %v4821 = vmul.f32 %v4714, 0.2
    %v4822 = vmul.f32 %v4718, 0.2
    %v4823 = vmul.f32 %v4720, 0.2
    %v4824 = vmul.f32 %v4722, 0.2
    %v4825 = vmul.f32 %v4724, 0.2
    %v4826 = vmul.f32 %v4728, 0.2
    %v4827 = vmul.f32 %v4730, 0.2
    %v4828 = vmul.f32 %v4732, 0.2
    %v4829 = vmul.f32 %v4734, 0.2
    %v4830 = vmul.f32 %v4738, 0.2
    %v4831 = vmul.f32 %v4740, 0.2
    %v4832 = vmul.f32 %v4742, 0.2
    %v4833 = vmul.f32 %v4744, 0.2
    %v4834 = vmul.f32 %v4748, 0.2
    %v4835 = vmul.f32 %v4750, 0.2
    %v4836 = vmul.f32 %v4752, 0.2
    %v4837 = vmul.f32 %v4754, 0.2
    %v4838 = vmul.f32 %v4758, 0.2
    %v4839 = vmul.f32 %v4760, 0.2
    %v4840 = vmul.f32 %v4762, 0.2
    %v4841 = vmul.f32 %v4764, 0.2
    %v4842 = vmul.f32 %v4768, 0.2
    %v4843 = vmul.f32 %v4770, 0.2
    %v4844 = vmul.f32 %v4772, 0.2
    %v4845 = vmul.f32 %v4774, 0.2
    %v4846 = vmul.f32 %v4778, 0.2
    %v4847 = vmul.f32 %v4780, 0.2
    %v4848 = vmul.f32 %v4782, 0.2
    %v4849 = vmul.f32 %v4784, 0.2
    %v4850 = vsel %vm4786, %v4708, %v4818
    %v4851 = vsel %vm4787, %v4710, %v4819
    %v4852 = vsel %vm4788, %v4712, %v4820
    %v4853 = vsel %vm4789, %v4714, %v4821
    %v4854 = vsel %vm4790, %v4718, %v4822
    %v4855 = vsel %vm4791, %v4720, %v4823
    %v4856 = vsel %vm4792, %v4722, %v4824
    %v4857 = vsel %vm4793, %v4724, %v4825
    %v4858 = vsel %vm4794, %v4728, %v4826
    %v4859 = vsel %vm4795, %v4730, %v4827
    %v4860 = vsel %vm4796, %v4732, %v4828
    %v4861 = vsel %vm4797, %v4734, %v4829
    %v4862 = vsel %vm4798, %v4738, %v4830
    %v4863 = vsel %vm4799, %v4740, %v4831
    %v4864 = vsel %vm4800, %v4742, %v4832
    %v4865 = vsel %vm4801, %v4744, %v4833
    %v4866 = vsel %vm4802, %v4748, %v4834
    %v4867 = vsel %vm4803, %v4750, %v4835
    %v4868 = vsel %vm4804, %v4752, %v4836
    %v4869 = vsel %vm4805, %v4754, %v4837
    %v4870 = vsel %vm4806, %v4758, %v4838
    %v4871 = vsel %vm4807, %v4760, %v4839
    %v4872 = vsel %vm4808, %v4762, %v4840
    %v4873 = vsel %vm4809, %v4764, %v4841
    %v4874 = vsel %vm4810, %v4768, %v4842
    %v4875 = vsel %vm4811, %v4770, %v4843
    %v4876 = vsel %vm4812, %v4772, %v4844
    %v4877 = vsel %vm4813, %v4774, %v4845
    %v4878 = vsel %vm4814, %v4778, %v4846
    %v4879 = vsel %vm4815, %v4780, %v4847
    %v4880 = vsel %vm4816, %v4782, %v4848
    %v4881 = vsel %vm4817, %v4784, %v4849
    %v4882 = vpack.c.bf16 %v4852, %v4850
    %v4883 = vpack.c.bf16 %v4853, %v4851
    %v4884 = vpack.c.bf16 %v4856, %v4854
    %v4885 = vpack.c.bf16 %v4857, %v4855
    %v4886 = vpack.c.bf16 %v4860, %v4858
    %v4887 = vpack.c.bf16 %v4861, %v4859
    %v4888 = vpack.c.bf16 %v4864, %v4862
    %v4889 = vpack.c.bf16 %v4865, %v4863
    %v4890 = vpack.c.bf16 %v4868, %v4866
    %v4891 = vpack.c.bf16 %v4869, %v4867
    %v4892 = vpack.c.bf16 %v4872, %v4870
    %v4893 = vpack.c.bf16 %v4873, %v4871
    %v4894 = vpack.c.bf16 %v4876, %v4874
    %v4895 = vpack.c.bf16 %v4877, %v4875
    %v4896 = vpack.c.bf16 %v4880, %v4878
    %v4897 = vpack.c.bf16 %v4881, %v4879
    %v4898 = vld [vmem:[#allocation7] sm:$0xf]
    %v4899 = vld [vmem:[#allocation7 + $0x4] sm:$0xf]
    %v4900 = vld [vmem:[#allocation7 + $0x8] sm:$0xf]
    %v4901 = vld [vmem:[#allocation7 + $0xc] sm:$0xf]
    %v4902 = vld [vmem:[#allocation7 + $0x10] sm:$0xf]
    %v4903 = vld [vmem:[#allocation7 + $0x14] sm:$0xf]
    %v4904 = vld [vmem:[#allocation7 + $0x18] sm:$0xf]
    %v4905 = vld [vmem:[#allocation7 + $0x1c] sm:$0xf]
    %v4906 = vld [vmem:[#allocation7 + $0x20] sm:$0xf]
    %v4907 = vld [vmem:[#allocation7 + $0x24] sm:$0xf]
    %v4908 = vld [vmem:[#allocation7 + $0x28] sm:$0xf]
    %v4909 = vld [vmem:[#allocation7 + $0x2c] sm:$0xf]
    %v4910 = vld [vmem:[#allocation7 + $0x30] sm:$0xf]
    %v4911 = vld [vmem:[#allocation7 + $0x34] sm:$0xf]
    %v4912 = vld [vmem:[#allocation7 + $0x38] sm:$0xf]
    %v4913 = vld [vmem:[#allocation7 + $0x3c] sm:$0xf]
    %v4914 = vld [vmem:[#allocation7 + $0x40] sm:$0xf]
    %v4915 = vld [vmem:[#allocation7 + $0x44] sm:$0xf]
    %v4916 = vld [vmem:[#allocation7 + $0x48] sm:$0xf]
    %v4917 = vld [vmem:[#allocation7 + $0x4c] sm:$0xf]
    %v4918 = vld [vmem:[#allocation7 + $0x50] sm:$0xf]
    %v4919 = vld [vmem:[#allocation7 + $0x54] sm:$0xf]
    %v4920 = vld [vmem:[#allocation7 + $0x58] sm:$0xf]
    %v4921 = vld [vmem:[#allocation7 + $0x5c] sm:$0xf]
    %v4922 = vld [vmem:[#allocation7 + $0x60] sm:$0xf]
    %v4923 = vld [vmem:[#allocation7 + $0x64] sm:$0xf]
    %v4924 = vld [vmem:[#allocation7 + $0x68] sm:$0xf]
    %v4925 = vld [vmem:[#allocation7 + $0x6c] sm:$0xf]
    %v4926 = vld [vmem:[#allocation7 + $0x70] sm:$0xf]
    %v4927 = vld [vmem:[#allocation7 + $0x74] sm:$0xf]
    %v4928 = vld [vmem:[#allocation7 + $0x78] sm:$0xf]
    %v4929 = vld [vmem:[#allocation7 + $0x7c] sm:$0xf]
    %v4930 = vld [vmem:[%s8] sm:$0x1]
    %v4932 = vlaneseq
    %v4933 = vshrl.u32 %v4932, 7
    %v4934 = vsub.s32 0, %v4933
    %v4935 = vrot.slane %v4930, %v4934
    %v4969 = vunpack.c.l.b16 %v4898
    %v4970 = vunpack.c.l.b16 %v4899
    %v4971 = vunpack.c.l.b16 %v4900
    %v4972 = vunpack.c.l.b16 %v4901
    %v4973 = vunpack.c.l.b16 %v4902
    %v4974 = vunpack.c.l.b16 %v4903
    %v4975 = vunpack.c.l.b16 %v4904
    %v4976 = vunpack.c.l.b16 %v4905
    %v4977 = vunpack.c.l.b16 %v4906
    %v4978 = vunpack.c.l.b16 %v4907
    %v4979 = vunpack.c.l.b16 %v4908
    %v4980 = vunpack.c.l.b16 %v4909
    %v4981 = vunpack.c.l.b16 %v4910
    %v4982 = vunpack.c.l.b16 %v4911
    %v4983 = vunpack.c.l.b16 %v4912
    %v4984 = vunpack.c.l.b16 %v4913
    %v4985 = vunpack.c.l.b16 %v4914
    %v4986 = vunpack.c.l.b16 %v4915
    %v4987 = vunpack.c.l.b16 %v4916
    %v4988 = vunpack.c.l.b16 %v4917
    %v4989 = vunpack.c.l.b16 %v4918
    %v4990 = vunpack.c.l.b16 %v4919
    %v4991 = vunpack.c.l.b16 %v4920
    %v4992 = vunpack.c.l.b16 %v4921
    %v4993 = vunpack.c.l.b16 %v4922
    %v4994 = vunpack.c.l.b16 %v4923
    %v4995 = vunpack.c.l.b16 %v4924
    %v4996 = vunpack.c.l.b16 %v4925
    %v4997 = vunpack.c.l.b16 %v4926
    %v4998 = vunpack.c.l.b16 %v4927
    %v4999 = vunpack.c.l.b16 %v4928
    %v5000 = vunpack.c.l.b16 %v4929
    %v5001 = vpack.c.b16 %v4970, %v4969
    %v5002 = vpack.c.b16 %v4972, %v4971
    %v5003 = vpack.c.b16 %v4974, %v4973
    %v5004 = vpack.c.b16 %v4976, %v4975
    %v5005 = vpack.c.b16 %v4978, %v4977
    %v5006 = vpack.c.b16 %v4980, %v4979
    %v5007 = vpack.c.b16 %v4982, %v4981
    %v5008 = vpack.c.b16 %v4984, %v4983
    %v5009 = vpack.c.b16 %v4986, %v4985
    %v5010 = vpack.c.b16 %v4988, %v4987
    %v5011 = vpack.c.b16 %v4990, %v4989
    %v5012 = vpack.c.b16 %v4992, %v4991
    %v5013 = vpack.c.b16 %v4994, %v4993
    %v5014 = vpack.c.b16 %v4996, %v4995
    %v5015 = vpack.c.b16 %v4998, %v4997
    %v5016 = vpack.c.b16 %v5000, %v4999
    %5033 = vmatprep.subr.bf16.mxu0 0
    %5034 = vmatpush1.bf16.msra.mxu0 %v5001
    %5035 = vmatprep.subr.bf16.mxu0 0
    %5036 = vmatpush1.bf16.msra.mxu0 %v5002
    %5037 = vmatprep.subr.bf16.mxu0 0
    %5038 = vmatpush1.bf16.msra.mxu0 %v5003
    %5039 = vmatprep.subr.bf16.mxu0 0
    %5040 = vmatpush1.bf16.msra.mxu0 %v5004
    %5041 = vmatprep.subr.bf16.mxu0 0
    %5042 = vmatpush1.bf16.msra.mxu0 %v5005
    %5043 = vmatprep.subr.bf16.mxu0 0
    %5044 = vmatpush1.bf16.msra.mxu0 %v5006
    %5045 = vmatprep.subr.bf16.mxu0 0
    %5046 = vmatpush1.bf16.msra.mxu0 %v5007
    %5047 = vmatprep.subr.bf16.mxu0 0
    %5048 = vmatpush1.bf16.msra.mxu0 %v5008
    %5049 = vmatprep.subr.bf16.mxu0 0
    %5050 = vmatpush1.bf16.msra.mxu0 %v5009
    %5051 = vmatprep.subr.bf16.mxu0 0
    %5052 = vmatpush1.bf16.msra.mxu0 %v5010
    %5053 = vmatprep.subr.bf16.mxu0 0
    %5054 = vmatpush1.bf16.msra.mxu0 %v5011
    %5055 = vmatprep.subr.bf16.mxu0 0
    %5056 = vmatpush1.bf16.msra.mxu0 %v5012
    %5057 = vmatprep.subr.bf16.mxu0 0
    %5058 = vmatpush1.bf16.msra.mxu0 %v5013
    %5059 = vmatprep.subr.bf16.mxu0 0
    %5060 = vmatpush1.bf16.msra.mxu0 %v5014
    %5061 = vmatprep.subr.bf16.mxu0 0
    %5062 = vmatpush1.bf16.msra.mxu0 %v5015
    %5063 = vmatprep.subr.bf16.mxu0 0
    %5064 = vmatpush1.bf16.msra.mxu0 %v5016
    %5065 = vmatprep.mubr.bf16.mxu0 %v4883
    %5066 = vmatmul.mubr.bf16.gmra.mrb[0].mxu0 %v4882
    %v5067 = vpop.f32.mrb[0].mxu0
    %v5068 = vadd.f32 %v4935, %v5067
    %v5069 = vpop.f32.mrb[0].mxu0
    %v5070 = vpop.f32.mrb[0].mxu0
    %v5071 = vadd.f32 %v4935, %v5070
    %v5072 = vpop.f32.mrb[0].mxu0
    %5073 = vmatprep.mubr.bf16.mxu0 %v4885
    %5074 = vmatmul.mubr.bf16.gmra.mrb[0].mxu0 %v4884
    %v5075 = vpop.f32.mrb[0].mxu0
    %v5076 = vadd.f32 %v4935, %v5075
    %v5077 = vpop.f32.mrb[0].mxu0
    %v5078 = vpop.f32.mrb[0].mxu0
    %v5079 = vadd.f32 %v4935, %v5078
    %v5080 = vpop.f32.mrb[0].mxu0
    %5081 = vmatprep.mubr.bf16.mxu0 %v4887
    %5082 = vmatmul.mubr.bf16.gmra.mrb[0].mxu0 %v4886
    %v5083 = vpop.f32.mrb[0].mxu0
    %v5084 = vadd.f32 %v4935, %v5083
    %v5085 = vpop.f32.mrb[0].mxu0
    %v5086 = vpop.f32.mrb[0].mxu0
    %v5087 = vadd.f32 %v4935, %v5086
    %v5088 = vpop.f32.mrb[0].mxu0
    %5089 = vmatprep.mubr.bf16.mxu0 %v4889
    %5090 = vmatmul.mubr.bf16.gmra.mrb[0].mxu0 %v4888
    %v5091 = vpop.f32.mrb[0].mxu0
    %v5092 = vadd.f32 %v4935, %v5091
    %v5093 = vpop.f32.mrb[0].mxu0
    %v5094 = vpop.f32.mrb[0].mxu0
    %v5095 = vadd.f32 %v4935, %v5094
    %v5096 = vpop.f32.mrb[0].mxu0
    %5097 = vmatprep.mubr.bf16.mxu0 %v4891
    %5098 = vmatmul.mubr.bf16.gmra.mrb[0].mxu0 %v4890
    %v5099 = vpop.f32.mrb[0].mxu0
    %v5100 = vadd.f32 %v4935, %v5099
    %v5101 = vpop.f32.mrb[0].mxu0
    %v5102 = vpop.f32.mrb[0].mxu0
    %v5103 = vadd.f32 %v4935, %v5102
    %v5104 = vpop.f32.mrb[0].mxu0
    %5105 = vmatprep.mubr.bf16.mxu0 %v4893
    %5106 = vmatmul.mubr.bf16.gmra.mrb[0].mxu0 %v4892
    %v5107 = vpop.f32.mrb[0].mxu0
    %v5108 = vadd.f32 %v4935, %v5107
    %v5109 = vpop.f32.mrb[0].mxu0
    %v5110 = vpop.f32.mrb[0].mxu0
    %v5111 = vadd.f32 %v4935, %v5110
    %v5112 = vpop.f32.mrb[0].mxu0
    %5113 = vmatprep.mubr.bf16.mxu0 %v4895
    %5114 = vmatmul.mubr.bf16.gmra.mrb[0].mxu0 %v4894
    %v5115 = vpop.f32.mrb[0].mxu0
    %v5116 = vadd.f32 %v4935, %v5115
    %v5117 = vpop.f32.mrb[0].mxu0
    %v5118 = vpop.f32.mrb[0].mxu0
    %v5119 = vadd.f32 %v4935, %v5118
    %v5120 = vpop.f32.mrb[0].mxu0
    %5121 = vmatprep.mubr.bf16.mxu0 %v4897
    %5122 = vmatmul.mubr.bf16.gmra.mrb[0].mxu0 %v4896
    %v5123 = vpop.f32.mrb[0].mxu0
    %v5124 = vadd.f32 %v4935, %v5123
    %v5125 = vpop.f32.mrb[0].mxu0
    %v5126 = vpop.f32.mrb[0].mxu0
    %v5127 = vadd.f32 %v4935, %v5126
    %v5128 = vpop.f32.mrb[0].mxu0
    %5129 = vdwg.mxu0
    %5130 = vxpose.xlu0.b32.start [1/16] %v5068, 128
    %5131 = vxpose.xlu0.b32.cont [2/16] %v5071, 128
    %5132 = vxpose.xlu0.b32.cont [3/16] %v5076, 128
    %5133 = vxpose.xlu0.b32.cont [4/16] %v5079, 128
    %5134 = vxpose.xlu0.b32.cont [5/16] %v5084, 128
    %5135 = vxpose.xlu0.b32.cont [6/16] %v5087, 128
    %5136 = vxpose.xlu0.b32.cont [7/16] %v5092, 128
    %5137 = vxpose.xlu0.b32.cont [8/16] %v5095, 128
    %5138 = vxpose.xlu0.b32.cont [9/16] %v5100, 128
    %5139 = vxpose.xlu0.b32.cont [10/16] %v5103, 128
    %5140 = vxpose.xlu0.b32.cont [11/16] %v5108, 128
    %5141 = vxpose.xlu0.b32.cont [12/16] %v5111, 128
    %5142 = vxpose.xlu0.b32.cont [13/16] %v5116, 128
    %5143 = vxpose.xlu0.b32.cont [14/16] %v5119, 128
    %5144 = vxpose.xlu0.b32.cont [15/16] %v5124, 128
    %5145 = vxpose.xlu0.b32.end [16/16] %v5127, 128
    %v5146 = vpop.trf.xlu0
    %v5147 = vpop.trf.xlu0
    %v5148 = vpop.trf.xlu0
    %v5149 = vpop.trf.xlu0
    %v5150 = vpop.trf.xlu0
    %v5151 = vpop.trf.xlu0
    %v5152 = vpop.trf.xlu0
    %v5153 = vpop.trf.xlu0
    %v5154 = vpop.trf.xlu0
    %v5155 = vpop.trf.xlu0
    %v5156 = vpop.trf.xlu0
    %v5157 = vpop.trf.xlu0
    %v5158 = vpop.trf.xlu0
    %v5159 = vpop.trf.xlu0
    %v5160 = vpop.trf.xlu0
    %v5161 = vpop.trf.xlu0
    %v5162 = vxor.u32 %v5146, 2147483648
    %v5163 = vmul.f32 %v5162, 1.442695
    %v5164 = vpow.pop %v5163
    %v5165 = vadd.f32 %v5164, 1.0
    %v5166 = vrcp.pop %v5165
    %v5167 = vmul.f32 1.0, %v5166
    %5168 = vst [vmem:[%s9] sm:$0x1] %v5167
    // Predicated region
    $region54: #{discriminator_forward.1} parent=1 // pred_check
      _
    $region55: #{discriminator_forward.1} parent=1 // pred_check_branch
      %5170 = sbr.rel (0) target = $region57
    $region56: #{discriminator_forward.1} parent=1 // pred_region
      _
    $region57: #{discriminator_forward.1} parent=1 // pred_fallthru
      _
    // Predicated region
    $region58: #{discriminator_forward.1} parent=1 // pred_check
      _
    $region59: #{discriminator_forward.1} parent=1 // pred_check_branch
      %5172 = sbr.rel (0) target = $region61
    $region60: #{discriminator_forward.1} parent=1 // pred_region
      _
    $region61: #{discriminator_forward.1} parent=1 // pred_fallthru
      _
    %5173 = vsyncpa [#allocation3], 1
    %5174 = vsyncpa [#allocation5], 1
    %5175 = vsyncpa [#allocation8], 1

</llo_original>
